<compile_context>
chip_gen: v6e
topology: v6e:2x2x1
jax: 0.10.0
libtpu: 0.0.40
codegen_flags: <defaults>
</compile_context>

<pallas_src>
import jax
import jax.numpy as jnp
from jax.experimental import pallas as pl
from jax.experimental.pallas import tpu as pltpu

BN_EPS = 1e-5
LRELU_SLOPE = 0.2


# --------------------------------------------------------------------------- #
# Kernel
# --------------------------------------------------------------------------- #
def generator_kernel(z_ref,
                     w1_ref, b1_ref,
                     w2_ref, b2_ref, g2_ref, be2_ref,
                     w3_ref, b3_ref, g3_ref, be3_ref,
                     w4_ref, b4_ref, g4_ref, be4_ref,
                     w5_ref, b5_ref,
                     o_ref,
                     h_ref):
    """Fused Generator forward: trunk once at step 0, one head tile per step."""

    def linear(x, w_ref, b_ref):
        # bf16 MXU inputs, f32 accumulation; bias add in f32.
        return jnp.dot(x.astype(jnp.bfloat16), w_ref[...],
                       preferred_element_type=jnp.float32) + b_ref[...]

    def lrelu(x):
        # max(x, 0.2*x) == LeakyReLU(0.2) since 0 < slope < 1 (single vmax).
        return jnp.maximum(x, LRELU_SLOPE * x)

    def batchnorm(x, g_ref, be_ref):
        # One-pass batch statistics (biased variance, matching PyTorch training
        # forward), folded into one per-feature scale/shift: x*scale + shift.
        inv_n = 1.0 / x.shape[0]
        mean = jnp.sum(x, axis=0, keepdims=True) * inv_n
        mean_sq = jnp.sum(x * x, axis=0, keepdims=True) * inv_n
        var = mean_sq - mean * mean
        scale = g_ref[...] * jax.lax.rsqrt(var + BN_EPS)
        shift = be_ref[...] - mean * scale
        return x * scale + shift

    @pl.when(pl.program_id(0) == 0)
    def _trunk():
        h = lrelu(linear(z_ref[...], w1_ref, b1_ref))                     # latent -> 128 (no BN)
        h = lrelu(batchnorm(linear(h, w2_ref, b2_ref), g2_ref, be2_ref))  # 128 -> 256
        h = lrelu(batchnorm(linear(h, w3_ref, b3_ref), g3_ref, be3_ref))  # 256 -> 512
        h = lrelu(batchnorm(linear(h, w4_ref, b4_ref), g4_ref, be4_ref))  # 512 -> 1024
        h_ref[...] = h.astype(h_ref.dtype)                                # bf16, persists across steps

    # Head tile: tanh(h @ w5_tile + b5_tile); math in f32, cast on the store.
    acc = jnp.dot(h_ref[...], w5_ref[...], preferred_element_type=jnp.float32)
    o_ref[...] = jnp.tanh(acc + b5_ref[...]).astype(o_ref.dtype)


# --------------------------------------------------------------------------- #
# Wrapper helpers
# --------------------------------------------------------------------------- #
def _round_up(x, m):
    return ((x + m - 1) // m) * m


def _vmem_limit_bytes():
    """<= half of physical VMEM, capped at 64 MiB (=> 32 MiB on v7x, 64 MiB on v5e/v6e)."""
    try:
        cap = int(pltpu.get_tpu_info().vmem_capacity_bytes)
    except Exception:
        cap = 64 << 20  # conservative: v7x per-TensorCore physical VMEM
    return min(cap // 2, 64 << 20)


def _choose_feature_tile(img_dim, max_tn=2048):
    """Pick (tn, padded_dim): tn a multiple of 128, padded_dim a multiple of tn.

    Single lane-dense tile when the 128-aligned output fits one tile; otherwise
    the largest tn in {2048,1024,512,256,128} whose padding stays close to the
    128-aligned floor (keeps per-grid-step overhead low without wasting columns)."""
    floor = _round_up(img_dim, 128)
    if floor <= max_tn:
        return floor, floor
    for tn in (2048, 1024, 512, 256, 128):
        if tn > max_tn:
            continue
        padded = _round_up(img_dim, tn)
        if padded - floor <= max(floor // 8, 128):
            return tn, padded
    return 128, floor


def make_params(key, latent_dim, img_dim):
    """Deterministic PyTorch-style init: W,b ~ U(-1/sqrt(fan_in), 1/sqrt(fan_in))."""
    dims = [latent_dim, 128, 256, 512, 1024, img_dim]
    params = {}
    for i in range(5):
        fan_in, fan_out = dims[i], dims[i + 1]
        key, kw, kb = jax.random.split(key, 3)
        bound = 1.0 / jnp.sqrt(float(fan_in))
        # stored as (in, out) — i.e. PyTorch weight.T — so the hot path is x @ W + b
        params[f"w{i+1}"] = jax.random.uniform(kw, (fan_in, fan_out), jnp.float32, -bound, bound)
        params[f"b{i+1}"] = jax.random.uniform(kb, (1, fan_out), jnp.float32, -bound, bound)
    # BatchNorm affine params for layers 2,3,4 (gamma=1, beta=0 at init)
    for i, d in zip((2, 3, 4), (256, 512, 1024)):
        params[f"g{i}"] = jnp.ones((1, d), jnp.float32)
        params[f"be{i}"] = jnp.zeros((1, d), jnp.float32)
    return params


# --------------------------------------------------------------------------- #
# Forward
# --------------------------------------------------------------------------- #
def generator_forward(z, params, img_shape, *, out_dtype=jnp.float32, max_tn=2048):
    B, latent_dim = z.shape
    C, H, W = img_shape
    img_dim = C * H * W
    bf16 = jnp.bfloat16

    # bf16 weights (halves weight DMA, feeds the MXU bf16 path); all elementwise
    # math (bias / BN / LeakyReLU / tanh) stays in f32.
    wp = {k: (v.astype(bf16) if k.startswith("w") else v.astype(jnp.float32))
          for k, v in params.items()}
    z_bf = z.astype(bf16)

    # Lane-dense head tiling: pad the final layer's columns to a 128-multiple
    # tile width (zero-filled pad columns are sliced off before the reshape).
    tn, padded_dim = _choose_feature_tile(img_dim, max_tn)
    n_tiles = padded_dim // tn
    pad = padded_dim - img_dim
    w5, b5 = wp["w5"], wp["b5"]
    if pad:
        w5 = jnp.pad(w5, ((0, 0), (0, pad)))
        b5 = jnp.pad(b5, ((0, 0), (0, pad)))

    vmem_limit = _vmem_limit_bytes()
    out_isize = jnp.dtype(out_dtype).itemsize

    # Rough VMEM budget: resident trunk operands + h scratch + double-buffered
    # w5 / output tiles + a few live (B, 1024) f32 trunk temporaries.
    trunk_w_bytes = 2 * (latent_dim * 128 + 128 * 256 + 256 * 512 + 512 * 1024)
    budget = (trunk_w_bytes
              + B * latent_dim * 2          # z (bf16, resident)
              + B * 1024 * 2                # h scratch (bf16)
              + 2 * 1024 * tn * 2           # double-buffered w5 tile (bf16)
              + 2 * B * tn * out_isize      # double-buffered output tile
              + 3 * B * 1024 * 4)           # live f32 trunk temporaries
    # TODO(synk): batches exceeding this need batch-tiled trunk with two-pass BN.
    assert budget <= vmem_limit, (
        f"fused Generator kernel VMEM budget {budget / 2**20:.1f} MiB exceeds "
        f"limit {vmem_limit / 2**20:.1f} MiB; reduce batch size or tile width")

    trunk_in = (z_bf,
                wp["w1"], wp["b1"],
                wp["w2"], wp["b2"], wp["g2"], wp["be2"],
                wp["w3"], wp["b3"], wp["g3"], wp["be3"],
                wp["w4"], wp["b4"], wp["g4"], wp["be4"])
    # Invariant block index => each trunk operand is DMA'd once and stays resident.
    trunk_specs = [pl.BlockSpec(tuple(a.shape), lambda j: (0, 0)) for a in trunk_in]

    flops = 2 * B * (latent_dim * 128 + 128 * 256 + 256 * 512 + 512 * 1024
                     + 1024 * padded_dim)
    bytes_accessed = (sum(int(a.size) * a.dtype.itemsize for a in trunk_in)
                      + int(w5.size) * 2 + int(b5.size) * 4      # each read exactly once
                      + B * padded_dim * out_isize)              # output writeback
    transcendentals = B * padded_dim + (256 + 512 + 1024)        # tanh + BN rsqrt

    flat = pl.pallas_call(
        generator_kernel,
        out_shape=jax.ShapeDtypeStruct((B, padded_dim), out_dtype),
        grid=(n_tiles,),
        in_specs=trunk_specs + [
            pl.BlockSpec((1024, tn), lambda j: (0, j)),   # w5 tile: streamed exactly once
            pl.BlockSpec((1, tn), lambda j: (0, j)),      # b5 tile
        ],
        out_specs=pl.BlockSpec((B, tn), lambda j: (0, j)),
        scratch_shapes=[pltpu.VMEM((B, 1024), bf16)],     # h, persists across grid steps
        compiler_params=pltpu.CompilerParams(
            # The feature axis carries the h scratch written at step 0 -> arbitrary.
            dimension_semantics=("arbitrary",),
            vmem_limit_bytes=int(vmem_limit)),
        cost_estimate=pl.CostEstimate(flops=int(flops),
                                      transcendentals=int(transcendentals),
                                      bytes_accessed=int(bytes_accessed)),
    )(*trunk_in, w5, b5)

    # Drop padded columns, then PyTorch's img.view(B, C, H, W) (NCHW).
    return flat[:, :img_dim].reshape(B, C, H, W)


# --------------------------------------------------------------------------- #
# Pure-JAX reference (same bf16-matmul / f32-elementwise numerics, two-pass BN)
# --------------------------------------------------------------------------- #
def generator_reference(z, params, img_shape):
    bf16 = jnp.bfloat16

    def linear(x, w, b):
        return jnp.dot(x.astype(bf16), w.astype(bf16),
                       preferred_element_type=jnp.float32) + b

    def lrelu(x):
        return jnp.where(x > 0, x, LRELU_SLOPE * x)

    def bn(x, g, be):
        m = x.mean(0, keepdims=True)
        v = jnp.square(x - m).mean(0, keepdims=True)
        return (x - m) * jax.lax.rsqrt(v + BN_EPS) * g + be

    h = lrelu(linear(z, params["w1"], params["b1"]))
    h = lrelu(bn(linear(h, params["w2"], params["b2"]), params["g2"], params["be2"]))
    h = lrelu(bn(linear(h, params["w3"], params["b3"]), params["g3"], params["be3"]))
    h = lrelu(bn(linear(h, params["w4"], params["b4"]), params["g4"], params["be4"]))
    out = jnp.tanh(linear(h, params["w5"], params["b5"]))
    return out.reshape(z.shape[0], *img_shape)


if __name__ == "__main__":
    B = 32
    latent_dim = 32
    img_shape = (1, 28, 28)          # C, H, W  -> prod = 784 (not a 128 multiple)
    img_dim = int(img_shape[0] * img_shape[1] * img_shape[2])

    key = jax.random.PRNGKey(0)
    kz, kp = jax.random.split(key)
    z = jax.random.normal(kz, (B, latent_dim), jnp.float32)
    params = make_params(kp, latent_dim, img_dim)

    # Small max_tn so the demo exercises the multi-tile grid + column padding path.
    img = generator_forward(z, params, img_shape, max_tn=256)
    img = jax.block_until_ready(img)

    ref = generator_reference(z, params, img_shape)
    assert img.shape == (B,) + tuple(img_shape), img.shape
    max_err = float(jnp.max(jnp.abs(img - ref)))
    assert jnp.allclose(img, ref, atol=5e-3, rtol=5e-3), max_err

    print("KERNEL_OK")
</pallas_src>

<mosaic_0001>
module attributes {stable_mosaic.version = 11 : i64} {
  func.func @generator_kernel(%arg0: i32, %arg1: memref<32x32xbf16, #tpu.memory_space<vmem>>, %arg2: memref<32x128xbf16, #tpu.memory_space<vmem>>, %arg3: memref<1x128xf32, #tpu.memory_space<vmem>>, %arg4: memref<128x256xbf16, #tpu.memory_space<vmem>>, %arg5: memref<1x256xf32, #tpu.memory_space<vmem>>, %arg6: memref<1x256xf32, #tpu.memory_space<vmem>>, %arg7: memref<1x256xf32, #tpu.memory_space<vmem>>, %arg8: memref<256x512xbf16, #tpu.memory_space<vmem>>, %arg9: memref<1x512xf32, #tpu.memory_space<vmem>>, %arg10: memref<1x512xf32, #tpu.memory_space<vmem>>, %arg11: memref<1x512xf32, #tpu.memory_space<vmem>>, %arg12: memref<512x1024xbf16, #tpu.memory_space<vmem>>, %arg13: memref<1x1024xf32, #tpu.memory_space<vmem>>, %arg14: memref<1x1024xf32, #tpu.memory_space<vmem>>, %arg15: memref<1x1024xf32, #tpu.memory_space<vmem>>, %arg16: memref<1024x256xbf16, #tpu.memory_space<vmem>>, %arg17: memref<1x256xf32, #tpu.memory_space<vmem>>, %arg18: memref<32x256xf32, #tpu.memory_space<vmem>>, %arg19: memref<32x1024xbf16, #tpu.memory_space<vmem>>) attributes {dimension_semantics = [#tpu.dimension_semantics<arbitrary>], iteration_bounds = array<i64: 4>, scalar_prefetch = 0 : i64, scratch_operands = 1 : i64, tpu.core_type = #tpu.core_type<tc>, window_params = [{pipeline_mode = #tpu.pipeline_mode<synchronous>, transform_indices = @transform_0, window_bounds = array<i64: 32, 32>}, {pipeline_mode = #tpu.pipeline_mode<synchronous>, transform_indices = @transform_1, window_bounds = array<i64: 32, 128>}, {pipeline_mode = #tpu.pipeline_mode<synchronous>, transform_indices = @transform_2, window_bounds = array<i64: 1, 128>}, {pipeline_mode = #tpu.pipeline_mode<synchronous>, transform_indices = @transform_3, window_bounds = array<i64: 128, 256>}, {pipeline_mode = #tpu.pipeline_mode<synchronous>, transform_indices = @transform_4, window_bounds = array<i64: 1, 256>}, {pipeline_mode = #tpu.pipeline_mode<synchronous>, transform_indices = @transform_5, window_bounds = array<i64: 1, 256>}, {pipeline_mode = #tpu.pipeline_mode<synchronous>, transform_indices = @transform_6, window_bounds = array<i64: 1, 256>}, {pipeline_mode = #tpu.pipeline_mode<synchronous>, transform_indices = @transform_7, window_bounds = array<i64: 256, 512>}, {pipeline_mode = #tpu.pipeline_mode<synchronous>, transform_indices = @transform_8, window_bounds = array<i64: 1, 512>}, {pipeline_mode = #tpu.pipeline_mode<synchronous>, transform_indices = @transform_9, window_bounds = array<i64: 1, 512>}, {pipeline_mode = #tpu.pipeline_mode<synchronous>, transform_indices = @transform_10, window_bounds = array<i64: 1, 512>}, {pipeline_mode = #tpu.pipeline_mode<synchronous>, transform_indices = @transform_11, window_bounds = array<i64: 512, 1024>}, {pipeline_mode = #tpu.pipeline_mode<synchronous>, transform_indices = @transform_12, window_bounds = array<i64: 1, 1024>}, {pipeline_mode = #tpu.pipeline_mode<synchronous>, transform_indices = @transform_13, window_bounds = array<i64: 1, 1024>}, {pipeline_mode = #tpu.pipeline_mode<synchronous>, transform_indices = @transform_14, window_bounds = array<i64: 1, 1024>}, {transform_indices = @transform_15, window_bounds = array<i64: 1024, 256>}, {transform_indices = @transform_16, window_bounds = array<i64: 1, 256>}, {transform_indices = @transform_17, window_bounds = array<i64: 32, 256>}]} {
    %c0_i32 = arith.constant 0 : i32
    %0 = arith.cmpi eq, %arg0, %c0_i32 : i32
    %1 = arith.extui %0 : i1 to i32
    %c0_i32_0 = arith.constant 0 : i32
    %2 = arith.cmpi ne, %1, %c0_i32_0 : i32
    scf.if %2 {
      %c0_8 = arith.constant 0 : index
      %c0_9 = arith.constant 0 : index
      %11 = vector.load %arg1[%c0_8, %c0_9] : memref<32x32xbf16, #tpu.memory_space<vmem>>, vector<32x32xbf16>
      %c0_10 = arith.constant 0 : index
      %c0_11 = arith.constant 0 : index
      %12 = vector.load %arg2[%c0_10, %c0_11] : memref<32x128xbf16, #tpu.memory_space<vmem>>, vector<32x128xbf16>
      %cst_12 = arith.constant dense<0.000000e+00> : vector<32x128xf32>
      %13 = tpu.matmul %11, %12, %cst_12 {dimension_numbers = #tpu.dot_dimension_numbers<[1], [0], [0], [1], [0, 0, 1, 1], [], []>} : vector<32x32xbf16>, vector<32x128xbf16>, vector<32x128xf32> -> vector<32x128xf32>
      %c0_13 = arith.constant 0 : index
      %c0_14 = arith.constant 0 : index
      %14 = vector.load %arg3[%c0_13, %c0_14] : memref<1x128xf32, #tpu.memory_space<vmem>>, vector<1x128xf32>
      %15 = vector.broadcast %14 : vector<1x128xf32> to vector<32x128xf32>
      %16 = arith.addf %13, %15 : vector<32x128xf32>
      %cst_15 = arith.constant 2.000000e-01 : f32
      %17 = vector.broadcast %cst_15 : f32 to vector<32x128xf32>
      %18 = arith.mulf %17, %16 : vector<32x128xf32>
      %19 = arith.maximumf %16, %18 : vector<32x128xf32>
      %20 = arith.truncf %19 : vector<32x128xf32> to vector<32x128xbf16>
      %c0_16 = arith.constant 0 : index
      %c0_17 = arith.constant 0 : index
      %21 = vector.load %arg4[%c0_16, %c0_17] : memref<128x256xbf16, #tpu.memory_space<vmem>>, vector<128x256xbf16>
      %cst_18 = arith.constant dense<0.000000e+00> : vector<32x256xf32>
      %22 = tpu.matmul %20, %21, %cst_18 {dimension_numbers = #tpu.dot_dimension_numbers<[1], [0], [0], [1], [0, 0, 1, 1], [], []>} : vector<32x128xbf16>, vector<128x256xbf16>, vector<32x256xf32> -> vector<32x256xf32>
      %c0_19 = arith.constant 0 : index
      %c0_20 = arith.constant 0 : index
      %23 = vector.load %arg5[%c0_19, %c0_20] : memref<1x256xf32, #tpu.memory_space<vmem>>, vector<1x256xf32>
      %24 = vector.broadcast %23 : vector<1x256xf32> to vector<32x256xf32>
      %25 = arith.addf %22, %24 : vector<32x256xf32>
      %cst_21 = arith.constant dense<0.000000e+00> : vector<256xf32>
      %26 = vector.multi_reduction <add>, %25, %cst_21 [0] : vector<32x256xf32> to vector<256xf32>
      %27 = vector.shape_cast %26 : vector<256xf32> to vector<1x256xf32>
      %cst_22 = arith.constant 3.125000e-02 : f32
      %28 = vector.broadcast %cst_22 : f32 to vector<1x256xf32>
      %29 = arith.mulf %27, %28 : vector<1x256xf32>
      %30 = arith.mulf %25, %25 : vector<32x256xf32>
      %cst_23 = arith.constant dense<0.000000e+00> : vector<256xf32>
      %31 = vector.multi_reduction <add>, %30, %cst_23 [0] : vector<32x256xf32> to vector<256xf32>
      %32 = vector.shape_cast %31 : vector<256xf32> to vector<1x256xf32>
      %cst_24 = arith.constant 3.125000e-02 : f32
      %33 = vector.broadcast %cst_24 : f32 to vector<1x256xf32>
      %34 = arith.mulf %32, %33 : vector<1x256xf32>
      %35 = arith.mulf %29, %29 : vector<1x256xf32>
      %36 = arith.subf %34, %35 : vector<1x256xf32>
      %c0_25 = arith.constant 0 : index
      %c0_26 = arith.constant 0 : index
      %37 = vector.load %arg6[%c0_25, %c0_26] : memref<1x256xf32, #tpu.memory_space<vmem>>, vector<1x256xf32>
      %cst_27 = arith.constant 9.99999974E-6 : f32
      %38 = vector.broadcast %cst_27 : f32 to vector<1x256xf32>
      %39 = arith.addf %36, %38 : vector<1x256xf32>
      %40 = math.rsqrt %39 : vector<1x256xf32>
      %41 = arith.mulf %37, %40 : vector<1x256xf32>
      %c0_28 = arith.constant 0 : index
      %c0_29 = arith.constant 0 : index
      %42 = vector.load %arg7[%c0_28, %c0_29] : memref<1x256xf32, #tpu.memory_space<vmem>>, vector<1x256xf32>
      %43 = arith.mulf %29, %41 : vector<1x256xf32>
      %44 = arith.subf %42, %43 : vector<1x256xf32>
      %45 = vector.broadcast %41 : vector<1x256xf32> to vector<32x256xf32>
      %46 = arith.mulf %25, %45 : vector<32x256xf32>
      %47 = vector.broadcast %44 : vector<1x256xf32> to vector<32x256xf32>
      %48 = arith.addf %46, %47 : vector<32x256xf32>
      %cst_30 = arith.constant 2.000000e-01 : f32
      %49 = vector.broadcast %cst_30 : f32 to vector<32x256xf32>
      %50 = arith.mulf %49, %48 : vector<32x256xf32>
      %51 = arith.maximumf %48, %50 : vector<32x256xf32>
      %52 = arith.truncf %51 : vector<32x256xf32> to vector<32x256xbf16>
      %c0_31 = arith.constant 0 : index
      %c0_32 = arith.constant 0 : index
      %53 = vector.load %arg8[%c0_31, %c0_32] : memref<256x512xbf16, #tpu.memory_space<vmem>>, vector<256x512xbf16>
      %cst_33 = arith.constant dense<0.000000e+00> : vector<32x512xf32>
      %54 = tpu.matmul %52, %53, %cst_33 {dimension_numbers = #tpu.dot_dimension_numbers<[1], [0], [0], [1], [0, 0, 1, 1], [], []>} : vector<32x256xbf16>, vector<256x512xbf16>, vector<32x512xf32> -> vector<32x512xf32>
      %c0_34 = arith.constant 0 : index
      %c0_35 = arith.constant 0 : index
      %55 = vector.load %arg9[%c0_34, %c0_35] : memref<1x512xf32, #tpu.memory_space<vmem>>, vector<1x512xf32>
      %56 = vector.broadcast %55 : vector<1x512xf32> to vector<32x512xf32>
      %57 = arith.addf %54, %56 : vector<32x512xf32>
      %cst_36 = arith.constant dense<0.000000e+00> : vector<512xf32>
      %58 = vector.multi_reduction <add>, %57, %cst_36 [0] : vector<32x512xf32> to vector<512xf32>
      %59 = vector.shape_cast %58 : vector<512xf32> to vector<1x512xf32>
      %cst_37 = arith.constant 3.125000e-02 : f32
      %60 = vector.broadcast %cst_37 : f32 to vector<1x512xf32>
      %61 = arith.mulf %59, %60 : vector<1x512xf32>
      %62 = arith.mulf %57, %57 : vector<32x512xf32>
      %cst_38 = arith.constant dense<0.000000e+00> : vector<512xf32>
      %63 = vector.multi_reduction <add>, %62, %cst_38 [0] : vector<32x512xf32> to vector<512xf32>
      %64 = vector.shape_cast %63 : vector<512xf32> to vector<1x512xf32>
      %cst_39 = arith.constant 3.125000e-02 : f32
      %65 = vector.broadcast %cst_39 : f32 to vector<1x512xf32>
      %66 = arith.mulf %64, %65 : vector<1x512xf32>
      %67 = arith.mulf %61, %61 : vector<1x512xf32>
      %68 = arith.subf %66, %67 : vector<1x512xf32>
      %c0_40 = arith.constant 0 : index
      %c0_41 = arith.constant 0 : index
      %69 = vector.load %arg10[%c0_40, %c0_41] : memref<1x512xf32, #tpu.memory_space<vmem>>, vector<1x512xf32>
      %cst_42 = arith.constant 9.99999974E-6 : f32
      %70 = vector.broadcast %cst_42 : f32 to vector<1x512xf32>
      %71 = arith.addf %68, %70 : vector<1x512xf32>
      %72 = math.rsqrt %71 : vector<1x512xf32>
      %73 = arith.mulf %69, %72 : vector<1x512xf32>
      %c0_43 = arith.constant 0 : index
      %c0_44 = arith.constant 0 : index
      %74 = vector.load %arg11[%c0_43, %c0_44] : memref<1x512xf32, #tpu.memory_space<vmem>>, vector<1x512xf32>
      %75 = arith.mulf %61, %73 : vector<1x512xf32>
      %76 = arith.subf %74, %75 : vector<1x512xf32>
      %77 = vector.broadcast %73 : vector<1x512xf32> to vector<32x512xf32>
      %78 = arith.mulf %57, %77 : vector<32x512xf32>
      %79 = vector.broadcast %76 : vector<1x512xf32> to vector<32x512xf32>
      %80 = arith.addf %78, %79 : vector<32x512xf32>
      %cst_45 = arith.constant 2.000000e-01 : f32
      %81 = vector.broadcast %cst_45 : f32 to vector<32x512xf32>
      %82 = arith.mulf %81, %80 : vector<32x512xf32>
      %83 = arith.maximumf %80, %82 : vector<32x512xf32>
      %84 = arith.truncf %83 : vector<32x512xf32> to vector<32x512xbf16>
      %c0_46 = arith.constant 0 : index
      %c0_47 = arith.constant 0 : index
      %85 = vector.load %arg12[%c0_46, %c0_47] : memref<512x1024xbf16, #tpu.memory_space<vmem>>, vector<512x1024xbf16>
      %cst_48 = arith.constant dense<0.000000e+00> : vector<32x1024xf32>
      %86 = tpu.matmul %84, %85, %cst_48 {dimension_numbers = #tpu.dot_dimension_numbers<[1], [0], [0], [1], [0, 0, 1, 1], [], []>} : vector<32x512xbf16>, vector<512x1024xbf16>, vector<32x1024xf32> -> vector<32x1024xf32>
      %c0_49 = arith.constant 0 : index
      %c0_50 = arith.constant 0 : index
      %87 = vector.load %arg13[%c0_49, %c0_50] : memref<1x1024xf32, #tpu.memory_space<vmem>>, vector<1x1024xf32>
      %88 = vector.broadcast %87 : vector<1x1024xf32> to vector<32x1024xf32>
      %89 = arith.addf %86, %88 : vector<32x1024xf32>
      %cst_51 = arith.constant dense<0.000000e+00> : vector<1024xf32>
      %90 = vector.multi_reduction <add>, %89, %cst_51 [0] : vector<32x1024xf32> to vector<1024xf32>
      %91 = vector.shape_cast %90 : vector<1024xf32> to vector<1x1024xf32>
      %cst_52 = arith.constant 3.125000e-02 : f32
      %92 = vector.broadcast %cst_52 : f32 to vector<1x1024xf32>
      %93 = arith.mulf %91, %92 : vector<1x1024xf32>
      %94 = arith.mulf %89, %89 : vector<32x1024xf32>
      %cst_53 = arith.constant dense<0.000000e+00> : vector<1024xf32>
      %95 = vector.multi_reduction <add>, %94, %cst_53 [0] : vector<32x1024xf32> to vector<1024xf32>
      %96 = vector.shape_cast %95 : vector<1024xf32> to vector<1x1024xf32>
      %cst_54 = arith.constant 3.125000e-02 : f32
      %97 = vector.broadcast %cst_54 : f32 to vector<1x1024xf32>
      %98 = arith.mulf %96, %97 : vector<1x1024xf32>
      %99 = arith.mulf %93, %93 : vector<1x1024xf32>
      %100 = arith.subf %98, %99 : vector<1x1024xf32>
      %c0_55 = arith.constant 0 : index
      %c0_56 = arith.constant 0 : index
      %101 = vector.load %arg14[%c0_55, %c0_56] : memref<1x1024xf32, #tpu.memory_space<vmem>>, vector<1x1024xf32>
      %cst_57 = arith.constant 9.99999974E-6 : f32
      %102 = vector.broadcast %cst_57 : f32 to vector<1x1024xf32>
      %103 = arith.addf %100, %102 : vector<1x1024xf32>
      %104 = math.rsqrt %103 : vector<1x1024xf32>
      %105 = arith.mulf %101, %104 : vector<1x1024xf32>
      %c0_58 = arith.constant 0 : index
      %c0_59 = arith.constant 0 : index
      %106 = vector.load %arg15[%c0_58, %c0_59] : memref<1x1024xf32, #tpu.memory_space<vmem>>, vector<1x1024xf32>
      %107 = arith.mulf %93, %105 : vector<1x1024xf32>
      %108 = arith.subf %106, %107 : vector<1x1024xf32>
      %109 = vector.broadcast %105 : vector<1x1024xf32> to vector<32x1024xf32>
      %110 = arith.mulf %89, %109 : vector<32x1024xf32>
      %111 = vector.broadcast %108 : vector<1x1024xf32> to vector<32x1024xf32>
      %112 = arith.addf %110, %111 : vector<32x1024xf32>
      %cst_60 = arith.constant 2.000000e-01 : f32
      %113 = vector.broadcast %cst_60 : f32 to vector<32x1024xf32>
      %114 = arith.mulf %113, %112 : vector<32x1024xf32>
      %115 = arith.maximumf %112, %114 : vector<32x1024xf32>
      %116 = arith.truncf %115 : vector<32x1024xf32> to vector<32x1024xbf16>
      %c0_61 = arith.constant 0 : index
      %c0_62 = arith.constant 0 : index
      %117 = vector.load %arg19[%c0_61, %c0_62] : memref<32x1024xbf16, #tpu.memory_space<vmem>>, vector<32x1024xbf16>
      tpu.vector_store %arg19[%c0_61, %c0_62], %116 {strides = array<i32>} : memref<32x1024xbf16, #tpu.memory_space<vmem>>, vector<32x1024xbf16>,
    } else {
    }
    %c0 = arith.constant 0 : index
    %c0_1 = arith.constant 0 : index
    %3 = vector.load %arg19[%c0, %c0_1] : memref<32x1024xbf16, #tpu.memory_space<vmem>>, vector<32x1024xbf16>
    %c0_2 = arith.constant 0 : index
    %c0_3 = arith.constant 0 : index
    %4 = vector.load %arg16[%c0_2, %c0_3] : memref<1024x256xbf16, #tpu.memory_space<vmem>>, vector<1024x256xbf16>
    %cst = arith.constant dense<0.000000e+00> : vector<32x256xf32>
    %5 = tpu.matmul %3, %4, %cst {dimension_numbers = #tpu.dot_dimension_numbers<[1], [0], [0], [1], [0, 0, 1, 1], [], []>} : vector<32x1024xbf16>, vector<1024x256xbf16>, vector<32x256xf32> -> vector<32x256xf32>
    %c0_4 = arith.constant 0 : index
    %c0_5 = arith.constant 0 : index
    %6 = vector.load %arg17[%c0_4, %c0_5] : memref<1x256xf32, #tpu.memory_space<vmem>>, vector<1x256xf32>
    %7 = vector.broadcast %6 : vector<1x256xf32> to vector<32x256xf32>
    %8 = arith.addf %5, %7 : vector<32x256xf32>
    %9 = math.tanh %8 : vector<32x256xf32>
    %c0_6 = arith.constant 0 : index
    %c0_7 = arith.constant 0 : index
    %10 = vector.load %arg18[%c0_6, %c0_7] : memref<32x256xf32, #tpu.memory_space<vmem>>, vector<32x256xf32>
    tpu.vector_store %arg18[%c0_6, %c0_7], %9 {strides = array<i32>} : memref<32x256xf32, #tpu.memory_space<vmem>>, vector<32x256xf32>,
    return
  }
  func.func @transform_0(%arg0: i32) -> (i32, i32) {
    %c0_i32 = arith.constant 0 : i32
    %c0_i32_0 = arith.constant 0 : i32
    %c0_i32_1 = arith.constant 0 : i32
    return %c0_i32, %c0_i32_0 : i32, i32
  }
  func.func @transform_1(%arg0: i32) -> (i32, i32) {
    %c0_i32 = arith.constant 0 : i32
    %c0_i32_0 = arith.constant 0 : i32
    %c0_i32_1 = arith.constant 0 : i32
    return %c0_i32, %c0_i32_0 : i32, i32
  }
  func.func @transform_2(%arg0: i32) -> (i32, i32) {
    %c0_i32 = arith.constant 0 : i32
    %c0_i32_0 = arith.constant 0 : i32
    %c0_i32_1 = arith.constant 0 : i32
    return %c0_i32, %c0_i32_0 : i32, i32
  }
  func.func @transform_3(%arg0: i32) -> (i32, i32) {
    %c0_i32 = arith.constant 0 : i32
    %c0_i32_0 = arith.constant 0 : i32
    %c0_i32_1 = arith.constant 0 : i32
    return %c0_i32, %c0_i32_0 : i32, i32
  }
  func.func @transform_4(%arg0: i32) -> (i32, i32) {
    %c0_i32 = arith.constant 0 : i32
    %c0_i32_0 = arith.constant 0 : i32
    %c0_i32_1 = arith.constant 0 : i32
    return %c0_i32, %c0_i32_0 : i32, i32
  }
  func.func @transform_5(%arg0: i32) -> (i32, i32) {
    %c0_i32 = arith.constant 0 : i32
    %c0_i32_0 = arith.constant 0 : i32
    %c0_i32_1 = arith.constant 0 : i32
    return %c0_i32, %c0_i32_0 : i32, i32
  }
  func.func @transform_6(%arg0: i32) -> (i32, i32) {
    %c0_i32 = arith.constant 0 : i32
    %c0_i32_0 = arith.constant 0 : i32
    %c0_i32_1 = arith.constant 0 : i32
    return %c0_i32, %c0_i32_0 : i32, i32
  }
  func.func @transform_7(%arg0: i32) -> (i32, i32) {
    %c0_i32 = arith.constant 0 : i32
    %c0_i32_0 = arith.constant 0 : i32
    %c0_i32_1 = arith.constant 0 : i32
    return %c0_i32, %c0_i32_0 : i32, i32
  }
  func.func @transform_8(%arg0: i32) -> (i32, i32) {
    %c0_i32 = arith.constant 0 : i32
    %c0_i32_0 = arith.constant 0 : i32
    %c0_i32_1 = arith.constant 0 : i32
    return %c0_i32, %c0_i32_0 : i32, i32
  }
  func.func @transform_9(%arg0: i32) -> (i32, i32) {
    %c0_i32 = arith.constant 0 : i32
    %c0_i32_0 = arith.constant 0 : i32
    %c0_i32_1 = arith.constant 0 : i32
    return %c0_i32, %c0_i32_0 : i32, i32
  }
  func.func @transform_10(%arg0: i32) -> (i32, i32) {
    %c0_i32 = arith.constant 0 : i32
    %c0_i32_0 = arith.constant 0 : i32
    %c0_i32_1 = arith.constant 0 : i32
    return %c0_i32, %c0_i32_0 : i32, i32
  }
  func.func @transform_11(%arg0: i32) -> (i32, i32) {
    %c0_i32 = arith.constant 0 : i32
    %c0_i32_0 = arith.constant 0 : i32
    %c0_i32_1 = arith.constant 0 : i32
    return %c0_i32, %c0_i32_0 : i32, i32
  }
  func.func @transform_12(%arg0: i32) -> (i32, i32) {
    %c0_i32 = arith.constant 0 : i32
    %c0_i32_0 = arith.constant 0 : i32
    %c0_i32_1 = arith.constant 0 : i32
    return %c0_i32, %c0_i32_0 : i32, i32
  }
  func.func @transform_13(%arg0: i32) -> (i32, i32) {
    %c0_i32 = arith.constant 0 : i32
    %c0_i32_0 = arith.constant 0 : i32
    %c0_i32_1 = arith.constant 0 : i32
    return %c0_i32, %c0_i32_0 : i32, i32
  }
  func.func @transform_14(%arg0: i32) -> (i32, i32) {
    %c0_i32 = arith.constant 0 : i32
    %c0_i32_0 = arith.constant 0 : i32
    %c0_i32_1 = arith.constant 0 : i32
    return %c0_i32, %c0_i32_0 : i32, i32
  }
  func.func @transform_15(%arg0: i32) -> (i32, i32) {
    %c0_i32 = arith.constant 0 : i32
    %c0_i32_0 = arith.constant 0 : i32
    return %c0_i32, %arg0 : i32, i32
  }
  func.func @transform_16(%arg0: i32) -> (i32, i32) {
    %c0_i32 = arith.constant 0 : i32
    %c0_i32_0 = arith.constant 0 : i32
    return %c0_i32, %arg0 : i32, i32
  }
  func.func @transform_17(%arg0: i32) -> (i32, i32) {
    %c0_i32 = arith.constant 0 : i32
    %c0_i32_0 = arith.constant 0 : i32
    return %c0_i32, %arg0 : i32, i32
  }
}

</mosaic_0001>

<llo_original>
// kernel: tpu_custom_call.1
$region0: #{tpu_custom_call.1}
  #allocation0 [shape = 'u32[]', space=smem, size = 0x4, offset = 0x4, fixed_abs, tag = 'smem constant byte address 0x4 - core index']
  #allocation1 [shape = 'u32[144,128]{1,0:T(1,128)}', space=vmem, size = 0x12000, scoped, tag = 'internal scratch']
  #allocation2 [shape = 'bf16[32,1024]{1,0:T(8,128)(2,1)}', space=vmem, size = 0x10000, scoped, tag = 'scratch operand']
  %s0 = inlined_call_operand.hbm [shape: bf16[32,32], index: 0, kind: input, shape index: {}]
  %s1 = inlined_call_operand.hbm [shape: bf16[32,128], index: 1, kind: input, shape index: {}]
  %s2 = inlined_call_operand.hbm [shape: f32[1,128], index: 2, kind: input, shape index: {}]
  %s3 = inlined_call_operand.hbm [shape: bf16[128,256], index: 3, kind: input, shape index: {}]
  %s4 = inlined_call_operand.hbm [shape: f32[1,256], index: 4, kind: input, shape index: {}]
  %s5 = inlined_call_operand.hbm [shape: f32[1,256], index: 5, kind: input, shape index: {}]
  %s6 = inlined_call_operand.hbm [shape: f32[1,256], index: 6, kind: input, shape index: {}]
  %s7 = inlined_call_operand.hbm [shape: bf16[256,512], index: 7, kind: input, shape index: {}]
  %s8 = inlined_call_operand.hbm [shape: f32[1,512], index: 8, kind: input, shape index: {}]
  %s9 = inlined_call_operand.hbm [shape: f32[1,512], index: 9, kind: input, shape index: {}]
  %s10 = inlined_call_operand.hbm [shape: f32[1,512], index: 10, kind: input, shape index: {}]
  %s11 = inlined_call_operand.hbm [shape: bf16[512,1024], index: 11, kind: input, shape index: {}]
  %s12 = inlined_call_operand.hbm [shape: f32[1,1024], index: 12, kind: input, shape index: {}]
  %s13 = inlined_call_operand.hbm [shape: f32[1,1024], index: 13, kind: input, shape index: {}]
  %s14 = inlined_call_operand.hbm [shape: f32[1,1024], index: 14, kind: input, shape index: {}]
  %s15 = inlined_call_operand.hbm [shape: bf16[1024,1024], index: 15, kind: input, shape index: {}]
  %s16 = inlined_call_operand.hbm [shape: f32[1,1024], index: 16, kind: input, shape index: {}]
  %s17 = inlined_call_operand.hbm [shape: f32[32,1024], index: 17, kind: output, shape index: {}]
  %s18 = sld [smem:[#allocation0]]
  $region173: #{tpu_custom_call.1} parent=0
    _
  %s20 = ssub.s32 1, %s18
  %s21 = scalar_select 0, %s20, %s18
  $region1: #{tpu_custom_call.1} parent=0
    #allocation3 [shape = 'u8[8192]{0}', space=vmem, size = 0x2000, scoped, tag = 'input window, operand 0, single buffered']
    #allocation4 [shape = 's32[2]{0}', space=sflag, size = 0x8, scoped, tag = 'scoped memory for tpu_custom_call.1']
    #allocation5 [shape = 's32[2]{0}', space=sflag, size = 0x8, scoped, tag = 'scoped memory for tpu_custom_call.1']
    #allocation6 [shape = 'u8[8192]{0}', space=vmem, size = 0x2000, scoped, tag = 'input window, operand 1, single buffered']
    #allocation7 [shape = 's32[1]{0}', space=sflag, size = 0x4, scoped, tag = 'scoped memory for tpu_custom_call.1']
    #allocation8 [shape = 'u8[512]{0}', space=vmem, size = 0x400, scoped, tag = 'input window, operand 2, single buffered']
    #allocation9 [shape = 'u8[65536]{0}', space=vmem, size = 0x10000, scoped, tag = 'input window, operand 3, single buffered']
    #allocation10 [shape = 's32[1]{0}', space=sflag, size = 0x4, scoped, tag = 'scoped memory for tpu_custom_call.1']
    #allocation11 [shape = 'u8[1024]{0}', space=vmem, size = 0x400, scoped, tag = 'input window, operand 4, single buffered']
    #allocation12 [shape = 'u8[1024]{0}', space=vmem, size = 0x400, scoped, tag = 'input window, operand 5, single buffered']
    #allocation13 [shape = 's32[1]{0}', space=sflag, size = 0x4, scoped, tag = 'scoped memory for tpu_custom_call.1']
    #allocation14 [shape = 'u8[1024]{0}', space=vmem, size = 0x400, scoped, tag = 'input window, operand 6, single buffered']
    #allocation15 [shape = 'u8[262144]{0}', space=vmem, size = 0x40000, scoped, tag = 'input window, operand 7, single buffered']
    #allocation16 [shape = 's32[1]{0}', space=sflag, size = 0x4, scoped, tag = 'scoped memory for tpu_custom_call.1']
    #allocation17 [shape = 'u8[2048]{0}', space=vmem, size = 0x800, scoped, tag = 'input window, operand 8, single buffered']
    #allocation18 [shape = 'u8[2048]{0}', space=vmem, size = 0x800, scoped, tag = 'input window, operand 9, single buffered']
    #allocation19 [shape = 's32[1]{0}', space=sflag, size = 0x4, scoped, tag = 'scoped memory for tpu_custom_call.1']
    #allocation20 [shape = 'u8[2048]{0}', space=vmem, size = 0x800, scoped, tag = 'input window, operand 10, single buffered']
    #allocation21 [shape = 'u8[1048576]{0}', space=vmem, size = 0x100000, scoped, tag = 'input window, operand 11, single buffered']
    #allocation22 [shape = 's32[1]{0}', space=sflag, size = 0x4, scoped, tag = 'scoped memory for tpu_custom_call.1']
    #allocation23 [shape = 'u8[4096]{0}', space=vmem, size = 0x1000, scoped, tag = 'input window, operand 12, single buffered']
    #allocation24 [shape = 'u8[4096]{0}', space=vmem, size = 0x1000, scoped, tag = 'input window, operand 13, single buffered']
    #allocation25 [shape = 's32[1]{0}', space=sflag, size = 0x4, scoped, tag = 'scoped memory for tpu_custom_call.1']
    #allocation26 [shape = 'u8[4096]{0}', space=vmem, size = 0x1000, scoped, tag = 'input window, operand 14, single buffered']
    #allocation27 [shape = 'u8[1048576]{0}', space=vmem, size = 0x100000, scoped, tag = 'input window, operand 15']
    #allocation28 [shape = 's32[2]{0}', space=sflag, size = 0x8, scoped, tag = 'scoped memory for tpu_custom_call.1']
    #allocation29 [shape = 'u8[2048]{0}', space=vmem, size = 0x800, scoped, tag = 'input window, operand 16']
    #allocation30 [shape = 'u8[65536]{0}', space=vmem, size = 0x10000, scoped, tag = 'output window, operand 0']
    %22 = vsyncpa [#allocation4], 0
    %23 = vsyncpa [#allocation7], 0
    %24 = vsyncpa [#allocation10], 0
    %25 = vsyncpa [#allocation13], 0
    %26 = vsyncpa [#allocation16], 0
    %27 = vsyncpa [#allocation19], 0
    %28 = vsyncpa [#allocation22], 0
    %29 = vsyncpa [#allocation25], 0
    %30 = vsyncpa [#allocation28], 0
    %s31 = scalar_lea.sflag [#allocation28], 1
    %32 = vsyncpa %s31, 0
    %33 = vsyncpa [#allocation5], 0
    %s34 = scalar_lea.sflag [#allocation5], 1
    %35 = vsyncpa %s34, 0
    loop: start=0, step=1, limit=6
    $region2: #{tpu_custom_call.1} parent=1 // loop_pre_header
      _
    $region3: #{tpu_custom_call.1} parent=1 // loop_header
      %s37 = sphi 0, %s41
      %p38 = scmp.ge.s32.totalorder %s37, 6
      %s45 = sphi 0, %s45
      %s47 = sphi 0, %s45
      %s48 = sphi 0, %s47
      %s62 = sphi 0, %s48
      %s66 = sphi 0, %s66
      %s68 = sphi 0, %s66
      %s69 = sphi 0, %s68
      %s83 = sphi 0, %s69
      %s87 = sphi 0, %s87
      %s89 = sphi 0, %s87
      %s90 = sphi 0, %s89
      %s104 = sphi 0, %s90
      %s108 = sphi 0, %s108
      %s110 = sphi 0, %s108
      %s111 = sphi 0, %s110
      %s125 = sphi 0, %s111
      %s129 = sphi 0, %s129
      %s131 = sphi 0, %s129
      %s132 = sphi 0, %s131
      %s146 = sphi 0, %s132
      %s150 = sphi 0, %s150
      %s152 = sphi 0, %s150
      %s153 = sphi 0, %s152
      %s167 = sphi 0, %s153
      %s171 = sphi 0, %s171
      %s173 = sphi 0, %s171
      %s174 = sphi 0, %s173
      %s188 = sphi 0, %s174
      %s192 = sphi 0, %s192
      %s194 = sphi 0, %s192
      %s195 = sphi 0, %s194
      %s209 = sphi 0, %s195
      %s213 = sphi 0, %s213
      %s215 = sphi 0, %s213
      %s216 = sphi 0, %s215
      %s230 = sphi 0, %s216
      %s234 = sphi 0, %s234
      %s236 = sphi 0, %s234
      %s237 = sphi 0, %s236
      %s251 = sphi 0, %s237
      %s255 = sphi 0, %s255
      %s257 = sphi 0, %s255
      %s258 = sphi 0, %s257
      %s272 = sphi 0, %s258
      %s276 = sphi 0, %s276
      %s278 = sphi 0, %s276
      %s279 = sphi 0, %s278
      %s293 = sphi 0, %s279
      %s297 = sphi 0, %s297
      %s299 = sphi 0, %s297
      %s300 = sphi 0, %s299
      %s314 = sphi 0, %s300
      %s318 = sphi 0, %s318
      %s320 = sphi 0, %s318
      %s321 = sphi 0, %s320
      %s335 = sphi 0, %s321
      %s339 = sphi 0, %s339
      %s341 = sphi 0, %s339
      %s342 = sphi 0, %s341
      %s356 = sphi 0, %s342
      %s362 = sphi 0, %s364
      %s365 = sphi 0, %s362
      %s366 = sphi 0, %s365
      %s382 = sphi 0, %s366
      %s388 = sphi 0, %s390
      %s391 = sphi 0, %s388
      %s392 = sphi 0, %s391
      %s408 = sphi 0, %s392
      %s414 = sphi 0, %s416
      %s417 = sphi 0, %s414
      %s418 = sphi 0, %s417
      %s434 = sphi 0, %s418
    $region4: #{tpu_custom_call.1} parent=1 // loop_header_branch
      %40 = sbr.rel (%p38) target = $region8
    $region5: #{tpu_custom_call.1} parent=1 // loop_body
      %s42 = ssub.s32 %s37, 1
      %s43 = ssub.s32 %s37, 2
      %s44 = sadd.s32 %s37, 1
      %s46 = sadd.s32 %s45, 1
      %p49 = scmp.eq.s32.totalorder %s37, 3
      %p50 = scmp.ne.s32.totalorder %s45, %s47
      %p51 = scmp.eq.s32.totalorder %s37, 0
      %p52 = por %p50, %p51
      %p53 = scmp.ne.s32.totalorder %s45, %s47
      %p54 = scmp.eq.s32.totalorder %s42, 3
      %p55 = por %p53, %p54
      %p56 = scmp.ne.s32.totalorder %s47, %s48
      %p57 = scmp.eq.s32.totalorder %s42, 0
      %p58 = por %p56, %p57
      %p59 = scmp.ne.s32.totalorder %s47, %s48
      %p60 = scmp.eq.s32.totalorder %s43, 3
      %p61 = por %p59, %p60
      %p63 = scmp.ne.s32.totalorder %s48, %s62
      %p64 = scmp.eq.s32.totalorder %s43, 0
      %p65 = por %p63, %p64
      %s67 = sadd.s32 %s66, 1
      %p70 = scmp.eq.s32.totalorder %s37, 3
      %p71 = scmp.ne.s32.totalorder %s66, %s68
      %p72 = scmp.eq.s32.totalorder %s37, 0
      %p73 = por %p71, %p72
      %p74 = scmp.ne.s32.totalorder %s66, %s68
      %p75 = scmp.eq.s32.totalorder %s42, 3
      %p76 = por %p74, %p75
      %p77 = scmp.ne.s32.totalorder %s68, %s69
      %p78 = scmp.eq.s32.totalorder %s42, 0
      %p79 = por %p77, %p78
      %p80 = scmp.ne.s32.totalorder %s68, %s69
      %p81 = scmp.eq.s32.totalorder %s43, 3
      %p82 = por %p80, %p81
      %p84 = scmp.ne.s32.totalorder %s69, %s83
      %p85 = scmp.eq.s32.totalorder %s43, 0
      %p86 = por %p84, %p85
      %s88 = sadd.s32 %s87, 1
      %p91 = scmp.eq.s32.totalorder %s37, 3
      %p92 = scmp.ne.s32.totalorder %s87, %s89
      %p93 = scmp.eq.s32.totalorder %s37, 0
      %p94 = por %p92, %p93
      %p95 = scmp.ne.s32.totalorder %s87, %s89
      %p96 = scmp.eq.s32.totalorder %s42, 3
      %p97 = por %p95, %p96
      %p98 = scmp.ne.s32.totalorder %s89, %s90
      %p99 = scmp.eq.s32.totalorder %s42, 0
      %p100 = por %p98, %p99
      %p101 = scmp.ne.s32.totalorder %s89, %s90
      %p102 = scmp.eq.s32.totalorder %s43, 3
      %p103 = por %p101, %p102
      %p105 = scmp.ne.s32.totalorder %s90, %s104
      %p106 = scmp.eq.s32.totalorder %s43, 0
      %p107 = por %p105, %p106
      %s109 = sadd.s32 %s108, 1
      %p112 = scmp.eq.s32.totalorder %s37, 3
      %p113 = scmp.ne.s32.totalorder %s108, %s110
      %p114 = scmp.eq.s32.totalorder %s37, 0
      %p115 = por %p113, %p114
      %p116 = scmp.ne.s32.totalorder %s108, %s110
      %p117 = scmp.eq.s32.totalorder %s42, 3
      %p118 = por %p116, %p117
      %p119 = scmp.ne.s32.totalorder %s110, %s111
      %p120 = scmp.eq.s32.totalorder %s42, 0
      %p121 = por %p119, %p120
      %p122 = scmp.ne.s32.totalorder %s110, %s111
      %p123 = scmp.eq.s32.totalorder %s43, 3
      %p124 = por %p122, %p123
      %p126 = scmp.ne.s32.totalorder %s111, %s125
      %p127 = scmp.eq.s32.totalorder %s43, 0
      %p128 = por %p126, %p127
      %s130 = sadd.s32 %s129, 1
      %p133 = scmp.eq.s32.totalorder %s37, 3
      %p134 = scmp.ne.s32.totalorder %s129, %s131
      %p135 = scmp.eq.s32.totalorder %s37, 0
      %p136 = por %p134, %p135
      %p137 = scmp.ne.s32.totalorder %s129, %s131
      %p138 = scmp.eq.s32.totalorder %s42, 3
      %p139 = por %p137, %p138
      %p140 = scmp.ne.s32.totalorder %s131, %s132
      %p141 = scmp.eq.s32.totalorder %s42, 0
      %p142 = por %p140, %p141
      %p143 = scmp.ne.s32.totalorder %s131, %s132
      %p144 = scmp.eq.s32.totalorder %s43, 3
      %p145 = por %p143, %p144
      %p147 = scmp.ne.s32.totalorder %s132, %s146
      %p148 = scmp.eq.s32.totalorder %s43, 0
      %p149 = por %p147, %p148
      %s151 = sadd.s32 %s150, 1
      %p154 = scmp.eq.s32.totalorder %s37, 3
      %p155 = scmp.ne.s32.totalorder %s150, %s152
      %p156 = scmp.eq.s32.totalorder %s37, 0
      %p157 = por %p155, %p156
      %p158 = scmp.ne.s32.totalorder %s150, %s152
      %p159 = scmp.eq.s32.totalorder %s42, 3
      %p160 = por %p158, %p159
      %p161 = scmp.ne.s32.totalorder %s152, %s153
      %p162 = scmp.eq.s32.totalorder %s42, 0
      %p163 = por %p161, %p162
      %p164 = scmp.ne.s32.totalorder %s152, %s153
      %p165 = scmp.eq.s32.totalorder %s43, 3
      %p166 = por %p164, %p165
      %p168 = scmp.ne.s32.totalorder %s153, %s167
      %p169 = scmp.eq.s32.totalorder %s43, 0
      %p170 = por %p168, %p169
      %s172 = sadd.s32 %s171, 1
      %p175 = scmp.eq.s32.totalorder %s37, 3
      %p176 = scmp.ne.s32.totalorder %s171, %s173
      %p177 = scmp.eq.s32.totalorder %s37, 0
      %p178 = por %p176, %p177
      %p179 = scmp.ne.s32.totalorder %s171, %s173
      %p180 = scmp.eq.s32.totalorder %s42, 3
      %p181 = por %p179, %p180
      %p182 = scmp.ne.s32.totalorder %s173, %s174
      %p183 = scmp.eq.s32.totalorder %s42, 0
      %p184 = por %p182, %p183
      %p185 = scmp.ne.s32.totalorder %s173, %s174
      %p186 = scmp.eq.s32.totalorder %s43, 3
      %p187 = por %p185, %p186
      %p189 = scmp.ne.s32.totalorder %s174, %s188
      %p190 = scmp.eq.s32.totalorder %s43, 0
      %p191 = por %p189, %p190
      %s193 = sadd.s32 %s192, 1
      %p196 = scmp.eq.s32.totalorder %s37, 3
      %p197 = scmp.ne.s32.totalorder %s192, %s194
      %p198 = scmp.eq.s32.totalorder %s37, 0
      %p199 = por %p197, %p198
      %p200 = scmp.ne.s32.totalorder %s192, %s194
      %p201 = scmp.eq.s32.totalorder %s42, 3
      %p202 = por %p200, %p201
      %p203 = scmp.ne.s32.totalorder %s194, %s195
      %p204 = scmp.eq.s32.totalorder %s42, 0
      %p205 = por %p203, %p204
      %p206 = scmp.ne.s32.totalorder %s194, %s195
      %p207 = scmp.eq.s32.totalorder %s43, 3
      %p208 = por %p206, %p207
      %p210 = scmp.ne.s32.totalorder %s195, %s209
      %p211 = scmp.eq.s32.totalorder %s43, 0
      %p212 = por %p210, %p211
      %s214 = sadd.s32 %s213, 1
      %p217 = scmp.eq.s32.totalorder %s37, 3
      %p218 = scmp.ne.s32.totalorder %s213, %s215
      %p219 = scmp.eq.s32.totalorder %s37, 0
      %p220 = por %p218, %p219
      %p221 = scmp.ne.s32.totalorder %s213, %s215
      %p222 = scmp.eq.s32.totalorder %s42, 3
      %p223 = por %p221, %p222
      %p224 = scmp.ne.s32.totalorder %s215, %s216
      %p225 = scmp.eq.s32.totalorder %s42, 0
      %p226 = por %p224, %p225
      %p227 = scmp.ne.s32.totalorder %s215, %s216
      %p228 = scmp.eq.s32.totalorder %s43, 3
      %p229 = por %p227, %p228
      %p231 = scmp.ne.s32.totalorder %s216, %s230
      %p232 = scmp.eq.s32.totalorder %s43, 0
      %p233 = por %p231, %p232
      %s235 = sadd.s32 %s234, 1
      %p238 = scmp.eq.s32.totalorder %s37, 3
      %p239 = scmp.ne.s32.totalorder %s234, %s236
      %p240 = scmp.eq.s32.totalorder %s37, 0
      %p241 = por %p239, %p240
      %p242 = scmp.ne.s32.totalorder %s234, %s236
      %p243 = scmp.eq.s32.totalorder %s42, 3
      %p244 = por %p242, %p243
      %p245 = scmp.ne.s32.totalorder %s236, %s237
      %p246 = scmp.eq.s32.totalorder %s42, 0
      %p247 = por %p245, %p246
      %p248 = scmp.ne.s32.totalorder %s236, %s237
      %p249 = scmp.eq.s32.totalorder %s43, 3
      %p250 = por %p248, %p249
      %p252 = scmp.ne.s32.totalorder %s237, %s251
      %p253 = scmp.eq.s32.totalorder %s43, 0
      %p254 = por %p252, %p253
      %s256 = sadd.s32 %s255, 1
      %p259 = scmp.eq.s32.totalorder %s37, 3
      %p260 = scmp.ne.s32.totalorder %s255, %s257
      %p261 = scmp.eq.s32.totalorder %s37, 0
      %p262 = por %p260, %p261
      %p263 = scmp.ne.s32.totalorder %s255, %s257
      %p264 = scmp.eq.s32.totalorder %s42, 3
      %p265 = por %p263, %p264
      %p266 = scmp.ne.s32.totalorder %s257, %s258
      %p267 = scmp.eq.s32.totalorder %s42, 0
      %p268 = por %p266, %p267
      %p269 = scmp.ne.s32.totalorder %s257, %s258
      %p270 = scmp.eq.s32.totalorder %s43, 3
      %p271 = por %p269, %p270
      %p273 = scmp.ne.s32.totalorder %s258, %s272
      %p274 = scmp.eq.s32.totalorder %s43, 0
      %p275 = por %p273, %p274
      %s277 = sadd.s32 %s276, 1
      %p280 = scmp.eq.s32.totalorder %s37, 3
      %p281 = scmp.ne.s32.totalorder %s276, %s278
      %p282 = scmp.eq.s32.totalorder %s37, 0
      %p283 = por %p281, %p282
      %p284 = scmp.ne.s32.totalorder %s276, %s278
      %p285 = scmp.eq.s32.totalorder %s42, 3
      %p286 = por %p284, %p285
      %p287 = scmp.ne.s32.totalorder %s278, %s279
      %p288 = scmp.eq.s32.totalorder %s42, 0
      %p289 = por %p287, %p288
      %p290 = scmp.ne.s32.totalorder %s278, %s279
      %p291 = scmp.eq.s32.totalorder %s43, 3
      %p292 = por %p290, %p291
      %p294 = scmp.ne.s32.totalorder %s279, %s293
      %p295 = scmp.eq.s32.totalorder %s43, 0
      %p296 = por %p294, %p295
      %s298 = sadd.s32 %s297, 1
      %p301 = scmp.eq.s32.totalorder %s37, 3
      %p302 = scmp.ne.s32.totalorder %s297, %s299
      %p303 = scmp.eq.s32.totalorder %s37, 0
      %p304 = por %p302, %p303
      %p305 = scmp.ne.s32.totalorder %s297, %s299
      %p306 = scmp.eq.s32.totalorder %s42, 3
      %p307 = por %p305, %p306
      %p308 = scmp.ne.s32.totalorder %s299, %s300
      %p309 = scmp.eq.s32.totalorder %s42, 0
      %p310 = por %p308, %p309
      %p311 = scmp.ne.s32.totalorder %s299, %s300
      %p312 = scmp.eq.s32.totalorder %s43, 3
      %p313 = por %p311, %p312
      %p315 = scmp.ne.s32.totalorder %s300, %s314
      %p316 = scmp.eq.s32.totalorder %s43, 0
      %p317 = por %p315, %p316
      %s319 = sadd.s32 %s318, 1
      %p322 = scmp.eq.s32.totalorder %s37, 3
      %p323 = scmp.ne.s32.totalorder %s318, %s320
      %p324 = scmp.eq.s32.totalorder %s37, 0
      %p325 = por %p323, %p324
      %p326 = scmp.ne.s32.totalorder %s318, %s320
      %p327 = scmp.eq.s32.totalorder %s42, 3
      %p328 = por %p326, %p327
      %p329 = scmp.ne.s32.totalorder %s320, %s321
      %p330 = scmp.eq.s32.totalorder %s42, 0
      %p331 = por %p329, %p330
      %p332 = scmp.ne.s32.totalorder %s320, %s321
      %p333 = scmp.eq.s32.totalorder %s43, 3
      %p334 = por %p332, %p333
      %p336 = scmp.ne.s32.totalorder %s321, %s335
      %p337 = scmp.eq.s32.totalorder %s43, 0
      %p338 = por %p336, %p337
      %s340 = sadd.s32 %s339, 1
      %p343 = scmp.eq.s32.totalorder %s37, 3
      %p344 = scmp.ne.s32.totalorder %s339, %s341
      %p345 = scmp.eq.s32.totalorder %s37, 0
      %p346 = por %p344, %p345
      %p347 = scmp.ne.s32.totalorder %s339, %s341
      %p348 = scmp.eq.s32.totalorder %s42, 3
      %p349 = por %p347, %p348
      %p350 = scmp.ne.s32.totalorder %s341, %s342
      %p351 = scmp.eq.s32.totalorder %s42, 0
      %p352 = por %p350, %p351
      %p353 = scmp.ne.s32.totalorder %s341, %s342
      %p354 = scmp.eq.s32.totalorder %s43, 3
      %p355 = por %p353, %p354
      %p357 = scmp.ne.s32.totalorder %s342, %s356
      %p358 = scmp.eq.s32.totalorder %s43, 0
      %p359 = por %p357, %p358
      %s360 = ssub.s32 %s37, %s44
      %p361 = scmp.eq.s32.totalorder %s360, 0
      %s363 = sadd.s32 %s362, 1
      %s364 = scalar_select %p361, %s362, %s363
      %p367 = pneg %p361
      %p368 = scmp.eq.s32.totalorder %s37, 3
      %p369 = por %p367, %p368
      %p370 = scmp.ne.s32.totalorder %s362, %s365
      %p371 = scmp.eq.s32.totalorder %s37, 0
      %p372 = por %p370, %p371
      %p373 = scmp.ne.s32.totalorder %s362, %s365
      %p374 = scmp.eq.s32.totalorder %s42, 3
      %p375 = por %p373, %p374
      %p376 = scmp.ne.s32.totalorder %s365, %s366
      %p377 = scmp.eq.s32.totalorder %s42, 0
      %p378 = por %p376, %p377
      %p379 = scmp.ne.s32.totalorder %s365, %s366
      %p380 = scmp.eq.s32.totalorder %s43, 3
      %p381 = por %p379, %p380
      %p383 = scmp.ne.s32.totalorder %s366, %s382
      %p384 = scmp.eq.s32.totalorder %s43, 0
      %p385 = por %p383, %p384
      %s386 = ssub.s32 %s37, %s44
      %p387 = scmp.eq.s32.totalorder %s386, 0
      %s389 = sadd.s32 %s388, 1
      %s390 = scalar_select %p387, %s388, %s389
      %p393 = pneg %p387
      %p394 = scmp.eq.s32.totalorder %s37, 3
      %p395 = por %p393, %p394
      %p396 = scmp.ne.s32.totalorder %s388, %s391
      %p397 = scmp.eq.s32.totalorder %s37, 0
      %p398 = por %p396, %p397
      %p399 = scmp.ne.s32.totalorder %s388, %s391
      %p400 = scmp.eq.s32.totalorder %s42, 3
      %p401 = por %p399, %p400
      %p402 = scmp.ne.s32.totalorder %s391, %s392
      %p403 = scmp.eq.s32.totalorder %s42, 0
      %p404 = por %p402, %p403
      %p405 = scmp.ne.s32.totalorder %s391, %s392
      %p406 = scmp.eq.s32.totalorder %s43, 3
      %p407 = por %p405, %p406
      %p409 = scmp.ne.s32.totalorder %s392, %s408
      %p410 = scmp.eq.s32.totalorder %s43, 0
      %p411 = por %p409, %p410
      %s412 = ssub.s32 %s37, %s44
      %p413 = scmp.eq.s32.totalorder %s412, 0
      %s415 = sadd.s32 %s414, 1
      %s416 = scalar_select %p413, %s414, %s415
      %p419 = pneg %p413
      %p420 = scmp.eq.s32.totalorder %s37, 3
      %p421 = por %p419, %p420
      %p422 = scmp.ne.s32.totalorder %s414, %s417
      %p423 = scmp.eq.s32.totalorder %s37, 0
      %p424 = por %p422, %p423
      %p425 = scmp.ne.s32.totalorder %s414, %s417
      %p426 = scmp.eq.s32.totalorder %s42, 3
      %p427 = por %p425, %p426
      %p428 = scmp.ne.s32.totalorder %s417, %s418
      %p429 = scmp.eq.s32.totalorder %s42, 0
      %p430 = por %p428, %p429
      %p431 = scmp.ne.s32.totalorder %s417, %s418
      %p432 = scmp.eq.s32.totalorder %s43, 3
      %p433 = por %p431, %p432
      %p435 = scmp.ne.s32.totalorder %s418, %s434
      %p436 = scmp.eq.s32.totalorder %s43, 0
      %p437 = por %p435, %p436
      %p438 = scmp.le.s32.totalorder 1, %s37
      %p439 = scmp.lt.s32.totalorder %s37, 5
      %p440 = pnand %p438, %p439
      %p441 = pneg %p440
      // Predicated region
      $region9: #{tpu_custom_call.1} parent=5 // pred_check
        _
      $region10: #{tpu_custom_call.1} parent=5 // pred_check_branch
        %443 = sbr.rel (%p440) target = $region12
      $region11: #{tpu_custom_call.1} parent=5 // pred_region
        %s444 = ssub.s32 %s37, 1
        // Predicated region
        $region13: #{tpu_custom_call.1} parent=11 // pred_check
          %p445 = pneg %p58
        $region14: #{tpu_custom_call.1} parent=11 // pred_check_branch
          %447 = sbr.rel (%p445) target = $region16
        $region15: #{tpu_custom_call.1} parent=11 // pred_region
          %s449 = ssub.s32 256, 256
          %450 = vsyncadd [#allocation4], %s449
          %s451 = sshll.u32 [#allocation3], 4
          %s452 = int_to_ptr.vmem [resolvable:$true] %s451
          %457 = dma.hbm_to_vmem [thread:$0]  %s0, 256, %s452, [#allocation4], 64, 64, 4
        $region16: #{tpu_custom_call.1} parent=11 // pred_fallthru
          _
        // Predicated region
        $region17: #{tpu_custom_call.1} parent=11 // pred_check
          %p458 = pneg %p79
        $region18: #{tpu_custom_call.1} parent=11 // pred_check_branch
          %460 = sbr.rel (%p458) target = $region20
        $region19: #{tpu_custom_call.1} parent=11 // pred_region
          %s462 = ssub.s32 256, 256
          %463 = vsyncadd [#allocation7], %s462
          %s464 = sshll.u32 [#allocation6], 4
          %s465 = int_to_ptr.vmem [resolvable:$true] %s464
          %470 = dma.hbm_to_vmem [thread:$0]  %s1, 256, %s465, [#allocation7], 64, 64, 4
        $region20: #{tpu_custom_call.1} parent=11 // pred_fallthru
          _
        // Predicated region
        $region21: #{tpu_custom_call.1} parent=11 // pred_check
          %p471 = pneg %p100
        $region22: #{tpu_custom_call.1} parent=11 // pred_check_branch
          %473 = sbr.rel (%p471) target = $region24
        $region23: #{tpu_custom_call.1} parent=11 // pred_region
          %s475 = ssub.s32 16, 16
          %476 = vsyncadd [#allocation7], %s475
          %s478 = sshll.u32 [#allocation8], 4
          %s479 = int_to_ptr.vmem [resolvable:$true] %s478
          %481 = dma.hbm_to_vmem [thread:$0]  %s2, 16, %s479, [#allocation7]
        $region24: #{tpu_custom_call.1} parent=11 // pred_fallthru
          _
        // Predicated region
        $region25: #{tpu_custom_call.1} parent=11 // pred_check
          %p482 = pneg %p121
        $region26: #{tpu_custom_call.1} parent=11 // pred_check_branch
          %484 = sbr.rel (%p482) target = $region28
        $region27: #{tpu_custom_call.1} parent=11 // pred_region
          %s486 = ssub.s32 2048, 2048
          %487 = vsyncadd [#allocation10], %s486
          %s488 = sshll.u32 [#allocation9], 4
          %s489 = int_to_ptr.vmem [resolvable:$true] %s488
          %494 = dma.hbm_to_vmem [thread:$0]  %s3, 2048, %s489, [#allocation10], 128, 128, 8
        $region28: #{tpu_custom_call.1} parent=11 // pred_fallthru
          _
        // Predicated region
        $region29: #{tpu_custom_call.1} parent=11 // pred_check
          %p495 = pneg %p142
        $region30: #{tpu_custom_call.1} parent=11 // pred_check_branch
          %497 = sbr.rel (%p495) target = $region32
        $region31: #{tpu_custom_call.1} parent=11 // pred_region
          %s499 = ssub.s32 32, 32
          %500 = vsyncadd [#allocation10], %s499
          %s502 = sshll.u32 [#allocation11], 4
          %s503 = int_to_ptr.vmem [resolvable:$true] %s502
          %505 = dma.hbm_to_vmem [thread:$0]  %s4, 32, %s503, [#allocation10]
        $region32: #{tpu_custom_call.1} parent=11 // pred_fallthru
          _
        // Predicated region
        $region33: #{tpu_custom_call.1} parent=11 // pred_check
          %p506 = pneg %p163
        $region34: #{tpu_custom_call.1} parent=11 // pred_check_branch
          %508 = sbr.rel (%p506) target = $region36
        $region35: #{tpu_custom_call.1} parent=11 // pred_region
          %s510 = ssub.s32 32, 32
          %511 = vsyncadd [#allocation13], %s510
          %s513 = sshll.u32 [#allocation12], 4
          %s514 = int_to_ptr.vmem [resolvable:$true] %s513
          %516 = dma.hbm_to_vmem [thread:$0]  %s5, 32, %s514, [#allocation13]
        $region36: #{tpu_custom_call.1} parent=11 // pred_fallthru
          _
        // Predicated region
        $region37: #{tpu_custom_call.1} parent=11 // pred_check
          %p517 = pneg %p184
        $region38: #{tpu_custom_call.1} parent=11 // pred_check_branch
          %519 = sbr.rel (%p517) target = $region40
        $region39: #{tpu_custom_call.1} parent=11 // pred_region
          %s521 = ssub.s32 32, 32
          %522 = vsyncadd [#allocation13], %s521
          %s524 = sshll.u32 [#allocation14], 4
          %s525 = int_to_ptr.vmem [resolvable:$true] %s524
          %527 = dma.hbm_to_vmem [thread:$0]  %s6, 32, %s525, [#allocation13]
        $region40: #{tpu_custom_call.1} parent=11 // pred_fallthru
          _
        // Predicated region
        $region41: #{tpu_custom_call.1} parent=11 // pred_check
          %p528 = pneg %p205
        $region42: #{tpu_custom_call.1} parent=11 // pred_check_branch
          %530 = sbr.rel (%p528) target = $region44
        $region43: #{tpu_custom_call.1} parent=11 // pred_region
          %s532 = ssub.s32 8192, 8192
          %533 = vsyncadd [#allocation16], %s532
          %s534 = sshll.u32 [#allocation15], 4
          %s535 = int_to_ptr.vmem [resolvable:$true] %s534
          %540 = dma.hbm_to_vmem [thread:$0]  %s7, 8192, %s535, [#allocation16], 256, 256, 16
        $region44: #{tpu_custom_call.1} parent=11 // pred_fallthru
          _
        // Predicated region
        $region45: #{tpu_custom_call.1} parent=11 // pred_check
          %p541 = pneg %p226
        $region46: #{tpu_custom_call.1} parent=11 // pred_check_branch
          %543 = sbr.rel (%p541) target = $region48
        $region47: #{tpu_custom_call.1} parent=11 // pred_region
          %s545 = ssub.s32 64, 64
          %546 = vsyncadd [#allocation16], %s545
          %s548 = sshll.u32 [#allocation17], 4
          %s549 = int_to_ptr.vmem [resolvable:$true] %s548
          %551 = dma.hbm_to_vmem [thread:$0]  %s8, 64, %s549, [#allocation16]
        $region48: #{tpu_custom_call.1} parent=11 // pred_fallthru
          _
        // Predicated region
        $region49: #{tpu_custom_call.1} parent=11 // pred_check
          %p552 = pneg %p247
        $region50: #{tpu_custom_call.1} parent=11 // pred_check_branch
          %554 = sbr.rel (%p552) target = $region52
        $region51: #{tpu_custom_call.1} parent=11 // pred_region
          %s556 = ssub.s32 64, 64
          %557 = vsyncadd [#allocation19], %s556
          %s559 = sshll.u32 [#allocation18], 4
          %s560 = int_to_ptr.vmem [resolvable:$true] %s559
          %562 = dma.hbm_to_vmem [thread:$0]  %s9, 64, %s560, [#allocation19]
        $region52: #{tpu_custom_call.1} parent=11 // pred_fallthru
          _
        // Predicated region
        $region53: #{tpu_custom_call.1} parent=11 // pred_check
          %p563 = pneg %p268
        $region54: #{tpu_custom_call.1} parent=11 // pred_check_branch
          %565 = sbr.rel (%p563) target = $region56
        $region55: #{tpu_custom_call.1} parent=11 // pred_region
          %s567 = ssub.s32 64, 64
          %568 = vsyncadd [#allocation19], %s567
          %s570 = sshll.u32 [#allocation20], 4
          %s571 = int_to_ptr.vmem [resolvable:$true] %s570
          %573 = dma.hbm_to_vmem [thread:$0]  %s10, 64, %s571, [#allocation19]
        $region56: #{tpu_custom_call.1} parent=11 // pred_fallthru
          _
        // Predicated region
        $region57: #{tpu_custom_call.1} parent=11 // pred_check
          %p574 = pneg %p289
        $region58: #{tpu_custom_call.1} parent=11 // pred_check_branch
          %576 = sbr.rel (%p574) target = $region60
        $region59: #{tpu_custom_call.1} parent=11 // pred_region
          %s578 = ssub.s32 32768, 32768
          %579 = vsyncadd [#allocation22], %s578
          %s580 = sshll.u32 [#allocation21], 4
          %s581 = int_to_ptr.vmem [resolvable:$true] %s580
          %586 = dma.hbm_to_vmem [thread:$0]  %s11, 32768, %s581, [#allocation22], 512, 512, 32
        $region60: #{tpu_custom_call.1} parent=11 // pred_fallthru
          _
        // Predicated region
        $region61: #{tpu_custom_call.1} parent=11 // pred_check
          %p587 = pneg %p310
        $region62: #{tpu_custom_call.1} parent=11 // pred_check_branch
          %589 = sbr.rel (%p587) target = $region64
        $region63: #{tpu_custom_call.1} parent=11 // pred_region
          %s591 = ssub.s32 128, 128
          %592 = vsyncadd [#allocation22], %s591
          %s594 = sshll.u32 [#allocation23], 4
          %s595 = int_to_ptr.vmem [resolvable:$true] %s594
          %597 = dma.hbm_to_vmem [thread:$0]  %s12, 128, %s595, [#allocation22]
        $region64: #{tpu_custom_call.1} parent=11 // pred_fallthru
          _
        // Predicated region
        $region65: #{tpu_custom_call.1} parent=11 // pred_check
          %p598 = pneg %p331
        $region66: #{tpu_custom_call.1} parent=11 // pred_check_branch
          %600 = sbr.rel (%p598) target = $region68
        $region67: #{tpu_custom_call.1} parent=11 // pred_region
          %s602 = ssub.s32 128, 128
          %603 = vsyncadd [#allocation25], %s602
          %s605 = sshll.u32 [#allocation24], 4
          %s606 = int_to_ptr.vmem [resolvable:$true] %s605
          %608 = dma.hbm_to_vmem [thread:$0]  %s13, 128, %s606, [#allocation25]
        $region68: #{tpu_custom_call.1} parent=11 // pred_fallthru
          _
        // Predicated region
        $region69: #{tpu_custom_call.1} parent=11 // pred_check
          %p609 = pneg %p352
        $region70: #{tpu_custom_call.1} parent=11 // pred_check_branch
          %611 = sbr.rel (%p609) target = $region72
        $region71: #{tpu_custom_call.1} parent=11 // pred_region
          %s613 = ssub.s32 128, 128
          %614 = vsyncadd [#allocation25], %s613
          %s616 = sshll.u32 [#allocation26], 4
          %s617 = int_to_ptr.vmem [resolvable:$true] %s616
          %619 = dma.hbm_to_vmem [thread:$0]  %s14, 128, %s617, [#allocation25]
        $region72: #{tpu_custom_call.1} parent=11 // pred_fallthru
          _
      $region12: #{tpu_custom_call.1} parent=5 // pred_fallthru
        _
      %p620 = scmp.lt.s32.totalorder %s37, 4
      // Predicated region
      $region73: #{tpu_custom_call.1} parent=5 // pred_check
        %p621 = pneg %p620
      $region74: #{tpu_custom_call.1} parent=5 // pred_check_branch
        %623 = sbr.rel (%p621) target = $region76
      $region75: #{tpu_custom_call.1} parent=5 // pred_region
        // Predicated region
        $region77: #{tpu_custom_call.1} parent=75 // pred_check
          %p624 = pneg %p372
        $region78: #{tpu_custom_call.1} parent=75 // pred_check_branch
          %626 = sbr.rel (%p624) target = $region80
        $region79: #{tpu_custom_call.1} parent=75 // pred_region
          %s627 = sand.u32 %s37, 1
          %s628 = scalar_lea.sflag [#allocation28], %s627
          %s629 = sand.u32 %s362, 1
          %s630 = smul.addr %s629, 1024
          %s631 = scalar_lea.vmem [#allocation27], %s630
          %s632 = smul.u32 2, %s37
          %s634 = ssub.s32 16384, 16384
          %635 = vsyncadd %s628, %s634
          %s636 = smul.addr %s632, 64
          %s637 = scalar_lea.hbm %s15, %s636
          %s638 = sshll.u32 %s631, 4
          %s639 = int_to_ptr.vmem [resolvable:$true] %s638
          %644 = dma.hbm_to_vmem [thread:$0]  %s637, 16384, %s639, %s628, 512, 128, 8
        $region80: #{tpu_custom_call.1} parent=75 // pred_fallthru
          _
        // Predicated region
        $region81: #{tpu_custom_call.1} parent=75 // pred_check
          %p645 = pneg %p398
        $region82: #{tpu_custom_call.1} parent=75 // pred_check_branch
          %647 = sbr.rel (%p645) target = $region84
        $region83: #{tpu_custom_call.1} parent=75 // pred_region
          %s648 = sand.u32 %s37, 1
          %s649 = scalar_lea.sflag [#allocation28], %s648
          %s650 = sand.u32 %s388, 1
          %s651 = smul.addr %s650, 2
          %s652 = scalar_lea.vmem [#allocation29], %s651
          %s653 = smul.u32 2, %s37
          %s655 = ssub.s32 32, 32
          %656 = vsyncadd %s649, %s655
          %s657 = smul.addr %s653, 16
          %s658 = scalar_lea.hbm %s16, %s657
          %s660 = sshll.u32 %s652, 4
          %s661 = int_to_ptr.vmem [resolvable:$true] %s660
          %663 = dma.hbm_to_vmem [thread:$0]  %s658, 32, %s661, %s649
        $region84: #{tpu_custom_call.1} parent=75 // pred_fallthru
          _
      $region76: #{tpu_custom_call.1} parent=5 // pred_fallthru
        _
      %p664 = scmp.le.s32.totalorder 1, %s37
      %p665 = scmp.lt.s32.totalorder %s37, 5
      %p666 = pnand %p664, %p665
      %p667 = pneg %p666
      // Predicated region
      $region85: #{tpu_custom_call.1} parent=5 // pred_check
        _
      $region86: #{tpu_custom_call.1} parent=5 // pred_check_branch
        %669 = sbr.rel (%p666) target = $region88
      $region87: #{tpu_custom_call.1} parent=5 // pred_region
        %s670 = ssub.s32 %s37, 1
        // Predicated region
        $region89: #{tpu_custom_call.1} parent=87 // pred_check
          %p671 = pneg %p58
        $region90: #{tpu_custom_call.1} parent=87 // pred_check_branch
          %673 = sbr.rel (%p671) target = $region92
        $region91: #{tpu_custom_call.1} parent=87 // pred_region
          %674 = dma.done [#allocation4], 256
        $region92: #{tpu_custom_call.1} parent=87 // pred_fallthru
          _
        // Predicated region
        $region93: #{tpu_custom_call.1} parent=87 // pred_check
          %p675 = pneg %p79
        $region94: #{tpu_custom_call.1} parent=87 // pred_check_branch
          %677 = sbr.rel (%p675) target = $region96
        $region95: #{tpu_custom_call.1} parent=87 // pred_region
          %678 = dma.done [#allocation7], 256
        $region96: #{tpu_custom_call.1} parent=87 // pred_fallthru
          _
        // Predicated region
        $region97: #{tpu_custom_call.1} parent=87 // pred_check
          %p679 = pneg %p100
        $region98: #{tpu_custom_call.1} parent=87 // pred_check_branch
          %681 = sbr.rel (%p679) target = $region100
        $region99: #{tpu_custom_call.1} parent=87 // pred_region
          %682 = dma.done [#allocation7], 16
        $region100: #{tpu_custom_call.1} parent=87 // pred_fallthru
          _
        // Predicated region
        $region101: #{tpu_custom_call.1} parent=87 // pred_check
          %p683 = pneg %p121
        $region102: #{tpu_custom_call.1} parent=87 // pred_check_branch
          %685 = sbr.rel (%p683) target = $region104
        $region103: #{tpu_custom_call.1} parent=87 // pred_region
          %686 = dma.done [#allocation10], 2048
        $region104: #{tpu_custom_call.1} parent=87 // pred_fallthru
          _
        // Predicated region
        $region105: #{tpu_custom_call.1} parent=87 // pred_check
          %p687 = pneg %p142
        $region106: #{tpu_custom_call.1} parent=87 // pred_check_branch
          %689 = sbr.rel (%p687) target = $region108
        $region107: #{tpu_custom_call.1} parent=87 // pred_region
          %690 = dma.done [#allocation10], 32
        $region108: #{tpu_custom_call.1} parent=87 // pred_fallthru
          _
        // Predicated region
        $region109: #{tpu_custom_call.1} parent=87 // pred_check
          %p691 = pneg %p163
        $region110: #{tpu_custom_call.1} parent=87 // pred_check_branch
          %693 = sbr.rel (%p691) target = $region112
        $region111: #{tpu_custom_call.1} parent=87 // pred_region
          %694 = dma.done [#allocation13], 32
        $region112: #{tpu_custom_call.1} parent=87 // pred_fallthru
          _
        // Predicated region
        $region113: #{tpu_custom_call.1} parent=87 // pred_check
          %p695 = pneg %p184
        $region114: #{tpu_custom_call.1} parent=87 // pred_check_branch
          %697 = sbr.rel (%p695) target = $region116
        $region115: #{tpu_custom_call.1} parent=87 // pred_region
          %698 = dma.done [#allocation13], 32
        $region116: #{tpu_custom_call.1} parent=87 // pred_fallthru
          _
        // Predicated region
        $region117: #{tpu_custom_call.1} parent=87 // pred_check
          %p699 = pneg %p205
        $region118: #{tpu_custom_call.1} parent=87 // pred_check_branch
          %701 = sbr.rel (%p699) target = $region120
        $region119: #{tpu_custom_call.1} parent=87 // pred_region
          %702 = dma.done [#allocation16], 8192
        $region120: #{tpu_custom_call.1} parent=87 // pred_fallthru
          _
        // Predicated region
        $region121: #{tpu_custom_call.1} parent=87 // pred_check
          %p703 = pneg %p226
        $region122: #{tpu_custom_call.1} parent=87 // pred_check_branch
          %705 = sbr.rel (%p703) target = $region124
        $region123: #{tpu_custom_call.1} parent=87 // pred_region
          %706 = dma.done [#allocation16], 64
        $region124: #{tpu_custom_call.1} parent=87 // pred_fallthru
          _
        // Predicated region
        $region125: #{tpu_custom_call.1} parent=87 // pred_check
          %p707 = pneg %p247
        $region126: #{tpu_custom_call.1} parent=87 // pred_check_branch
          %709 = sbr.rel (%p707) target = $region128
        $region127: #{tpu_custom_call.1} parent=87 // pred_region
          %710 = dma.done [#allocation19], 64
        $region128: #{tpu_custom_call.1} parent=87 // pred_fallthru
          _
        // Predicated region
        $region129: #{tpu_custom_call.1} parent=87 // pred_check
          %p711 = pneg %p268
        $region130: #{tpu_custom_call.1} parent=87 // pred_check_branch
          %713 = sbr.rel (%p711) target = $region132
        $region131: #{tpu_custom_call.1} parent=87 // pred_region
          %714 = dma.done [#allocation19], 64
        $region132: #{tpu_custom_call.1} parent=87 // pred_fallthru
          _
        // Predicated region
        $region133: #{tpu_custom_call.1} parent=87 // pred_check
          %p715 = pneg %p289
        $region134: #{tpu_custom_call.1} parent=87 // pred_check_branch
          %717 = sbr.rel (%p715) target = $region136
        $region135: #{tpu_custom_call.1} parent=87 // pred_region
          %718 = dma.done [#allocation22], 32768
        $region136: #{tpu_custom_call.1} parent=87 // pred_fallthru
          _
        // Predicated region
        $region137: #{tpu_custom_call.1} parent=87 // pred_check
          %p719 = pneg %p310
        $region138: #{tpu_custom_call.1} parent=87 // pred_check_branch
          %721 = sbr.rel (%p719) target = $region140
        $region139: #{tpu_custom_call.1} parent=87 // pred_region
          %722 = dma.done [#allocation22], 128
        $region140: #{tpu_custom_call.1} parent=87 // pred_fallthru
          _
        // Predicated region
        $region141: #{tpu_custom_call.1} parent=87 // pred_check
          %p723 = pneg %p331
        $region142: #{tpu_custom_call.1} parent=87 // pred_check_branch
          %725 = sbr.rel (%p723) target = $region144
        $region143: #{tpu_custom_call.1} parent=87 // pred_region
          %726 = dma.done [#allocation25], 128
        $region144: #{tpu_custom_call.1} parent=87 // pred_fallthru
          _
        // Predicated region
        $region145: #{tpu_custom_call.1} parent=87 // pred_check
          %p727 = pneg %p352
        $region146: #{tpu_custom_call.1} parent=87 // pred_check_branch
          %729 = sbr.rel (%p727) target = $region148
        $region147: #{tpu_custom_call.1} parent=87 // pred_region
          %730 = dma.done [#allocation25], 128
        $region148: #{tpu_custom_call.1} parent=87 // pred_fallthru
          _
        %s731 = sand.u32 %s42, 1
        %s732 = scalar_lea.sflag [#allocation28], %s731
        %s733 = sand.u32 %s365, 1
        %s734 = smul.addr %s733, 1024
        %s735 = scalar_lea.vmem [#allocation27], %s734
        // Predicated region
        $region149: #{tpu_custom_call.1} parent=87 // pred_check
          %p736 = pneg %p378
        $region150: #{tpu_custom_call.1} parent=87 // pred_check_branch
          %738 = sbr.rel (%p736) target = $region152
        $region151: #{tpu_custom_call.1} parent=87 // pred_region
          %739 = dma.done %s732, 16384
        $region152: #{tpu_custom_call.1} parent=87 // pred_fallthru
          _
        %s740 = sand.u32 %s42, 1
        %s741 = scalar_lea.sflag [#allocation28], %s740
        %s742 = sand.u32 %s391, 1
        %s743 = smul.addr %s742, 2
        %s744 = scalar_lea.vmem [#allocation29], %s743
        // Predicated region
        $region153: #{tpu_custom_call.1} parent=87 // pred_check
          %p745 = pneg %p404
        $region154: #{tpu_custom_call.1} parent=87 // pred_check_branch
          %747 = sbr.rel (%p745) target = $region156
        $region155: #{tpu_custom_call.1} parent=87 // pred_region
          %748 = dma.done %s741, 32
        $region156: #{tpu_custom_call.1} parent=87 // pred_fallthru
          _
        %p749 = pneg %p58
        %p750 = pneg %p55
        %p751 = pneg %p79
        %p752 = pneg %p76
        %p753 = pneg %p100
        %p754 = pneg %p97
        %p755 = pneg %p121
        %p756 = pneg %p118
        %p757 = pneg %p142
        %p758 = pneg %p139
        %p759 = pneg %p163
        %p760 = pneg %p160
        %p761 = pneg %p184
        %p762 = pneg %p181
        %p763 = pneg %p205
        %p764 = pneg %p202
        %p765 = pneg %p226
        %p766 = pneg %p223
        %p767 = pneg %p247
        %p768 = pneg %p244
        %p769 = pneg %p268
        %p770 = pneg %p265
        %p771 = pneg %p289
        %p772 = pneg %p286
        %p773 = pneg %p310
        %p774 = pneg %p307
        %p775 = pneg %p331
        %p776 = pneg %p328
        %p777 = pneg %p352
        %p778 = pneg %p349
        %s779 = sand.u32 %s42, 1
        %s780 = scalar_lea.sflag [#allocation28], %s779
        %s781 = sand.u32 %s365, 1
        %s782 = smul.addr %s781, 1024
        %s783 = scalar_lea.vmem [#allocation27], %s782
        %p784 = pneg %p378
        %p785 = pneg %p375
        %s786 = sand.u32 %s42, 1
        %s787 = scalar_lea.sflag [#allocation28], %s786
        %s788 = sand.u32 %s391, 1
        %s789 = smul.addr %s788, 2
        %s790 = scalar_lea.vmem [#allocation29], %s789
        %p791 = pneg %p404
        %p792 = pneg %p401
        %p793 = pneg %p430
        %p794 = pneg %p427
        %s795 = sand.u32 %s417, 1
        %s796 = scalar_lea.sflag [#allocation5], %s795
        %s797 = sand.u32 %s417, 1
        %s798 = smul.addr %s797, 64
        %s799 = scalar_lea.vmem [#allocation30], %s798
        %s800 = smul.u32 2, %s42
        %s801 = smul.u32 2, %s42
        %s802 = smul.u32 2, %s42
        %p804 = scmp.eq.s32.totalorder %s42, 0
        // Predicated region
        $region157: #{tpu_custom_call.1} parent=87 // pred_check
          %p805 = pneg %p804
        $region158: #{tpu_custom_call.1} parent=87 // pred_check_branch
          %807 = sbr.rel (%p805) target = $region160
        $region159: #{tpu_custom_call.1} parent=87 // pred_region
          %v808 = vld [vmem:[#allocation3] sm:$0xf]
          %v809 = vld [vmem:[#allocation3 + $0x4] sm:$0xf]
          %v810 = vld [vmem:[#allocation3 + $0x8] sm:$0xf]
          %v811 = vld [vmem:[#allocation3 + $0xc] sm:$0xf]
          %v812 = vld [vmem:[#allocation6] sm:$0xf]
          %v813 = vld [vmem:[#allocation6 + $0x4] sm:$0xf]
          %v814 = vld [vmem:[#allocation6 + $0x8] sm:$0xf]
          %v815 = vld [vmem:[#allocation6 + $0xc] sm:$0xf]
          %v816 = vld [vmem:[#allocation8] sm:$0x1]
          %v818 = vlaneseq
          %v819 = vshrl.u32 %v818, 7
          %v820 = vsub.s32 0, %v819
          %v821 = vrot.slane %v816, %v820
          %v827 = vunpack.c.l.b16 %v808
          %v828 = vunpack.c.l.b16 %v809
          %v829 = vunpack.c.l.b16 %v810
          %v830 = vunpack.c.l.b16 %v811
          %v831 = vpack.c.b16 %v828, %v827
          %v832 = vpack.c.b16 %v830, %v829
          %v837 = vunpack.c.l.b16 %v812
          %v838 = vunpack.c.l.b16 %v813
          %v839 = vunpack.c.l.b16 %v814
          %v840 = vunpack.c.l.b16 %v815
          %v841 = vpack.c.b16 %v838, %v837
          %v842 = vpack.c.b16 %v840, %v839
          %vm845 = vcmask 261120
          %v847 = vsel %vm845, %v831, 0
          %v850 = vsel %vm845, %v832, 0
          %852 = vmatprep.subr.bf16.mxu0 0
          %853 = vmatpush1.bf16.msra.mxu0 0
          %854 = vmatprep.subr.bf16.mxu0 0
          %855 = vmatpush1.bf16.msra.mxu0 0
          %856 = vmatprep.subr.bf16.mxu0 0
          %857 = vmatpush1.bf16.msra.mxu0 0
          %858 = vmatprep.subr.bf16.mxu0 0
          %859 = vmatpush1.bf16.msra.mxu0 0
          %860 = vmatprep.subr.bf16.mxu0 0
          %861 = vmatpush1.bf16.msra.mxu0 0
          %862 = vmatprep.subr.bf16.mxu0 0
          %863 = vmatpush1.bf16.msra.mxu0 0
          %864 = vmatprep.subr.bf16.mxu0 0
          %865 = vmatpush1.bf16.msra.mxu0 %v842
          %866 = vmatprep.subr.bf16.mxu0 0
          %867 = vmatpush1.bf16.msra.mxu0 %v841
          %868 = vmatprep.subr.bf16.mxu0 0
          %869 = vmatpush2.bf16.msra.mxu0 0
          %870 = vmatprep.subr.bf16.mxu0 0
          %871 = vmatpush2.bf16.msra.mxu0 0
          %872 = vmatprep.subr.bf16.mxu0 0
          %873 = vmatpush2.bf16.msra.mxu0 0
          %874 = vmatprep.subr.bf16.mxu0 0
          %875 = vmatpush2.bf16.msra.mxu0 0
          %876 = vmatprep.subr.bf16.mxu0 0
          %877 = vmatpush2.bf16.msra.mxu0 0
          %878 = vmatprep.subr.bf16.mxu0 0
          %879 = vmatpush2.bf16.msra.mxu0 0
          %880 = vmatprep.subr.bf16.mxu0 0
          %881 = vmatpush2.bf16.msra.mxu0 0
          %882 = vmatprep.subr.bf16.mxu0 0
          %883 = vmatpush2.bf16.msra.mxu0 0
          %884 = vmatprep.mubr.bf16.mxu0 0
          %885 = vmatmul.mubr.bf16.gmra.mxu0 %v847
          %v886 = vpop.f32.mrf.mxu0
          %v887 = vadd.f32 %v821, %v886
          %v888 = vpop.f32.mrf.mxu0
          %v889 = vpop.f32.mrf.mxu0
          %v890 = vadd.f32 %v821, %v889
          %v891 = vpop.f32.mrf.mxu0
          %892 = vmatprep.mubr.bf16.mxu0 0
          %893 = vmatmul.mubr.bf16.gmra.mxu0 %v850
          %v894 = vpop.f32.mrf.mxu0
          %v895 = vadd.f32 %v821, %v894
          %v896 = vpop.f32.mrf.mxu0
          %v897 = vpop.f32.mrf.mxu0
          %v898 = vadd.f32 %v821, %v897
          %v899 = vpop.f32.mrf.mxu0
          %900 = vdwg.mxu0
          %v901 = vmul.f32 %v887, 0.2
          %v902 = vmul.f32 %v890, 0.2
          %v903 = vmul.f32 %v895, 0.2
          %v904 = vmul.f32 %v898, 0.2
          %v905 = vmax.f32 %v887, %v901
          %v906 = vmax.f32 %v890, %v902
          %v907 = vmax.f32 %v895, %v903
          %v908 = vmax.f32 %v898, %v904
          %v909 = vpack.c.bf16 %v906, %v905
          %v910 = vpack.c.bf16 %v908, %v907
          %v911 = vld [vmem:[#allocation9] sm:$0xff]
          %v912 = vld [vmem:[#allocation9 + $0x8] sm:$0xff]
          %v913 = vld [vmem:[#allocation9 + $0x10] sm:$0xff]
          %v914 = vld [vmem:[#allocation9 + $0x18] sm:$0xff]
          %v915 = vld [vmem:[#allocation9 + $0x20] sm:$0xff]
          %v916 = vld [vmem:[#allocation9 + $0x28] sm:$0xff]
          %v917 = vld [vmem:[#allocation9 + $0x30] sm:$0xff]
          %v918 = vld [vmem:[#allocation9 + $0x38] sm:$0xff]
          %v919 = vld [vmem:[#allocation9 + $0x40] sm:$0xff]
          %v920 = vld [vmem:[#allocation9 + $0x48] sm:$0xff]
          %v921 = vld [vmem:[#allocation9 + $0x50] sm:$0xff]
          %v922 = vld [vmem:[#allocation9 + $0x58] sm:$0xff]
          %v923 = vld [vmem:[#allocation9 + $0x60] sm:$0xff]
          %v924 = vld [vmem:[#allocation9 + $0x68] sm:$0xff]
          %v925 = vld [vmem:[#allocation9 + $0x70] sm:$0xff]
          %v926 = vld [vmem:[#allocation9 + $0x78] sm:$0xff]
          %v927 = vld [vmem:[#allocation11] sm:$0x3]
          %v929 = vlaneseq
          %v930 = vshrl.u32 %v929, 7
          %v931 = vsub.s32 0, %v930
          %v932 = vrot.slane %v927, %v931
          %v933 = vlaneseq
          %v934 = vshrl.u32 %v933, 7
          %v935 = vsub.s32 1, %v934
          %v936 = vrot.slane %v927, %v935
          %v955 = vunpack.c.l.b16 %v911
          %v956 = vunpack.c.h.b16 %v911
          %v957 = vunpack.c.l.b16 %v912
          %v958 = vunpack.c.h.b16 %v912
          %v959 = vunpack.c.l.b16 %v913
          %v960 = vunpack.c.h.b16 %v913
          %v961 = vunpack.c.l.b16 %v914
          %v962 = vunpack.c.h.b16 %v914
          %v963 = vunpack.c.l.b16 %v915
          %v964 = vunpack.c.h.b16 %v915
          %v965 = vunpack.c.l.b16 %v916
          %v966 = vunpack.c.h.b16 %v916
          %v967 = vunpack.c.l.b16 %v917
          %v968 = vunpack.c.h.b16 %v917
          %v969 = vunpack.c.l.b16 %v918
          %v970 = vunpack.c.h.b16 %v918
          %v971 = vunpack.c.l.b16 %v919
          %v972 = vunpack.c.h.b16 %v919
          %v973 = vunpack.c.l.b16 %v920
          %v974 = vunpack.c.h.b16 %v920
          %v975 = vunpack.c.l.b16 %v921
          %v976 = vunpack.c.h.b16 %v921
          %v977 = vunpack.c.l.b16 %v922
          %v978 = vunpack.c.h.b16 %v922
          %v979 = vunpack.c.l.b16 %v923
          %v980 = vunpack.c.h.b16 %v923
          %v981 = vunpack.c.l.b16 %v924
          %v982 = vunpack.c.h.b16 %v924
          %v983 = vunpack.c.l.b16 %v925
          %v984 = vunpack.c.h.b16 %v925
          %v985 = vunpack.c.l.b16 %v926
          %v986 = vunpack.c.h.b16 %v926
          %v987 = vpack.c.b16 %v957, %v955
          %v988 = vpack.c.b16 %v958, %v956
          %v989 = vpack.c.b16 %v961, %v959
          %v990 = vpack.c.b16 %v962, %v960
          %v991 = vpack.c.b16 %v965, %v963
          %v992 = vpack.c.b16 %v966, %v964
          %v993 = vpack.c.b16 %v969, %v967
          %v994 = vpack.c.b16 %v970, %v968
          %v995 = vpack.c.b16 %v973, %v971
          %v996 = vpack.c.b16 %v974, %v972
          %v997 = vpack.c.b16 %v977, %v975
          %v998 = vpack.c.b16 %v978, %v976
          %v999 = vpack.c.b16 %v981, %v979
          %v1000 = vpack.c.b16 %v982, %v980
          %v1001 = vpack.c.b16 %v985, %v983
          %v1002 = vpack.c.b16 %v986, %v984
          %1019 = vmatprep.subr.bf16.mxu0 %v1002
          %1020 = vmatpush1.bf16.msra.mxu0 %v1001
          %1021 = vmatprep.subr.bf16.mxu0 %v1000
          %1022 = vmatpush1.bf16.msra.mxu0 %v999
          %1023 = vmatprep.subr.bf16.mxu0 %v998
          %1024 = vmatpush1.bf16.msra.mxu0 %v997
          %1025 = vmatprep.subr.bf16.mxu0 %v996
          %1026 = vmatpush1.bf16.msra.mxu0 %v995
          %1027 = vmatprep.subr.bf16.mxu0 %v994
          %1028 = vmatpush1.bf16.msra.mxu0 %v993
          %1029 = vmatprep.subr.bf16.mxu0 %v992
          %1030 = vmatpush1.bf16.msra.mxu0 %v991
          %1031 = vmatprep.subr.bf16.mxu0 %v990
          %1032 = vmatpush1.bf16.msra.mxu0 %v989
          %1033 = vmatprep.subr.bf16.mxu0 %v988
          %1034 = vmatpush1.bf16.msra.mxu0 %v987
          %1035 = vmatprep.subr.bf16.mxu0 0
          %1036 = vmatpush2.bf16.msra.mxu0 0
          %1037 = vmatprep.subr.bf16.mxu0 0
          %1038 = vmatpush2.bf16.msra.mxu0 0
          %1039 = vmatprep.subr.bf16.mxu0 0
          %1040 = vmatpush2.bf16.msra.mxu0 0
          %1041 = vmatprep.subr.bf16.mxu0 0
          %1042 = vmatpush2.bf16.msra.mxu0 0
          %1043 = vmatprep.subr.bf16.mxu0 0
          %1044 = vmatpush2.bf16.msra.mxu0 0
          %1045 = vmatprep.subr.bf16.mxu0 0
          %1046 = vmatpush2.bf16.msra.mxu0 0
          %1047 = vmatprep.subr.bf16.mxu0 0
          %1048 = vmatpush2.bf16.msra.mxu0 0
          %1049 = vmatprep.subr.bf16.mxu0 0
          %1050 = vmatpush2.bf16.msra.mxu0 0
          %1051 = vmatprep.mubr.bf16.mxu0 0
          %1052 = vmatmul.mubr.bf16.gmra.mxu0 %v909
          %v1053 = vpop.f32.mrf.mxu0
          %v1054 = vadd.f32 %v932, %v1053
          %v1055 = vpop.f32.mrf.mxu0
          %v1056 = vadd.f32 %v936, %v1055
          %v1057 = vpop.f32.mrf.mxu0
          %v1058 = vadd.f32 %v932, %v1057
          %v1059 = vpop.f32.mrf.mxu0
          %v1060 = vadd.f32 %v936, %v1059
          %1061 = vmatprep.mubr.bf16.mxu0 0
          %1062 = vmatmul.mubr.bf16.gmra.mxu0 %v910
          %v1063 = vpop.f32.mrf.mxu0
          %v1064 = vadd.f32 %v932, %v1063
          %v1065 = vpop.f32.mrf.mxu0
          %v1066 = vadd.f32 %v936, %v1065
          %v1067 = vpop.f32.mrf.mxu0
          %v1068 = vadd.f32 %v932, %v1067
          %v1069 = vpop.f32.mrf.mxu0
          %v1070 = vadd.f32 %v936, %v1069
          %1071 = vdwg.mxu0
          %v1072 = vadd.f32 %v1054, %v1058
          %v1073 = vadd.f32 %v1072, %v1064
          %v1074 = vadd.f32 %v1073, %v1068
          %v1075 = vrot.slane %v1074, 4
          %v1076 = vadd.f32 %v1074, %v1075
          %v1077 = vrot.slane %v1076, 2
          %v1078 = vadd.f32 %v1076, %v1077
          %v1079 = vrot.slane %v1078, 1
          %v1080 = vadd.f32 %v1078, %v1079
          %v1081 = vadd.f32 %v1056, %v1060
          %v1082 = vadd.f32 %v1081, %v1066
          %v1083 = vadd.f32 %v1082, %v1070
          %v1084 = vrot.slane %v1083, 4
          %v1085 = vadd.f32 %v1083, %v1084
          %v1086 = vrot.slane %v1085, 2
          %v1087 = vadd.f32 %v1085, %v1086
          %v1088 = vrot.slane %v1087, 1
          %v1089 = vadd.f32 %v1087, %v1088
          %v1090 = vmul.f32 %v1080, 0.03125
          %v1091 = vmul.f32 %v1089, 0.03125
          %v1092 = vmul.f32 %v1054, %v1054
          %v1093 = vmul.f32 %v1056, %v1056
          %v1094 = vmul.f32 %v1058, %v1058
          %v1095 = vmul.f32 %v1060, %v1060
          %v1096 = vmul.f32 %v1064, %v1064
          %v1097 = vmul.f32 %v1066, %v1066
          %v1098 = vmul.f32 %v1068, %v1068
          %v1099 = vmul.f32 %v1070, %v1070
          %v1100 = vadd.f32 %v1092, %v1094
          %v1101 = vadd.f32 %v1100, %v1096
          %v1102 = vadd.f32 %v1101, %v1098
          %v1103 = vrot.slane %v1102, 4
          %v1104 = vadd.f32 %v1102, %v1103
          %v1105 = vrot.slane %v1104, 2
          %v1106 = vadd.f32 %v1104, %v1105
          %v1107 = vrot.slane %v1106, 1
          %v1108 = vadd.f32 %v1106, %v1107
          %v1109 = vadd.f32 %v1093, %v1095
          %v1110 = vadd.f32 %v1109, %v1097
          %v1111 = vadd.f32 %v1110, %v1099
          %v1112 = vrot.slane %v1111, 4
          %v1113 = vadd.f32 %v1111, %v1112
          %v1114 = vrot.slane %v1113, 2
          %v1115 = vadd.f32 %v1113, %v1114
          %v1116 = vrot.slane %v1115, 1
          %v1117 = vadd.f32 %v1115, %v1116
          %v1118 = vmul.f32 %v1108, 0.03125
          %v1119 = vmul.f32 %v1117, 0.03125
          %v1120 = vmul.f32 %v1090, %v1090
          %v1121 = vmul.f32 %v1091, %v1091
          %v1122 = vsub.f32 %v1118, %v1120
          %v1123 = vsub.f32 %v1119, %v1121
          %v1124 = vld [vmem:[#allocation12] sm:$0x3]
          %v1125 = vadd.f32 %v1122, 1e-05
          %v1126 = vadd.f32 %v1123, 1e-05
          %v1127 = vrsqrt.pop %v1125
          %v1128 = vrsqrt.pop %v1126
          %v1131 = vcombine.low %v1127, %v1128
          %v1133 = vunpack.c.l.s4 1966171168
          %v1134 = vunpack.c.0.s8 %v1133
          %v1135 = vlaneseq
          %v1136 = vshrl.u32 %v1135, 7
          %v1137 = vsub.s32 %v1134, %v1136
          %v1138 = vrot.slane %v1131, %v1137
          %v1140 = vunpack.c.l.s4 1966171168
          %v1141 = vunpack.c.0.s8 %v1140
          %v1142 = vlaneseq
          %v1143 = vshrl.u32 %v1142, 7
          %v1144 = vsub.s32 %v1141, %v1143
          %v1145 = vrot.slane %v1138, %v1144
          %v1147 = vmul.f32 %v1124, %v1145
          %v1148 = vld [vmem:[#allocation14] sm:$0x3]
          %v1150 = vlaneseq
          %v1151 = vshrl.u32 %v1150, 7
          %v1152 = vsub.s32 0, %v1151
          %v1153 = vrot.slane %v1147, %v1152
          %v1154 = vlaneseq
          %v1155 = vshrl.u32 %v1154, 7
          %v1156 = vsub.s32 1, %v1155
          %v1157 = vrot.slane %v1147, %v1156
          %v1160 = vmul.f32 %v1090, %v1153
          %v1161 = vmul.f32 %v1091, %v1157
          %v1164 = vcombine.low %v1160, %v1161
          %v1166 = vunpack.c.l.s4 1966171168
          %v1167 = vunpack.c.0.s8 %v1166
          %v1168 = vlaneseq
          %v1169 = vshrl.u32 %v1168, 7
          %v1170 = vsub.s32 %v1167, %v1169
          %v1171 = vrot.slane %v1164, %v1170
          %v1173 = vunpack.c.l.s4 1966171168
          %v1174 = vunpack.c.0.s8 %v1173
          %v1175 = vlaneseq
          %v1176 = vshrl.u32 %v1175, 7
          %v1177 = vsub.s32 %v1174, %v1176
          %v1178 = vrot.slane %v1171, %v1177
          %v1180 = vsub.f32 %v1148, %v1178
          %v1181 = vmul.f32 %v1054, %v1153
          %v1182 = vmul.f32 %v1056, %v1157
          %v1183 = vmul.f32 %v1058, %v1153
          %v1184 = vmul.f32 %v1060, %v1157
          %v1185 = vmul.f32 %v1064, %v1153
          %v1186 = vmul.f32 %v1066, %v1157
          %v1187 = vmul.f32 %v1068, %v1153
          %v1188 = vmul.f32 %v1070, %v1157
          %v1190 = vlaneseq
          %v1191 = vshrl.u32 %v1190, 7
          %v1192 = vsub.s32 0, %v1191
          %v1193 = vrot.slane %v1180, %v1192
          %v1194 = vlaneseq
          %v1195 = vshrl.u32 %v1194, 7
          %v1196 = vsub.s32 1, %v1195
          %v1197 = vrot.slane %v1180, %v1196
          %v1200 = vadd.f32 %v1181, %v1193
          %v1201 = vadd.f32 %v1182, %v1197
          %v1202 = vadd.f32 %v1183, %v1193
          %v1203 = vadd.f32 %v1184, %v1197
          %v1204 = vadd.f32 %v1185, %v1193
          %v1205 = vadd.f32 %v1186, %v1197
          %v1206 = vadd.f32 %v1187, %v1193
          %v1207 = vadd.f32 %v1188, %v1197
          %v1208 = vmul.f32 %v1200, 0.2
          %v1209 = vmul.f32 %v1201, 0.2
          %v1210 = vmul.f32 %v1202, 0.2
          %v1211 = vmul.f32 %v1203, 0.2
          %v1212 = vmul.f32 %v1204, 0.2
          %v1213 = vmul.f32 %v1205, 0.2
          %v1214 = vmul.f32 %v1206, 0.2
          %v1215 = vmul.f32 %v1207, 0.2
          %v1216 = vmax.f32 %v1200, %v1208
          %v1217 = vmax.f32 %v1201, %v1209
          %v1218 = vmax.f32 %v1202, %v1210
          %v1219 = vmax.f32 %v1203, %v1211
          %v1220 = vmax.f32 %v1204, %v1212
          %v1221 = vmax.f32 %v1205, %v1213
          %v1222 = vmax.f32 %v1206, %v1214
          %v1223 = vmax.f32 %v1207, %v1215
          %v1224 = vpack.c.bf16 %v1218, %v1216
          %v1225 = vpack.c.bf16 %v1219, %v1217
          %v1226 = vpack.c.bf16 %v1222, %v1220
          %v1227 = vpack.c.bf16 %v1223, %v1221
          %v1228 = vld [vmem:[#allocation15] sm:$0xff]
          %v1229 = vld [vmem:[#allocation15 + $0x8] sm:$0xff]
          %v1230 = vld [vmem:[#allocation15 + $0x10] sm:$0xff]
          %v1231 = vld [vmem:[#allocation15 + $0x18] sm:$0xff]
          %v1232 = vld [vmem:[#allocation15 + $0x20] sm:$0xff]
          %v1233 = vld [vmem:[#allocation15 + $0x28] sm:$0xff]
          %v1234 = vld [vmem:[#allocation15 + $0x30] sm:$0xff]
          %v1235 = vld [vmem:[#allocation15 + $0x38] sm:$0xff]
          %v1236 = vld [vmem:[#allocation15 + $0x40] sm:$0xff]
          %v1237 = vld [vmem:[#allocation15 + $0x48] sm:$0xff]
          %v1238 = vld [vmem:[#allocation15 + $0x50] sm:$0xff]
          %v1239 = vld [vmem:[#allocation15 + $0x58] sm:$0xff]
          %v1240 = vld [vmem:[#allocation15 + $0x60] sm:$0xff]
          %v1241 = vld [vmem:[#allocation15 + $0x68] sm:$0xff]
          %v1242 = vld [vmem:[#allocation15 + $0x70] sm:$0xff]
          %v1243 = vld [vmem:[#allocation15 + $0x78] sm:$0xff]
          %v1244 = vld [vmem:[#allocation15 + $0x80] sm:$0xff]
          %v1245 = vld [vmem:[#allocation15 + $0x88] sm:$0xff]
          %v1246 = vld [vmem:[#allocation15 + $0x90] sm:$0xff]
          %v1247 = vld [vmem:[#allocation15 + $0x98] sm:$0xff]
          %v1248 = vld [vmem:[#allocation15 + $0xa0] sm:$0xff]
          %v1249 = vld [vmem:[#allocation15 + $0xa8] sm:$0xff]
          %v1250 = vld [vmem:[#allocation15 + $0xb0] sm:$0xff]
          %v1251 = vld [vmem:[#allocation15 + $0xb8] sm:$0xff]
          %v1252 = vld [vmem:[#allocation15 + $0xc0] sm:$0xff]
          %v1253 = vld [vmem:[#allocation15 + $0xc8] sm:$0xff]
          %v1254 = vld [vmem:[#allocation15 + $0xd0] sm:$0xff]
          %v1255 = vld [vmem:[#allocation15 + $0xd8] sm:$0xff]
          %v1256 = vld [vmem:[#allocation15 + $0xe0] sm:$0xff]
          %v1257 = vld [vmem:[#allocation15 + $0xe8] sm:$0xff]
          %v1258 = vld [vmem:[#allocation15 + $0xf0] sm:$0xff]
          %v1259 = vld [vmem:[#allocation15 + $0xf8] sm:$0xff]
          %v1260 = vld [vmem:[#allocation15 + $0x100] sm:$0xff]
          %v1261 = vld [vmem:[#allocation15 + $0x108] sm:$0xff]
          %v1262 = vld [vmem:[#allocation15 + $0x110] sm:$0xff]
          %v1263 = vld [vmem:[#allocation15 + $0x118] sm:$0xff]
          %v1264 = vld [vmem:[#allocation15 + $0x120] sm:$0xff]
          %v1265 = vld [vmem:[#allocation15 + $0x128] sm:$0xff]
          %v1266 = vld [vmem:[#allocation15 + $0x130] sm:$0xff]
          %v1267 = vld [vmem:[#allocation15 + $0x138] sm:$0xff]
          %v1268 = vld [vmem:[#allocation15 + $0x140] sm:$0xff]
          %v1269 = vld [vmem:[#allocation15 + $0x148] sm:$0xff]
          %v1270 = vld [vmem:[#allocation15 + $0x150] sm:$0xff]
          %v1271 = vld [vmem:[#allocation15 + $0x158] sm:$0xff]
          %v1272 = vld [vmem:[#allocation15 + $0x160] sm:$0xff]
          %v1273 = vld [vmem:[#allocation15 + $0x168] sm:$0xff]
          %v1274 = vld [vmem:[#allocation15 + $0x170] sm:$0xff]
          %v1275 = vld [vmem:[#allocation15 + $0x178] sm:$0xff]
          %v1276 = vld [vmem:[#allocation15 + $0x180] sm:$0xff]
          %v1277 = vld [vmem:[#allocation15 + $0x188] sm:$0xff]
          %v1278 = vld [vmem:[#allocation15 + $0x190] sm:$0xff]
          %v1279 = vld [vmem:[#allocation15 + $0x198] sm:$0xff]
          %v1280 = vld [vmem:[#allocation15 + $0x1a0] sm:$0xff]
          %v1281 = vld [vmem:[#allocation15 + $0x1a8] sm:$0xff]
          %v1282 = vld [vmem:[#allocation15 + $0x1b0] sm:$0xff]
          %v1283 = vld [vmem:[#allocation15 + $0x1b8] sm:$0xff]
          %v1284 = vld [vmem:[#allocation15 + $0x1c0] sm:$0xff]
          %v1285 = vld [vmem:[#allocation15 + $0x1c8] sm:$0xff]
          %v1286 = vld [vmem:[#allocation15 + $0x1d0] sm:$0xff]
          %v1287 = vld [vmem:[#allocation15 + $0x1d8] sm:$0xff]
          %v1288 = vld [vmem:[#allocation15 + $0x1e0] sm:$0xff]
          %v1289 = vld [vmem:[#allocation15 + $0x1e8] sm:$0xff]
          %v1290 = vld [vmem:[#allocation15 + $0x1f0] sm:$0xff]
          %v1291 = vld [vmem:[#allocation15 + $0x1f8] sm:$0xff]
          %v1292 = vld [vmem:[#allocation17] sm:$0xf]
          %v1294 = vlaneseq
          %v1295 = vshrl.u32 %v1294, 7
          %v1296 = vsub.s32 0, %v1295
          %v1297 = vrot.slane %v1292, %v1296
          %v1298 = vlaneseq
          %v1299 = vshrl.u32 %v1298, 7
          %v1300 = vsub.s32 1, %v1299
          %v1301 = vrot.slane %v1292, %v1300
          %v1302 = vlaneseq
          %v1303 = vshrl.u32 %v1302, 7
          %v1304 = vsub.s32 2, %v1303
          %v1305 = vrot.slane %v1292, %v1304
          %v1306 = vlaneseq
          %v1307 = vshrl.u32 %v1306, 7
          %v1308 = vsub.s32 3, %v1307
          %v1309 = vrot.slane %v1292, %v1308
          %v1378 = vunpack.c.l.b16 %v1228
          %v1379 = vunpack.c.h.b16 %v1228
          %v1380 = vunpack.c.l.b16 %v1229
          %v1381 = vunpack.c.h.b16 %v1229
          %v1382 = vunpack.c.l.b16 %v1230
          %v1383 = vunpack.c.h.b16 %v1230
          %v1384 = vunpack.c.l.b16 %v1231
          %v1385 = vunpack.c.h.b16 %v1231
          %v1386 = vunpack.c.l.b16 %v1232
          %v1387 = vunpack.c.h.b16 %v1232
          %v1388 = vunpack.c.l.b16 %v1233
          %v1389 = vunpack.c.h.b16 %v1233
          %v1390 = vunpack.c.l.b16 %v1234
          %v1391 = vunpack.c.h.b16 %v1234
          %v1392 = vunpack.c.l.b16 %v1235
          %v1393 = vunpack.c.h.b16 %v1235
          %v1394 = vunpack.c.l.b16 %v1236
          %v1395 = vunpack.c.h.b16 %v1236
          %v1396 = vunpack.c.l.b16 %v1237
          %v1397 = vunpack.c.h.b16 %v1237
          %v1398 = vunpack.c.l.b16 %v1238
          %v1399 = vunpack.c.h.b16 %v1238
          %v1400 = vunpack.c.l.b16 %v1239
          %v1401 = vunpack.c.h.b16 %v1239
          %v1402 = vunpack.c.l.b16 %v1240
          %v1403 = vunpack.c.h.b16 %v1240
          %v1404 = vunpack.c.l.b16 %v1241
          %v1405 = vunpack.c.h.b16 %v1241
          %v1406 = vunpack.c.l.b16 %v1242
          %v1407 = vunpack.c.h.b16 %v1242
          %v1408 = vunpack.c.l.b16 %v1243
          %v1409 = vunpack.c.h.b16 %v1243
          %v1410 = vunpack.c.l.b16 %v1244
          %v1411 = vunpack.c.h.b16 %v1244
          %v1412 = vunpack.c.l.b16 %v1245
          %v1413 = vunpack.c.h.b16 %v1245
          %v1414 = vunpack.c.l.b16 %v1246
          %v1415 = vunpack.c.h.b16 %v1246
          %v1416 = vunpack.c.l.b16 %v1247
          %v1417 = vunpack.c.h.b16 %v1247
          %v1418 = vunpack.c.l.b16 %v1248
          %v1419 = vunpack.c.h.b16 %v1248
          %v1420 = vunpack.c.l.b16 %v1249
          %v1421 = vunpack.c.h.b16 %v1249
          %v1422 = vunpack.c.l.b16 %v1250
          %v1423 = vunpack.c.h.b16 %v1250
          %v1424 = vunpack.c.l.b16 %v1251
          %v1425 = vunpack.c.h.b16 %v1251
          %v1426 = vunpack.c.l.b16 %v1252
          %v1427 = vunpack.c.h.b16 %v1252
          %v1428 = vunpack.c.l.b16 %v1253
          %v1429 = vunpack.c.h.b16 %v1253
          %v1430 = vunpack.c.l.b16 %v1254
          %v1431 = vunpack.c.h.b16 %v1254
          %v1432 = vunpack.c.l.b16 %v1255
          %v1433 = vunpack.c.h.b16 %v1255
          %v1434 = vunpack.c.l.b16 %v1256
          %v1435 = vunpack.c.h.b16 %v1256
          %v1436 = vunpack.c.l.b16 %v1257
          %v1437 = vunpack.c.h.b16 %v1257
          %v1438 = vunpack.c.l.b16 %v1258
          %v1439 = vunpack.c.h.b16 %v1258
          %v1440 = vunpack.c.l.b16 %v1259
          %v1441 = vunpack.c.h.b16 %v1259
          %v1442 = vunpack.c.l.b16 %v1260
          %v1443 = vunpack.c.h.b16 %v1260
          %v1444 = vunpack.c.l.b16 %v1261
          %v1445 = vunpack.c.h.b16 %v1261
          %v1446 = vunpack.c.l.b16 %v1262
          %v1447 = vunpack.c.h.b16 %v1262
          %v1448 = vunpack.c.l.b16 %v1263
          %v1449 = vunpack.c.h.b16 %v1263
          %v1450 = vunpack.c.l.b16 %v1264
          %v1451 = vunpack.c.h.b16 %v1264
          %v1452 = vunpack.c.l.b16 %v1265
          %v1453 = vunpack.c.h.b16 %v1265
          %v1454 = vunpack.c.l.b16 %v1266
          %v1455 = vunpack.c.h.b16 %v1266
          %v1456 = vunpack.c.l.b16 %v1267
          %v1457 = vunpack.c.h.b16 %v1267
          %v1458 = vunpack.c.l.b16 %v1268
          %v1459 = vunpack.c.h.b16 %v1268
          %v1460 = vunpack.c.l.b16 %v1269
          %v1461 = vunpack.c.h.b16 %v1269
          %v1462 = vunpack.c.l.b16 %v1270
          %v1463 = vunpack.c.h.b16 %v1270
          %v1464 = vunpack.c.l.b16 %v1271
          %v1465 = vunpack.c.h.b16 %v1271
          %v1466 = vunpack.c.l.b16 %v1272
          %v1467 = vunpack.c.h.b16 %v1272
          %v1468 = vunpack.c.l.b16 %v1273
          %v1469 = vunpack.c.h.b16 %v1273
          %v1470 = vunpack.c.l.b16 %v1274
          %v1471 = vunpack.c.h.b16 %v1274
          %v1472 = vunpack.c.l.b16 %v1275
          %v1473 = vunpack.c.h.b16 %v1275
          %v1474 = vunpack.c.l.b16 %v1276
          %v1475 = vunpack.c.h.b16 %v1276
          %v1476 = vunpack.c.l.b16 %v1277
          %v1477 = vunpack.c.h.b16 %v1277
          %v1478 = vunpack.c.l.b16 %v1278
          %v1479 = vunpack.c.h.b16 %v1278
          %v1480 = vunpack.c.l.b16 %v1279
          %v1481 = vunpack.c.h.b16 %v1279
          %v1482 = vunpack.c.l.b16 %v1280
          %v1483 = vunpack.c.h.b16 %v1280
          %v1484 = vunpack.c.l.b16 %v1281
          %v1485 = vunpack.c.h.b16 %v1281
          %v1486 = vunpack.c.l.b16 %v1282
          %v1487 = vunpack.c.h.b16 %v1282
          %v1488 = vunpack.c.l.b16 %v1283
          %v1489 = vunpack.c.h.b16 %v1283
          %v1490 = vunpack.c.l.b16 %v1284
          %v1491 = vunpack.c.h.b16 %v1284
          %v1492 = vunpack.c.l.b16 %v1285
          %v1493 = vunpack.c.h.b16 %v1285
          %v1494 = vunpack.c.l.b16 %v1286
          %v1495 = vunpack.c.h.b16 %v1286
          %v1496 = vunpack.c.l.b16 %v1287
          %v1497 = vunpack.c.h.b16 %v1287
          %v1498 = vunpack.c.l.b16 %v1288
          %v1499 = vunpack.c.h.b16 %v1288
          %v1500 = vunpack.c.l.b16 %v1289
          %v1501 = vunpack.c.h.b16 %v1289
          %v1502 = vunpack.c.l.b16 %v1290
          %v1503 = vunpack.c.h.b16 %v1290
          %v1504 = vunpack.c.l.b16 %v1291
          %v1505 = vunpack.c.h.b16 %v1291
          %v1506 = vpack.c.b16 %v1382, %v1378
          %v1507 = vpack.c.b16 %v1383, %v1379
          %v1508 = vpack.c.b16 %v1384, %v1380
          %v1509 = vpack.c.b16 %v1385, %v1381
          %v1510 = vpack.c.b16 %v1390, %v1386
          %v1511 = vpack.c.b16 %v1391, %v1387
          %v1512 = vpack.c.b16 %v1392, %v1388
          %v1513 = vpack.c.b16 %v1393, %v1389
          %v1514 = vpack.c.b16 %v1398, %v1394
          %v1515 = vpack.c.b16 %v1399, %v1395
          %v1516 = vpack.c.b16 %v1400, %v1396
          %v1517 = vpack.c.b16 %v1401, %v1397
          %v1518 = vpack.c.b16 %v1406, %v1402
          %v1519 = vpack.c.b16 %v1407, %v1403
          %v1520 = vpack.c.b16 %v1408, %v1404
          %v1521 = vpack.c.b16 %v1409, %v1405
          %v1522 = vpack.c.b16 %v1414, %v1410
          %v1523 = vpack.c.b16 %v1415, %v1411
          %v1524 = vpack.c.b16 %v1416, %v1412
          %v1525 = vpack.c.b16 %v1417, %v1413
          %v1526 = vpack.c.b16 %v1422, %v1418
          %v1527 = vpack.c.b16 %v1423, %v1419
          %v1528 = vpack.c.b16 %v1424, %v1420
          %v1529 = vpack.c.b16 %v1425, %v1421
          %v1530 = vpack.c.b16 %v1430, %v1426
          %v1531 = vpack.c.b16 %v1431, %v1427
          %v1532 = vpack.c.b16 %v1432, %v1428
          %v1533 = vpack.c.b16 %v1433, %v1429
          %v1534 = vpack.c.b16 %v1438, %v1434
          %v1535 = vpack.c.b16 %v1439, %v1435
          %v1536 = vpack.c.b16 %v1440, %v1436
          %v1537 = vpack.c.b16 %v1441, %v1437
          %v1538 = vpack.c.b16 %v1446, %v1442
          %v1539 = vpack.c.b16 %v1447, %v1443
          %v1540 = vpack.c.b16 %v1448, %v1444
          %v1541 = vpack.c.b16 %v1449, %v1445
          %v1542 = vpack.c.b16 %v1454, %v1450
          %v1543 = vpack.c.b16 %v1455, %v1451
          %v1544 = vpack.c.b16 %v1456, %v1452
          %v1545 = vpack.c.b16 %v1457, %v1453
          %v1546 = vpack.c.b16 %v1462, %v1458
          %v1547 = vpack.c.b16 %v1463, %v1459
          %v1548 = vpack.c.b16 %v1464, %v1460
          %v1549 = vpack.c.b16 %v1465, %v1461
          %v1550 = vpack.c.b16 %v1470, %v1466
          %v1551 = vpack.c.b16 %v1471, %v1467
          %v1552 = vpack.c.b16 %v1472, %v1468
          %v1553 = vpack.c.b16 %v1473, %v1469
          %v1554 = vpack.c.b16 %v1478, %v1474
          %v1555 = vpack.c.b16 %v1479, %v1475
          %v1556 = vpack.c.b16 %v1480, %v1476
          %v1557 = vpack.c.b16 %v1481, %v1477
          %v1558 = vpack.c.b16 %v1486, %v1482
          %v1559 = vpack.c.b16 %v1487, %v1483
          %v1560 = vpack.c.b16 %v1488, %v1484
          %v1561 = vpack.c.b16 %v1489, %v1485
          %v1562 = vpack.c.b16 %v1494, %v1490
          %v1563 = vpack.c.b16 %v1495, %v1491
          %v1564 = vpack.c.b16 %v1496, %v1492
          %v1565 = vpack.c.b16 %v1497, %v1493
          %v1566 = vpack.c.b16 %v1502, %v1498
          %v1567 = vpack.c.b16 %v1503, %v1499
          %v1568 = vpack.c.b16 %v1504, %v1500
          %v1569 = vpack.c.b16 %v1505, %v1501
          %1634 = vmatprep.subr.bf16.mxu0 %v1535
          %1635 = vmatpush1.bf16.msra.mxu0 %v1534
          %1636 = vmatprep.subr.bf16.mxu0 %v1531
          %1637 = vmatpush1.bf16.msra.mxu0 %v1530
          %1638 = vmatprep.subr.bf16.mxu0 %v1527
          %1639 = vmatpush1.bf16.msra.mxu0 %v1526
          %1640 = vmatprep.subr.bf16.mxu0 %v1523
          %1641 = vmatpush1.bf16.msra.mxu0 %v1522
          %1642 = vmatprep.subr.bf16.mxu0 %v1519
          %1643 = vmatpush1.bf16.msra.mxu0 %v1518
          %1644 = vmatprep.subr.bf16.mxu0 %v1515
          %1645 = vmatpush1.bf16.msra.mxu0 %v1514
          %1646 = vmatprep.subr.bf16.mxu0 %v1511
          %1647 = vmatpush1.bf16.msra.mxu0 %v1510
          %1648 = vmatprep.subr.bf16.mxu0 %v1507
          %1649 = vmatpush1.bf16.msra.mxu0 %v1506
          %1650 = vmatprep.subr.bf16.mxu0 %v1567
          %1651 = vmatpush2.bf16.msra.mxu0 %v1566
          %1652 = vmatprep.subr.bf16.mxu0 %v1563
          %1653 = vmatpush2.bf16.msra.mxu0 %v1562
          %1654 = vmatprep.subr.bf16.mxu0 %v1559
          %1655 = vmatpush2.bf16.msra.mxu0 %v1558
          %1656 = vmatprep.subr.bf16.mxu0 %v1555
          %1657 = vmatpush2.bf16.msra.mxu0 %v1554
          %1658 = vmatprep.subr.bf16.mxu0 %v1551
          %1659 = vmatpush2.bf16.msra.mxu0 %v1550
          %1660 = vmatprep.subr.bf16.mxu0 %v1547
          %1661 = vmatpush2.bf16.msra.mxu0 %v1546
          %1662 = vmatprep.subr.bf16.mxu0 %v1543
          %1663 = vmatpush2.bf16.msra.mxu0 %v1542
          %1664 = vmatprep.subr.bf16.mxu0 %v1539
          %1665 = vmatpush2.bf16.msra.mxu0 %v1538
          %1666 = vmatprep.mubr.bf16.mxu0 %v1225
          %1667 = vmatmul.mubr.bf16.gmra.mxu0 %v1224
          %v1668 = vpop.f32.mrf.mxu0
          %v1669 = vadd.f32 %v1297, %v1668
          %v1670 = vpop.f32.mrf.mxu0
          %v1671 = vadd.f32 %v1301, %v1670
          %v1672 = vpop.f32.mrf.mxu0
          %v1673 = vadd.f32 %v1297, %v1672
          %v1674 = vpop.f32.mrf.mxu0
          %v1675 = vadd.f32 %v1301, %v1674
          %1676 = vmatprep.mubr.bf16.mxu0 %v1227
          %1677 = vmatmul.mubr.bf16.gmra.mxu0 %v1226
          %v1678 = vpop.f32.mrf.mxu0
          %v1679 = vadd.f32 %v1297, %v1678
          %v1680 = vpop.f32.mrf.mxu0
          %v1681 = vadd.f32 %v1301, %v1680
          %v1682 = vpop.f32.mrf.mxu0
          %v1683 = vadd.f32 %v1297, %v1682
          %v1684 = vpop.f32.mrf.mxu0
          %v1685 = vadd.f32 %v1301, %v1684
          %1686 = vdwg.mxu0
          %1687 = vmatprep.subr.bf16.mxu0 %v1537
          %1688 = vmatpush1.bf16.msra.mxu0 %v1536
          %1689 = vmatprep.subr.bf16.mxu0 %v1533
          %1690 = vmatpush1.bf16.msra.mxu0 %v1532
          %1691 = vmatprep.subr.bf16.mxu0 %v1529
          %1692 = vmatpush1.bf16.msra.mxu0 %v1528
          %1693 = vmatprep.subr.bf16.mxu0 %v1525
          %1694 = vmatpush1.bf16.msra.mxu0 %v1524
          %1695 = vmatprep.subr.bf16.mxu0 %v1521
          %1696 = vmatpush1.bf16.msra.mxu0 %v1520
          %1697 = vmatprep.subr.bf16.mxu0 %v1517
          %1698 = vmatpush1.bf16.msra.mxu0 %v1516
          %1699 = vmatprep.subr.bf16.mxu0 %v1513
          %1700 = vmatpush1.bf16.msra.mxu0 %v1512
          %1701 = vmatprep.subr.bf16.mxu0 %v1509
          %1702 = vmatpush1.bf16.msra.mxu0 %v1508
          %1703 = vmatprep.subr.bf16.mxu0 %v1569
          %1704 = vmatpush2.bf16.msra.mxu0 %v1568
          %1705 = vmatprep.subr.bf16.mxu0 %v1565
          %1706 = vmatpush2.bf16.msra.mxu0 %v1564
          %1707 = vmatprep.subr.bf16.mxu0 %v1561
          %1708 = vmatpush2.bf16.msra.mxu0 %v1560
          %1709 = vmatprep.subr.bf16.mxu0 %v1557
          %1710 = vmatpush2.bf16.msra.mxu0 %v1556
          %1711 = vmatprep.subr.bf16.mxu0 %v1553
          %1712 = vmatpush2.bf16.msra.mxu0 %v1552
          %1713 = vmatprep.subr.bf16.mxu0 %v1549
          %1714 = vmatpush2.bf16.msra.mxu0 %v1548
          %1715 = vmatprep.subr.bf16.mxu0 %v1545
          %1716 = vmatpush2.bf16.msra.mxu0 %v1544
          %1717 = vmatprep.subr.bf16.mxu0 %v1541
          %1718 = vmatpush2.bf16.msra.mxu0 %v1540
          %1719 = vmatprep.mubr.bf16.mxu0 %v1225
          %1720 = vmatmul.mubr.bf16.gmra.mxu0 %v1224
          %v1721 = vpop.f32.mrf.mxu0
          %v1722 = vadd.f32 %v1305, %v1721
          %v1723 = vpop.f32.mrf.mxu0
          %v1724 = vadd.f32 %v1309, %v1723
          %v1725 = vpop.f32.mrf.mxu0
          %v1726 = vadd.f32 %v1305, %v1725
          %v1727 = vpop.f32.mrf.mxu0
          %v1728 = vadd.f32 %v1309, %v1727
          %1729 = vmatprep.mubr.bf16.mxu0 %v1227
          %1730 = vmatmul.mubr.bf16.gmra.mxu0 %v1226
          %v1731 = vpop.f32.mrf.mxu0
          %v1732 = vadd.f32 %v1305, %v1731
          %v1733 = vpop.f32.mrf.mxu0
          %v1734 = vadd.f32 %v1309, %v1733
          %v1735 = vpop.f32.mrf.mxu0
          %v1736 = vadd.f32 %v1305, %v1735
          %v1737 = vpop.f32.mrf.mxu0
          %v1738 = vadd.f32 %v1309, %v1737
          %1739 = vdwg.mxu0
          %v1740 = vadd.f32 %v1669, %v1673
          %v1741 = vadd.f32 %v1740, %v1679
          %v1742 = vadd.f32 %v1741, %v1683
          %v1743 = vrot.slane %v1742, 4
          %v1744 = vadd.f32 %v1742, %v1743
          %v1745 = vrot.slane %v1744, 2
          %v1746 = vadd.f32 %v1744, %v1745
          %v1747 = vrot.slane %v1746, 1
          %v1748 = vadd.f32 %v1746, %v1747
          %v1749 = vadd.f32 %v1671, %v1675
          %v1750 = vadd.f32 %v1749, %v1681
          %v1751 = vadd.f32 %v1750, %v1685
          %v1752 = vrot.slane %v1751, 4
          %v1753 = vadd.f32 %v1751, %v1752
          %v1754 = vrot.slane %v1753, 2
          %v1755 = vadd.f32 %v1753, %v1754
          %v1756 = vrot.slane %v1755, 1
          %v1757 = vadd.f32 %v1755, %v1756
          %v1758 = vadd.f32 %v1722, %v1726
          %v1759 = vadd.f32 %v1758, %v1732
          %v1760 = vadd.f32 %v1759, %v1736
          %v1761 = vrot.slane %v1760, 4
          %v1762 = vadd.f32 %v1760, %v1761
          %v1763 = vrot.slane %v1762, 2
          %v1764 = vadd.f32 %v1762, %v1763
          %v1765 = vrot.slane %v1764, 1
          %v1766 = vadd.f32 %v1764, %v1765
          %v1767 = vadd.f32 %v1724, %v1728
          %v1768 = vadd.f32 %v1767, %v1734
          %v1769 = vadd.f32 %v1768, %v1738
          %v1770 = vrot.slane %v1769, 4
          %v1771 = vadd.f32 %v1769, %v1770
          %v1772 = vrot.slane %v1771, 2
          %v1773 = vadd.f32 %v1771, %v1772
          %v1774 = vrot.slane %v1773, 1
          %v1775 = vadd.f32 %v1773, %v1774
          %v1776 = vmul.f32 %v1748, 0.03125
          %v1777 = vmul.f32 %v1757, 0.03125
          %v1778 = vmul.f32 %v1766, 0.03125
          %v1779 = vmul.f32 %v1775, 0.03125
          %v1780 = vmul.f32 %v1669, %v1669
          %v1781 = vmul.f32 %v1671, %v1671
          %v1782 = vmul.f32 %v1722, %v1722
          %v1783 = vmul.f32 %v1724, %v1724
          %v1784 = vmul.f32 %v1673, %v1673
          %v1785 = vmul.f32 %v1675, %v1675
          %v1786 = vmul.f32 %v1726, %v1726
          %v1787 = vmul.f32 %v1728, %v1728
          %v1788 = vmul.f32 %v1679, %v1679
          %v1789 = vmul.f32 %v1681, %v1681
          %v1790 = vmul.f32 %v1732, %v1732
          %v1791 = vmul.f32 %v1734, %v1734
          %v1792 = vmul.f32 %v1683, %v1683
          %v1793 = vmul.f32 %v1685, %v1685
          %v1794 = vmul.f32 %v1736, %v1736
          %v1795 = vmul.f32 %v1738, %v1738
          %v1796 = vadd.f32 %v1780, %v1784
          %v1797 = vadd.f32 %v1796, %v1788
          %v1798 = vadd.f32 %v1797, %v1792
          %v1799 = vrot.slane %v1798, 4
          %v1800 = vadd.f32 %v1798, %v1799
          %v1801 = vrot.slane %v1800, 2
          %v1802 = vadd.f32 %v1800, %v1801
          %v1803 = vrot.slane %v1802, 1
          %v1804 = vadd.f32 %v1802, %v1803
          %v1805 = vadd.f32 %v1781, %v1785
          %v1806 = vadd.f32 %v1805, %v1789
          %v1807 = vadd.f32 %v1806, %v1793
          %v1808 = vrot.slane %v1807, 4
          %v1809 = vadd.f32 %v1807, %v1808
          %v1810 = vrot.slane %v1809, 2
          %v1811 = vadd.f32 %v1809, %v1810
          %v1812 = vrot.slane %v1811, 1
          %v1813 = vadd.f32 %v1811, %v1812
          %v1814 = vadd.f32 %v1782, %v1786
          %v1815 = vadd.f32 %v1814, %v1790
          %v1816 = vadd.f32 %v1815, %v1794
          %v1817 = vrot.slane %v1816, 4
          %v1818 = vadd.f32 %v1816, %v1817
          %v1819 = vrot.slane %v1818, 2
          %v1820 = vadd.f32 %v1818, %v1819
          %v1821 = vrot.slane %v1820, 1
          %v1822 = vadd.f32 %v1820, %v1821
          %v1823 = vadd.f32 %v1783, %v1787
          %v1824 = vadd.f32 %v1823, %v1791
          %v1825 = vadd.f32 %v1824, %v1795
          %v1826 = vrot.slane %v1825, 4
          %v1827 = vadd.f32 %v1825, %v1826
          %v1828 = vrot.slane %v1827, 2
          %v1829 = vadd.f32 %v1827, %v1828
          %v1830 = vrot.slane %v1829, 1
          %v1831 = vadd.f32 %v1829, %v1830
          %v1832 = vmul.f32 %v1804, 0.03125
          %v1833 = vmul.f32 %v1813, 0.03125
          %v1834 = vmul.f32 %v1822, 0.03125
          %v1835 = vmul.f32 %v1831, 0.03125
          %v1836 = vmul.f32 %v1776, %v1776
          %v1837 = vmul.f32 %v1777, %v1777
          %v1838 = vmul.f32 %v1778, %v1778
          %v1839 = vmul.f32 %v1779, %v1779
          %v1840 = vsub.f32 %v1832, %v1836
          %v1841 = vsub.f32 %v1833, %v1837
          %v1842 = vsub.f32 %v1834, %v1838
          %v1843 = vsub.f32 %v1835, %v1839
          %v1844 = vld [vmem:[#allocation18] sm:$0xf]
          %v1845 = vadd.f32 %v1840, 1e-05
          %v1846 = vadd.f32 %v1841, 1e-05
          %v1847 = vadd.f32 %v1842, 1e-05
          %v1848 = vadd.f32 %v1843, 1e-05
          %v1849 = vrsqrt.pop %v1845
          %v1850 = vrsqrt.pop %v1846
          %v1851 = vrsqrt.pop %v1847
          %v1852 = vrsqrt.pop %v1848
          %v1857 = vcombine.low %v1849, %v1850
          %v1858 = vcombine.low %v1851, %v1852
          %v1860 = vunpack.c.l.s4 1966171168
          %v1861 = vunpack.c.0.s8 %v1860
          %v1862 = vlaneseq
          %v1863 = vshrl.u32 %v1862, 7
          %v1864 = vsub.s32 %v1861, %v1863
          %v1865 = vrot.slane %v1857, %v1864
          %v1867 = vunpack.c.l.s4 1966171168
          %v1868 = vunpack.c.0.s8 %v1867
          %v1869 = vlaneseq
          %v1870 = vshrl.u32 %v1869, 7
          %v1871 = vsub.s32 %v1868, %v1870
          %v1872 = vrot.slane %v1858, %v1871
          %v1873 = vcombine.low %v1865, %v1872
          %v1875 = vunpack.c.l.s4 1966171168
          %v1876 = vunpack.c.0.s8 %v1875
          %v1877 = vlaneseq
          %v1878 = vshrl.u32 %v1877, 7
          %v1879 = vsub.s32 %v1876, %v1878
          %v1880 = vrot.slane %v1873, %v1879
          %v1882 = vmul.f32 %v1844, %v1880
          %v1883 = vld [vmem:[#allocation20] sm:$0xf]
          %v1885 = vlaneseq
          %v1886 = vshrl.u32 %v1885, 7
          %v1887 = vsub.s32 0, %v1886
          %v1888 = vrot.slane %v1882, %v1887
          %v1889 = vlaneseq
          %v1890 = vshrl.u32 %v1889, 7
          %v1891 = vsub.s32 1, %v1890
          %v1892 = vrot.slane %v1882, %v1891
          %v1893 = vlaneseq
          %v1894 = vshrl.u32 %v1893, 7
          %v1895 = vsub.s32 2, %v1894
          %v1896 = vrot.slane %v1882, %v1895
          %v1897 = vlaneseq
          %v1898 = vshrl.u32 %v1897, 7
          %v1899 = vsub.s32 3, %v1898
          %v1900 = vrot.slane %v1882, %v1899
          %v1905 = vmul.f32 %v1776, %v1888
          %v1906 = vmul.f32 %v1777, %v1892
          %v1907 = vmul.f32 %v1778, %v1896
          %v1908 = vmul.f32 %v1779, %v1900
          %v1913 = vcombine.low %v1905, %v1906
          %v1914 = vcombine.low %v1907, %v1908
          %v1916 = vunpack.c.l.s4 1966171168
          %v1917 = vunpack.c.0.s8 %v1916
          %v1918 = vlaneseq
          %v1919 = vshrl.u32 %v1918, 7
          %v1920 = vsub.s32 %v1917, %v1919
          %v1921 = vrot.slane %v1913, %v1920
          %v1923 = vunpack.c.l.s4 1966171168
          %v1924 = vunpack.c.0.s8 %v1923
          %v1925 = vlaneseq
          %v1926 = vshrl.u32 %v1925, 7
          %v1927 = vsub.s32 %v1924, %v1926
          %v1928 = vrot.slane %v1914, %v1927
          %v1929 = vcombine.low %v1921, %v1928
          %v1931 = vunpack.c.l.s4 1966171168
          %v1932 = vunpack.c.0.s8 %v1931
          %v1933 = vlaneseq
          %v1934 = vshrl.u32 %v1933, 7
          %v1935 = vsub.s32 %v1932, %v1934
          %v1936 = vrot.slane %v1929, %v1935
          %v1938 = vsub.f32 %v1883, %v1936
          %v1939 = vmul.f32 %v1669, %v1888
          %v1940 = vmul.f32 %v1671, %v1892
          %v1941 = vmul.f32 %v1722, %v1896
          %v1942 = vmul.f32 %v1724, %v1900
          %v1943 = vmul.f32 %v1673, %v1888
          %v1944 = vmul.f32 %v1675, %v1892
          %v1945 = vmul.f32 %v1726, %v1896
          %v1946 = vmul.f32 %v1728, %v1900
          %v1947 = vmul.f32 %v1679, %v1888
          %v1948 = vmul.f32 %v1681, %v1892
          %v1949 = vmul.f32 %v1732, %v1896
          %v1950 = vmul.f32 %v1734, %v1900
          %v1951 = vmul.f32 %v1683, %v1888
          %v1952 = vmul.f32 %v1685, %v1892
          %v1953 = vmul.f32 %v1736, %v1896
          %v1954 = vmul.f32 %v1738, %v1900
          %v1956 = vlaneseq
          %v1957 = vshrl.u32 %v1956, 7
          %v1958 = vsub.s32 0, %v1957
          %v1959 = vrot.slane %v1938, %v1958
          %v1960 = vlaneseq
          %v1961 = vshrl.u32 %v1960, 7
          %v1962 = vsub.s32 1, %v1961
          %v1963 = vrot.slane %v1938, %v1962
          %v1964 = vlaneseq
          %v1965 = vshrl.u32 %v1964, 7
          %v1966 = vsub.s32 2, %v1965
          %v1967 = vrot.slane %v1938, %v1966
          %v1968 = vlaneseq
          %v1969 = vshrl.u32 %v1968, 7
          %v1970 = vsub.s32 3, %v1969
          %v1971 = vrot.slane %v1938, %v1970
          %v1976 = vadd.f32 %v1939, %v1959
          %v1977 = vadd.f32 %v1940, %v1963
          %v1978 = vadd.f32 %v1941, %v1967
          %v1979 = vadd.f32 %v1942, %v1971
          %v1980 = vadd.f32 %v1943, %v1959
          %v1981 = vadd.f32 %v1944, %v1963
          %v1982 = vadd.f32 %v1945, %v1967
          %v1983 = vadd.f32 %v1946, %v1971
          %v1984 = vadd.f32 %v1947, %v1959
          %v1985 = vadd.f32 %v1948, %v1963
          %v1986 = vadd.f32 %v1949, %v1967
          %v1987 = vadd.f32 %v1950, %v1971
          %v1988 = vadd.f32 %v1951, %v1959
          %v1989 = vadd.f32 %v1952, %v1963
          %v1990 = vadd.f32 %v1953, %v1967
          %v1991 = vadd.f32 %v1954, %v1971
          %v1992 = vmul.f32 %v1976, 0.2
          %v1993 = vmul.f32 %v1977, 0.2
          %v1994 = vmul.f32 %v1978, 0.2
          %v1995 = vmul.f32 %v1979, 0.2
          %v1996 = vmul.f32 %v1980, 0.2
          %v1997 = vmul.f32 %v1981, 0.2
          %v1998 = vmul.f32 %v1982, 0.2
          %v1999 = vmul.f32 %v1983, 0.2
          %v2000 = vmul.f32 %v1984, 0.2
          %v2001 = vmul.f32 %v1985, 0.2
          %v2002 = vmul.f32 %v1986, 0.2
          %v2003 = vmul.f32 %v1987, 0.2
          %v2004 = vmul.f32 %v1988, 0.2
          %v2005 = vmul.f32 %v1989, 0.2
          %v2006 = vmul.f32 %v1990, 0.2
          %v2007 = vmul.f32 %v1991, 0.2
          %v2008 = vmax.f32 %v1976, %v1992
          %v2009 = vmax.f32 %v1977, %v1993
          %v2010 = vmax.f32 %v1978, %v1994
          %v2011 = vmax.f32 %v1979, %v1995
          %v2012 = vmax.f32 %v1980, %v1996
          %v2013 = vmax.f32 %v1981, %v1997
          %v2014 = vmax.f32 %v1982, %v1998
          %v2015 = vmax.f32 %v1983, %v1999
          %v2016 = vmax.f32 %v1984, %v2000
          %v2017 = vmax.f32 %v1985, %v2001
          %v2018 = vmax.f32 %v1986, %v2002
          %v2019 = vmax.f32 %v1987, %v2003
          %v2020 = vmax.f32 %v1988, %v2004
          %v2021 = vmax.f32 %v1989, %v2005
          %v2022 = vmax.f32 %v1990, %v2006
          %v2023 = vmax.f32 %v1991, %v2007
          %v2024 = vpack.c.bf16 %v2012, %v2008
          %v2025 = vpack.c.bf16 %v2013, %v2009
          %v2026 = vpack.c.bf16 %v2014, %v2010
          %v2027 = vpack.c.bf16 %v2015, %v2011
          %v2028 = vpack.c.bf16 %v2020, %v2016
          %v2029 = vpack.c.bf16 %v2021, %v2017
          %v2030 = vpack.c.bf16 %v2022, %v2018
          %v2031 = vpack.c.bf16 %v2023, %v2019
          %v2032 = vld [vmem:[#allocation21] sm:$0xff]
          %v2033 = vld [vmem:[#allocation21 + $0x8] sm:$0xff]
          %v2034 = vld [vmem:[#allocation21 + $0x10] sm:$0xff]
          %v2035 = vld [vmem:[#allocation21 + $0x18] sm:$0xff]
          %v2036 = vld [vmem:[#allocation21 + $0x20] sm:$0xff]
          %v2037 = vld [vmem:[#allocation21 + $0x28] sm:$0xff]
          %v2038 = vld [vmem:[#allocation21 + $0x30] sm:$0xff]
          %v2039 = vld [vmem:[#allocation21 + $0x38] sm:$0xff]
          %v2040 = vld [vmem:[#allocation21 + $0x40] sm:$0xff]
          %v2041 = vld [vmem:[#allocation21 + $0x48] sm:$0xff]
          %v2042 = vld [vmem:[#allocation21 + $0x50] sm:$0xff]
          %v2043 = vld [vmem:[#allocation21 + $0x58] sm:$0xff]
          %v2044 = vld [vmem:[#allocation21 + $0x60] sm:$0xff]
          %v2045 = vld [vmem:[#allocation21 + $0x68] sm:$0xff]
          %v2046 = vld [vmem:[#allocation21 + $0x70] sm:$0xff]
          %v2047 = vld [vmem:[#allocation21 + $0x78] sm:$0xff]
          %v2048 = vld [vmem:[#allocation21 + $0x80] sm:$0xff]
          %v2049 = vld [vmem:[#allocation21 + $0x88] sm:$0xff]
          %v2050 = vld [vmem:[#allocation21 + $0x90] sm:$0xff]
          %v2051 = vld [vmem:[#allocation21 + $0x98] sm:$0xff]
          %v2052 = vld [vmem:[#allocation21 + $0xa0] sm:$0xff]
          %v2053 = vld [vmem:[#allocation21 + $0xa8] sm:$0xff]
          %v2054 = vld [vmem:[#allocation21 + $0xb0] sm:$0xff]
          %v2055 = vld [vmem:[#allocation21 + $0xb8] sm:$0xff]
          %v2056 = vld [vmem:[#allocation21 + $0xc0] sm:$0xff]
          %v2057 = vld [vmem:[#allocation21 + $0xc8] sm:$0xff]
          %v2058 = vld [vmem:[#allocation21 + $0xd0] sm:$0xff]
          %v2059 = vld [vmem:[#allocation21 + $0xd8] sm:$0xff]
          %v2060 = vld [vmem:[#allocation21 + $0xe0] sm:$0xff]
          %v2061 = vld [vmem:[#allocation21 + $0xe8] sm:$0xff]
          %v2062 = vld [vmem:[#allocation21 + $0xf0] sm:$0xff]
          %v2063 = vld [vmem:[#allocation21 + $0xf8] sm:$0xff]
          %v2064 = vld [vmem:[#allocation21 + $0x100] sm:$0xff]
          %v2065 = vld [vmem:[#allocation21 + $0x108] sm:$0xff]
          %v2066 = vld [vmem:[#allocation21 + $0x110] sm:$0xff]
          %v2067 = vld [vmem:[#allocation21 + $0x118] sm:$0xff]
          %v2068 = vld [vmem:[#allocation21 + $0x120] sm:$0xff]
          %v2069 = vld [vmem:[#allocation21 + $0x128] sm:$0xff]
          %v2070 = vld [vmem:[#allocation21 + $0x130] sm:$0xff]
          %v2071 = vld [vmem:[#allocation21 + $0x138] sm:$0xff]
          %v2072 = vld [vmem:[#allocation21 + $0x140] sm:$0xff]
          %v2073 = vld [vmem:[#allocation21 + $0x148] sm:$0xff]
          %v2074 = vld [vmem:[#allocation21 + $0x150] sm:$0xff]
          %v2075 = vld [vmem:[#allocation21 + $0x158] sm:$0xff]
          %v2076 = vld [vmem:[#allocation21 + $0x160] sm:$0xff]
          %v2077 = vld [vmem:[#allocation21 + $0x168] sm:$0xff]
          %v2078 = vld [vmem:[#allocation21 + $0x170] sm:$0xff]
          %v2079 = vld [vmem:[#allocation21 + $0x178] sm:$0xff]
          %v2080 = vld [vmem:[#allocation21 + $0x180] sm:$0xff]
          %v2081 = vld [vmem:[#allocation21 + $0x188] sm:$0xff]
          %v2082 = vld [vmem:[#allocation21 + $0x190] sm:$0xff]
          %v2083 = vld [vmem:[#allocation21 + $0x198] sm:$0xff]
          %v2084 = vld [vmem:[#allocation21 + $0x1a0] sm:$0xff]
          %v2085 = vld [vmem:[#allocation21 + $0x1a8] sm:$0xff]
          %v2086 = vld [vmem:[#allocation21 + $0x1b0] sm:$0xff]
          %v2087 = vld [vmem:[#allocation21 + $0x1b8] sm:$0xff]
          %v2088 = vld [vmem:[#allocation21 + $0x1c0] sm:$0xff]
          %v2089 = vld [vmem:[#allocation21 + $0x1c8] sm:$0xff]
          %v2090 = vld [vmem:[#allocation21 + $0x1d0] sm:$0xff]
          %v2091 = vld [vmem:[#allocation21 + $0x1d8] sm:$0xff]
          %v2092 = vld [vmem:[#allocation21 + $0x1e0] sm:$0xff]
          %v2093 = vld [vmem:[#allocation21 + $0x1e8] sm:$0xff]
          %v2094 = vld [vmem:[#allocation21 + $0x1f0] sm:$0xff]
          %v2095 = vld [vmem:[#allocation21 + $0x1f8] sm:$0xff]
          %v2096 = vld [vmem:[#allocation21 + $0x200] sm:$0xff]
          %v2097 = vld [vmem:[#allocation21 + $0x208] sm:$0xff]
          %v2098 = vld [vmem:[#allocation21 + $0x210] sm:$0xff]
          %v2099 = vld [vmem:[#allocation21 + $0x218] sm:$0xff]
          %v2100 = vld [vmem:[#allocation21 + $0x220] sm:$0xff]
          %v2101 = vld [vmem:[#allocation21 + $0x228] sm:$0xff]
          %v2102 = vld [vmem:[#allocation21 + $0x230] sm:$0xff]
          %v2103 = vld [vmem:[#allocation21 + $0x238] sm:$0xff]
          %v2104 = vld [vmem:[#allocation21 + $0x240] sm:$0xff]
          %v2105 = vld [vmem:[#allocation21 + $0x248] sm:$0xff]
          %v2106 = vld [vmem:[#allocation21 + $0x250] sm:$0xff]
          %v2107 = vld [vmem:[#allocation21 + $0x258] sm:$0xff]
          %v2108 = vld [vmem:[#allocation21 + $0x260] sm:$0xff]
          %v2109 = vld [vmem:[#allocation21 + $0x268] sm:$0xff]
          %v2110 = vld [vmem:[#allocation21 + $0x270] sm:$0xff]
          %v2111 = vld [vmem:[#allocation21 + $0x278] sm:$0xff]
          %v2112 = vld [vmem:[#allocation21 + $0x280] sm:$0xff]
          %v2113 = vld [vmem:[#allocation21 + $0x288] sm:$0xff]
          %v2114 = vld [vmem:[#allocation21 + $0x290] sm:$0xff]
          %v2115 = vld [vmem:[#allocation21 + $0x298] sm:$0xff]
          %v2116 = vld [vmem:[#allocation21 + $0x2a0] sm:$0xff]
          %v2117 = vld [vmem:[#allocation21 + $0x2a8] sm:$0xff]
          %v2118 = vld [vmem:[#allocation21 + $0x2b0] sm:$0xff]
          %v2119 = vld [vmem:[#allocation21 + $0x2b8] sm:$0xff]
          %v2120 = vld [vmem:[#allocation21 + $0x2c0] sm:$0xff]
          %v2121 = vld [vmem:[#allocation21 + $0x2c8] sm:$0xff]
          %v2122 = vld [vmem:[#allocation21 + $0x2d0] sm:$0xff]
          %v2123 = vld [vmem:[#allocation21 + $0x2d8] sm:$0xff]
          %v2124 = vld [vmem:[#allocation21 + $0x2e0] sm:$0xff]
          %v2125 = vld [vmem:[#allocation21 + $0x2e8] sm:$0xff]
          %v2126 = vld [vmem:[#allocation21 + $0x2f0] sm:$0xff]
          %v2127 = vld [vmem:[#allocation21 + $0x2f8] sm:$0xff]
          %v2128 = vld [vmem:[#allocation21 + $0x300] sm:$0xff]
          %v2129 = vld [vmem:[#allocation21 + $0x308] sm:$0xff]
          %v2130 = vld [vmem:[#allocation21 + $0x310] sm:$0xff]
          %v2131 = vld [vmem:[#allocation21 + $0x318] sm:$0xff]
          %v2132 = vld [vmem:[#allocation21 + $0x320] sm:$0xff]
          %v2133 = vld [vmem:[#allocation21 + $0x328] sm:$0xff]
          %v2134 = vld [vmem:[#allocation21 + $0x330] sm:$0xff]
          %v2135 = vld [vmem:[#allocation21 + $0x338] sm:$0xff]
          %v2136 = vld [vmem:[#allocation21 + $0x340] sm:$0xff]
          %v2137 = vld [vmem:[#allocation21 + $0x348] sm:$0xff]
          %v2138 = vld [vmem:[#allocation21 + $0x350] sm:$0xff]
          %v2139 = vld [vmem:[#allocation21 + $0x358] sm:$0xff]
          %v2140 = vld [vmem:[#allocation21 + $0x360] sm:$0xff]
          %v2141 = vld [vmem:[#allocation21 + $0x368] sm:$0xff]
          %v2142 = vld [vmem:[#allocation21 + $0x370] sm:$0xff]
          %v2143 = vld [vmem:[#allocation21 + $0x378] sm:$0xff]
          %v2144 = vld [vmem:[#allocation21 + $0x380] sm:$0xff]
          %v2145 = vld [vmem:[#allocation21 + $0x388] sm:$0xff]
          %v2146 = vld [vmem:[#allocation21 + $0x390] sm:$0xff]
          %v2147 = vld [vmem:[#allocation21 + $0x398] sm:$0xff]
          %v2148 = vld [vmem:[#allocation21 + $0x3a0] sm:$0xff]
          %v2149 = vld [vmem:[#allocation21 + $0x3a8] sm:$0xff]
          %v2150 = vld [vmem:[#allocation21 + $0x3b0] sm:$0xff]
          %v2151 = vld [vmem:[#allocation21 + $0x3b8] sm:$0xff]
          %v2152 = vld [vmem:[#allocation21 + $0x3c0] sm:$0xff]
          %v2153 = vld [vmem:[#allocation21 + $0x3c8] sm:$0xff]
          %v2154 = vld [vmem:[#allocation21 + $0x3d0] sm:$0xff]
          %v2155 = vld [vmem:[#allocation21 + $0x3d8] sm:$0xff]
          %v2156 = vld [vmem:[#allocation21 + $0x3e0] sm:$0xff]
          %v2157 = vld [vmem:[#allocation21 + $0x3e8] sm:$0xff]
          %v2158 = vld [vmem:[#allocation21 + $0x3f0] sm:$0xff]
          %v2159 = vld [vmem:[#allocation21 + $0x3f8] sm:$0xff]
          %v2160 = vld [vmem:[#allocation21 + $0x400] sm:$0xff]
          %v2161 = vld [vmem:[#allocation21 + $0x408] sm:$0xff]
          %v2162 = vld [vmem:[#allocation21 + $0x410] sm:$0xff]
          %v2163 = vld [vmem:[#allocation21 + $0x418] sm:$0xff]
          %v2164 = vld [vmem:[#allocation21 + $0x420] sm:$0xff]
          %v2165 = vld [vmem:[#allocation21 + $0x428] sm:$0xff]
          %v2166 = vld [vmem:[#allocation21 + $0x430] sm:$0xff]
          %v2167 = vld [vmem:[#allocation21 + $0x438] sm:$0xff]
          %v2168 = vld [vmem:[#allocation21 + $0x440] sm:$0xff]
          %v2169 = vld [vmem:[#allocation21 + $0x448] sm:$0xff]
          %v2170 = vld [vmem:[#allocation21 + $0x450] sm:$0xff]
          %v2171 = vld [vmem:[#allocation21 + $0x458] sm:$0xff]
          %v2172 = vld [vmem:[#allocation21 + $0x460] sm:$0xff]
          %v2173 = vld [vmem:[#allocation21 + $0x468] sm:$0xff]
          %v2174 = vld [vmem:[#allocation21 + $0x470] sm:$0xff]
          %v2175 = vld [vmem:[#allocation21 + $0x478] sm:$0xff]
          %v2176 = vld [vmem:[#allocation21 + $0x480] sm:$0xff]
          %v2177 = vld [vmem:[#allocation21 + $0x488] sm:$0xff]
          %v2178 = vld [vmem:[#allocation21 + $0x490] sm:$0xff]
          %v2179 = vld [vmem:[#allocation21 + $0x498] sm:$0xff]
          %v2180 = vld [vmem:[#allocation21 + $0x4a0] sm:$0xff]
          %v2181 = vld [vmem:[#allocation21 + $0x4a8] sm:$0xff]
          %v2182 = vld [vmem:[#allocation21 + $0x4b0] sm:$0xff]
          %v2183 = vld [vmem:[#allocation21 + $0x4b8] sm:$0xff]
          %v2184 = vld [vmem:[#allocation21 + $0x4c0] sm:$0xff]
          %v2185 = vld [vmem:[#allocation21 + $0x4c8] sm:$0xff]
          %v2186 = vld [vmem:[#allocation21 + $0x4d0] sm:$0xff]
          %v2187 = vld [vmem:[#allocation21 + $0x4d8] sm:$0xff]
          %v2188 = vld [vmem:[#allocation21 + $0x4e0] sm:$0xff]
          %v2189 = vld [vmem:[#allocation21 + $0x4e8] sm:$0xff]
          %v2190 = vld [vmem:[#allocation21 + $0x4f0] sm:$0xff]
          %v2191 = vld [vmem:[#allocation21 + $0x4f8] sm:$0xff]
          %v2192 = vld [vmem:[#allocation21 + $0x500] sm:$0xff]
          %v2193 = vld [vmem:[#allocation21 + $0x508] sm:$0xff]
          %v2194 = vld [vmem:[#allocation21 + $0x510] sm:$0xff]
          %v2195 = vld [vmem:[#allocation21 + $0x518] sm:$0xff]
          %v2196 = vld [vmem:[#allocation21 + $0x520] sm:$0xff]
          %v2197 = vld [vmem:[#allocation21 + $0x528] sm:$0xff]
          %v2198 = vld [vmem:[#allocation21 + $0x530] sm:$0xff]
          %v2199 = vld [vmem:[#allocation21 + $0x538] sm:$0xff]
          %v2200 = vld [vmem:[#allocation21 + $0x540] sm:$0xff]
          %v2201 = vld [vmem:[#allocation21 + $0x548] sm:$0xff]
          %v2202 = vld [vmem:[#allocation21 + $0x550] sm:$0xff]
          %v2203 = vld [vmem:[#allocation21 + $0x558] sm:$0xff]
          %v2204 = vld [vmem:[#allocation21 + $0x560] sm:$0xff]
          %v2205 = vld [vmem:[#allocation21 + $0x568] sm:$0xff]
          %v2206 = vld [vmem:[#allocation21 + $0x570] sm:$0xff]
          %v2207 = vld [vmem:[#allocation21 + $0x578] sm:$0xff]
          %v2208 = vld [vmem:[#allocation21 + $0x580] sm:$0xff]
          %v2209 = vld [vmem:[#allocation21 + $0x588] sm:$0xff]
          %v2210 = vld [vmem:[#allocation21 + $0x590] sm:$0xff]
          %v2211 = vld [vmem:[#allocation21 + $0x598] sm:$0xff]
          %v2212 = vld [vmem:[#allocation21 + $0x5a0] sm:$0xff]
          %v2213 = vld [vmem:[#allocation21 + $0x5a8] sm:$0xff]
          %v2214 = vld [vmem:[#allocation21 + $0x5b0] sm:$0xff]
          %v2215 = vld [vmem:[#allocation21 + $0x5b8] sm:$0xff]
          %v2216 = vld [vmem:[#allocation21 + $0x5c0] sm:$0xff]
          %v2217 = vld [vmem:[#allocation21 + $0x5c8] sm:$0xff]
          %v2218 = vld [vmem:[#allocation21 + $0x5d0] sm:$0xff]
          %v2219 = vld [vmem:[#allocation21 + $0x5d8] sm:$0xff]
          %v2220 = vld [vmem:[#allocation21 + $0x5e0] sm:$0xff]
          %v2221 = vld [vmem:[#allocation21 + $0x5e8] sm:$0xff]
          %v2222 = vld [vmem:[#allocation21 + $0x5f0] sm:$0xff]
          %v2223 = vld [vmem:[#allocation21 + $0x5f8] sm:$0xff]
          %v2224 = vld [vmem:[#allocation21 + $0x600] sm:$0xff]
          %v2225 = vld [vmem:[#allocation21 + $0x608] sm:$0xff]
          %v2226 = vld [vmem:[#allocation21 + $0x610] sm:$0xff]
          %v2227 = vld [vmem:[#allocation21 + $0x618] sm:$0xff]
          %v2228 = vld [vmem:[#allocation21 + $0x620] sm:$0xff]
          %v2229 = vld [vmem:[#allocation21 + $0x628] sm:$0xff]
          %v2230 = vld [vmem:[#allocation21 + $0x630] sm:$0xff]
          %v2231 = vld [vmem:[#allocation21 + $0x638] sm:$0xff]
          %v2232 = vld [vmem:[#allocation21 + $0x640] sm:$0xff]
          %v2233 = vld [vmem:[#allocation21 + $0x648] sm:$0xff]
          %v2234 = vld [vmem:[#allocation21 + $0x650] sm:$0xff]
          %v2235 = vld [vmem:[#allocation21 + $0x658] sm:$0xff]
          %v2236 = vld [vmem:[#allocation21 + $0x660] sm:$0xff]
          %v2237 = vld [vmem:[#allocation21 + $0x668] sm:$0xff]
          %v2238 = vld [vmem:[#allocation21 + $0x670] sm:$0xff]
          %v2239 = vld [vmem:[#allocation21 + $0x678] sm:$0xff]
          %v2240 = vld [vmem:[#allocation21 + $0x680] sm:$0xff]
          %v2241 = vld [vmem:[#allocation21 + $0x688] sm:$0xff]
          %v2242 = vld [vmem:[#allocation21 + $0x690] sm:$0xff]
          %v2243 = vld [vmem:[#allocation21 + $0x698] sm:$0xff]
          %v2244 = vld [vmem:[#allocation21 + $0x6a0] sm:$0xff]
          %v2245 = vld [vmem:[#allocation21 + $0x6a8] sm:$0xff]
          %v2246 = vld [vmem:[#allocation21 + $0x6b0] sm:$0xff]
          %v2247 = vld [vmem:[#allocation21 + $0x6b8] sm:$0xff]
          %v2248 = vld [vmem:[#allocation21 + $0x6c0] sm:$0xff]
          %v2249 = vld [vmem:[#allocation21 + $0x6c8] sm:$0xff]
          %v2250 = vld [vmem:[#allocation21 + $0x6d0] sm:$0xff]
          %v2251 = vld [vmem:[#allocation21 + $0x6d8] sm:$0xff]
          %v2252 = vld [vmem:[#allocation21 + $0x6e0] sm:$0xff]
          %v2253 = vld [vmem:[#allocation21 + $0x6e8] sm:$0xff]
          %v2254 = vld [vmem:[#allocation21 + $0x6f0] sm:$0xff]
          %v2255 = vld [vmem:[#allocation21 + $0x6f8] sm:$0xff]
          %v2256 = vld [vmem:[#allocation21 + $0x700] sm:$0xff]
          %v2257 = vld [vmem:[#allocation21 + $0x708] sm:$0xff]
          %v2258 = vld [vmem:[#allocation21 + $0x710] sm:$0xff]
          %v2259 = vld [vmem:[#allocation21 + $0x718] sm:$0xff]
          %v2260 = vld [vmem:[#allocation21 + $0x720] sm:$0xff]
          %v2261 = vld [vmem:[#allocation21 + $0x728] sm:$0xff]
          %v2262 = vld [vmem:[#allocation21 + $0x730] sm:$0xff]
          %v2263 = vld [vmem:[#allocation21 + $0x738] sm:$0xff]
          %v2264 = vld [vmem:[#allocation21 + $0x740] sm:$0xff]
          %v2265 = vld [vmem:[#allocation21 + $0x748] sm:$0xff]
          %v2266 = vld [vmem:[#allocation21 + $0x750] sm:$0xff]
          %v2267 = vld [vmem:[#allocation21 + $0x758] sm:$0xff]
          %v2268 = vld [vmem:[#allocation21 + $0x760] sm:$0xff]
          %v2269 = vld [vmem:[#allocation21 + $0x768] sm:$0xff]
          %v2270 = vld [vmem:[#allocation21 + $0x770] sm:$0xff]
          %v2271 = vld [vmem:[#allocation21 + $0x778] sm:$0xff]
          %v2272 = vld [vmem:[#allocation21 + $0x780] sm:$0xff]
          %v2273 = vld [vmem:[#allocation21 + $0x788] sm:$0xff]
          %v2274 = vld [vmem:[#allocation21 + $0x790] sm:$0xff]
          %v2275 = vld [vmem:[#allocation21 + $0x798] sm:$0xff]
          %v2276 = vld [vmem:[#allocation21 + $0x7a0] sm:$0xff]
          %v2277 = vld [vmem:[#allocation21 + $0x7a8] sm:$0xff]
          %v2278 = vld [vmem:[#allocation21 + $0x7b0] sm:$0xff]
          %v2279 = vld [vmem:[#allocation21 + $0x7b8] sm:$0xff]
          %v2280 = vld [vmem:[#allocation21 + $0x7c0] sm:$0xff]
          %v2281 = vld [vmem:[#allocation21 + $0x7c8] sm:$0xff]
          %v2282 = vld [vmem:[#allocation21 + $0x7d0] sm:$0xff]
          %v2283 = vld [vmem:[#allocation21 + $0x7d8] sm:$0xff]
          %v2284 = vld [vmem:[#allocation21 + $0x7e0] sm:$0xff]
          %v2285 = vld [vmem:[#allocation21 + $0x7e8] sm:$0xff]
          %v2286 = vld [vmem:[#allocation21 + $0x7f0] sm:$0xff]
          %v2287 = vld [vmem:[#allocation21 + $0x7f8] sm:$0xff]
          %v2288 = vld [vmem:[#allocation23] sm:$0xff]
          %v2290 = vlaneseq
          %v2291 = vshrl.u32 %v2290, 7
          %v2292 = vsub.s32 0, %v2291
          %v2293 = vrot.slane %v2288, %v2292
          %v2294 = vlaneseq
          %v2295 = vshrl.u32 %v2294, 7
          %v2296 = vsub.s32 1, %v2295
          %v2297 = vrot.slane %v2288, %v2296
          %v2298 = vlaneseq
          %v2299 = vshrl.u32 %v2298, 7
          %v2300 = vsub.s32 2, %v2299
          %v2301 = vrot.slane %v2288, %v2300
          %v2302 = vlaneseq
          %v2303 = vshrl.u32 %v2302, 7
          %v2304 = vsub.s32 3, %v2303
          %v2305 = vrot.slane %v2288, %v2304
          %v2306 = vlaneseq
          %v2307 = vshrl.u32 %v2306, 7
          %v2308 = vsub.s32 4, %v2307
          %v2309 = vrot.slane %v2288, %v2308
          %v2310 = vlaneseq
          %v2311 = vshrl.u32 %v2310, 7
          %v2312 = vsub.s32 5, %v2311
          %v2313 = vrot.slane %v2288, %v2312
          %v2314 = vlaneseq
          %v2315 = vshrl.u32 %v2314, 7
          %v2316 = vsub.s32 6, %v2315
          %v2317 = vrot.slane %v2288, %v2316
          %v2318 = vlaneseq
          %v2319 = vshrl.u32 %v2318, 7
          %v2320 = vsub.s32 7, %v2319
          %v2321 = vrot.slane %v2288, %v2320
          %v2586 = vunpack.c.l.b16 %v2032
          %v2587 = vunpack.c.h.b16 %v2032
          %v2588 = vunpack.c.l.b16 %v2033
          %v2589 = vunpack.c.h.b16 %v2033
          %v2590 = vunpack.c.l.b16 %v2034
          %v2591 = vunpack.c.h.b16 %v2034
          %v2592 = vunpack.c.l.b16 %v2035
          %v2593 = vunpack.c.h.b16 %v2035
          %v2594 = vunpack.c.l.b16 %v2036
          %v2595 = vunpack.c.h.b16 %v2036
          %v2596 = vunpack.c.l.b16 %v2037
          %v2597 = vunpack.c.h.b16 %v2037
          %v2598 = vunpack.c.l.b16 %v2038
          %v2599 = vunpack.c.h.b16 %v2038
          %v2600 = vunpack.c.l.b16 %v2039
          %v2601 = vunpack.c.h.b16 %v2039
          %v2602 = vunpack.c.l.b16 %v2040
          %v2603 = vunpack.c.h.b16 %v2040
          %v2604 = vunpack.c.l.b16 %v2041
          %v2605 = vunpack.c.h.b16 %v2041
          %v2606 = vunpack.c.l.b16 %v2042
          %v2607 = vunpack.c.h.b16 %v2042
          %v2608 = vunpack.c.l.b16 %v2043
          %v2609 = vunpack.c.h.b16 %v2043
          %v2610 = vunpack.c.l.b16 %v2044
          %v2611 = vunpack.c.h.b16 %v2044
          %v2612 = vunpack.c.l.b16 %v2045
          %v2613 = vunpack.c.h.b16 %v2045
          %v2614 = vunpack.c.l.b16 %v2046
          %v2615 = vunpack.c.h.b16 %v2046
          %v2616 = vunpack.c.l.b16 %v2047
          %v2617 = vunpack.c.h.b16 %v2047
          %v2618 = vunpack.c.l.b16 %v2048
          %v2619 = vunpack.c.h.b16 %v2048
          %v2620 = vunpack.c.l.b16 %v2049
          %v2621 = vunpack.c.h.b16 %v2049
          %v2622 = vunpack.c.l.b16 %v2050
          %v2623 = vunpack.c.h.b16 %v2050
          %v2624 = vunpack.c.l.b16 %v2051
          %v2625 = vunpack.c.h.b16 %v2051
          %v2626 = vunpack.c.l.b16 %v2052
          %v2627 = vunpack.c.h.b16 %v2052
          %v2628 = vunpack.c.l.b16 %v2053
          %v2629 = vunpack.c.h.b16 %v2053
          %v2630 = vunpack.c.l.b16 %v2054
          %v2631 = vunpack.c.h.b16 %v2054
          %v2632 = vunpack.c.l.b16 %v2055
          %v2633 = vunpack.c.h.b16 %v2055
          %v2634 = vunpack.c.l.b16 %v2056
          %v2635 = vunpack.c.h.b16 %v2056
          %v2636 = vunpack.c.l.b16 %v2057
          %v2637 = vunpack.c.h.b16 %v2057
          %v2638 = vunpack.c.l.b16 %v2058
          %v2639 = vunpack.c.h.b16 %v2058
          %v2640 = vunpack.c.l.b16 %v2059
          %v2641 = vunpack.c.h.b16 %v2059
          %v2642 = vunpack.c.l.b16 %v2060
          %v2643 = vunpack.c.h.b16 %v2060
          %v2644 = vunpack.c.l.b16 %v2061
          %v2645 = vunpack.c.h.b16 %v2061
          %v2646 = vunpack.c.l.b16 %v2062
          %v2647 = vunpack.c.h.b16 %v2062
          %v2648 = vunpack.c.l.b16 %v2063
          %v2649 = vunpack.c.h.b16 %v2063
          %v2650 = vunpack.c.l.b16 %v2064
          %v2651 = vunpack.c.h.b16 %v2064
          %v2652 = vunpack.c.l.b16 %v2065
          %v2653 = vunpack.c.h.b16 %v2065
          %v2654 = vunpack.c.l.b16 %v2066
          %v2655 = vunpack.c.h.b16 %v2066
          %v2656 = vunpack.c.l.b16 %v2067
          %v2657 = vunpack.c.h.b16 %v2067
          %v2658 = vunpack.c.l.b16 %v2068
          %v2659 = vunpack.c.h.b16 %v2068
          %v2660 = vunpack.c.l.b16 %v2069
          %v2661 = vunpack.c.h.b16 %v2069
          %v2662 = vunpack.c.l.b16 %v2070
          %v2663 = vunpack.c.h.b16 %v2070
          %v2664 = vunpack.c.l.b16 %v2071
          %v2665 = vunpack.c.h.b16 %v2071
          %v2666 = vunpack.c.l.b16 %v2072
          %v2667 = vunpack.c.h.b16 %v2072
          %v2668 = vunpack.c.l.b16 %v2073
          %v2669 = vunpack.c.h.b16 %v2073
          %v2670 = vunpack.c.l.b16 %v2074
          %v2671 = vunpack.c.h.b16 %v2074
          %v2672 = vunpack.c.l.b16 %v2075
          %v2673 = vunpack.c.h.b16 %v2075
          %v2674 = vunpack.c.l.b16 %v2076
          %v2675 = vunpack.c.h.b16 %v2076
          %v2676 = vunpack.c.l.b16 %v2077
          %v2677 = vunpack.c.h.b16 %v2077
          %v2678 = vunpack.c.l.b16 %v2078
          %v2679 = vunpack.c.h.b16 %v2078
          %v2680 = vunpack.c.l.b16 %v2079
          %v2681 = vunpack.c.h.b16 %v2079
          %v2682 = vunpack.c.l.b16 %v2080
          %v2683 = vunpack.c.h.b16 %v2080
          %v2684 = vunpack.c.l.b16 %v2081
          %v2685 = vunpack.c.h.b16 %v2081
          %v2686 = vunpack.c.l.b16 %v2082
          %v2687 = vunpack.c.h.b16 %v2082
          %v2688 = vunpack.c.l.b16 %v2083
          %v2689 = vunpack.c.h.b16 %v2083
          %v2690 = vunpack.c.l.b16 %v2084
          %v2691 = vunpack.c.h.b16 %v2084
          %v2692 = vunpack.c.l.b16 %v2085
          %v2693 = vunpack.c.h.b16 %v2085
          %v2694 = vunpack.c.l.b16 %v2086
          %v2695 = vunpack.c.h.b16 %v2086
          %v2696 = vunpack.c.l.b16 %v2087
          %v2697 = vunpack.c.h.b16 %v2087
          %v2698 = vunpack.c.l.b16 %v2088
          %v2699 = vunpack.c.h.b16 %v2088
          %v2700 = vunpack.c.l.b16 %v2089
          %v2701 = vunpack.c.h.b16 %v2089
          %v2702 = vunpack.c.l.b16 %v2090
          %v2703 = vunpack.c.h.b16 %v2090
          %v2704 = vunpack.c.l.b16 %v2091
          %v2705 = vunpack.c.h.b16 %v2091
          %v2706 = vunpack.c.l.b16 %v2092
          %v2707 = vunpack.c.h.b16 %v2092
          %v2708 = vunpack.c.l.b16 %v2093
          %v2709 = vunpack.c.h.b16 %v2093
          %v2710 = vunpack.c.l.b16 %v2094
          %v2711 = vunpack.c.h.b16 %v2094
          %v2712 = vunpack.c.l.b16 %v2095
          %v2713 = vunpack.c.h.b16 %v2095
          %v2714 = vunpack.c.l.b16 %v2096
          %v2715 = vunpack.c.h.b16 %v2096
          %v2716 = vunpack.c.l.b16 %v2097
          %v2717 = vunpack.c.h.b16 %v2097
          %v2718 = vunpack.c.l.b16 %v2098
          %v2719 = vunpack.c.h.b16 %v2098
          %v2720 = vunpack.c.l.b16 %v2099
          %v2721 = vunpack.c.h.b16 %v2099
          %v2722 = vunpack.c.l.b16 %v2100
          %v2723 = vunpack.c.h.b16 %v2100
          %v2724 = vunpack.c.l.b16 %v2101
          %v2725 = vunpack.c.h.b16 %v2101
          %v2726 = vunpack.c.l.b16 %v2102
          %v2727 = vunpack.c.h.b16 %v2102
          %v2728 = vunpack.c.l.b16 %v2103
          %v2729 = vunpack.c.h.b16 %v2103
          %v2730 = vunpack.c.l.b16 %v2104
          %v2731 = vunpack.c.h.b16 %v2104
          %v2732 = vunpack.c.l.b16 %v2105
          %v2733 = vunpack.c.h.b16 %v2105
          %v2734 = vunpack.c.l.b16 %v2106
          %v2735 = vunpack.c.h.b16 %v2106
          %v2736 = vunpack.c.l.b16 %v2107
          %v2737 = vunpack.c.h.b16 %v2107
          %v2738 = vunpack.c.l.b16 %v2108
          %v2739 = vunpack.c.h.b16 %v2108
          %v2740 = vunpack.c.l.b16 %v2109
          %v2741 = vunpack.c.h.b16 %v2109
          %v2742 = vunpack.c.l.b16 %v2110
          %v2743 = vunpack.c.h.b16 %v2110
          %v2744 = vunpack.c.l.b16 %v2111
          %v2745 = vunpack.c.h.b16 %v2111
          %v2746 = vunpack.c.l.b16 %v2112
          %v2747 = vunpack.c.h.b16 %v2112
          %v2748 = vunpack.c.l.b16 %v2113
          %v2749 = vunpack.c.h.b16 %v2113
          %v2750 = vunpack.c.l.b16 %v2114
          %v2751 = vunpack.c.h.b16 %v2114
          %v2752 = vunpack.c.l.b16 %v2115
          %v2753 = vunpack.c.h.b16 %v2115
          %v2754 = vunpack.c.l.b16 %v2116
          %v2755 = vunpack.c.h.b16 %v2116
          %v2756 = vunpack.c.l.b16 %v2117
          %v2757 = vunpack.c.h.b16 %v2117
          %v2758 = vunpack.c.l.b16 %v2118
          %v2759 = vunpack.c.h.b16 %v2118
          %v2760 = vunpack.c.l.b16 %v2119
          %v2761 = vunpack.c.h.b16 %v2119
          %v2762 = vunpack.c.l.b16 %v2120
          %v2763 = vunpack.c.h.b16 %v2120
          %v2764 = vunpack.c.l.b16 %v2121
          %v2765 = vunpack.c.h.b16 %v2121
          %v2766 = vunpack.c.l.b16 %v2122
          %v2767 = vunpack.c.h.b16 %v2122
          %v2768 = vunpack.c.l.b16 %v2123
          %v2769 = vunpack.c.h.b16 %v2123
          %v2770 = vunpack.c.l.b16 %v2124
          %v2771 = vunpack.c.h.b16 %v2124
          %v2772 = vunpack.c.l.b16 %v2125
          %v2773 = vunpack.c.h.b16 %v2125
          %v2774 = vunpack.c.l.b16 %v2126
          %v2775 = vunpack.c.h.b16 %v2126
          %v2776 = vunpack.c.l.b16 %v2127
          %v2777 = vunpack.c.h.b16 %v2127
          %v2778 = vunpack.c.l.b16 %v2128
          %v2779 = vunpack.c.h.b16 %v2128
          %v2780 = vunpack.c.l.b16 %v2129
          %v2781 = vunpack.c.h.b16 %v2129
          %v2782 = vunpack.c.l.b16 %v2130
          %v2783 = vunpack.c.h.b16 %v2130
          %v2784 = vunpack.c.l.b16 %v2131
          %v2785 = vunpack.c.h.b16 %v2131
          %v2786 = vunpack.c.l.b16 %v2132
          %v2787 = vunpack.c.h.b16 %v2132
          %v2788 = vunpack.c.l.b16 %v2133
          %v2789 = vunpack.c.h.b16 %v2133
          %v2790 = vunpack.c.l.b16 %v2134
          %v2791 = vunpack.c.h.b16 %v2134
          %v2792 = vunpack.c.l.b16 %v2135
          %v2793 = vunpack.c.h.b16 %v2135
          %v2794 = vunpack.c.l.b16 %v2136
          %v2795 = vunpack.c.h.b16 %v2136
          %v2796 = vunpack.c.l.b16 %v2137
          %v2797 = vunpack.c.h.b16 %v2137
          %v2798 = vunpack.c.l.b16 %v2138
          %v2799 = vunpack.c.h.b16 %v2138
          %v2800 = vunpack.c.l.b16 %v2139
          %v2801 = vunpack.c.h.b16 %v2139
          %v2802 = vunpack.c.l.b16 %v2140
          %v2803 = vunpack.c.h.b16 %v2140
          %v2804 = vunpack.c.l.b16 %v2141
          %v2805 = vunpack.c.h.b16 %v2141
          %v2806 = vunpack.c.l.b16 %v2142
          %v2807 = vunpack.c.h.b16 %v2142
          %v2808 = vunpack.c.l.b16 %v2143
          %v2809 = vunpack.c.h.b16 %v2143
          %v2810 = vunpack.c.l.b16 %v2144
          %v2811 = vunpack.c.h.b16 %v2144
          %v2812 = vunpack.c.l.b16 %v2145
          %v2813 = vunpack.c.h.b16 %v2145
          %v2814 = vunpack.c.l.b16 %v2146
          %v2815 = vunpack.c.h.b16 %v2146
          %v2816 = vunpack.c.l.b16 %v2147
          %v2817 = vunpack.c.h.b16 %v2147
          %v2818 = vunpack.c.l.b16 %v2148
          %v2819 = vunpack.c.h.b16 %v2148
          %v2820 = vunpack.c.l.b16 %v2149
          %v2821 = vunpack.c.h.b16 %v2149
          %v2822 = vunpack.c.l.b16 %v2150
          %v2823 = vunpack.c.h.b16 %v2150
          %v2824 = vunpack.c.l.b16 %v2151
          %v2825 = vunpack.c.h.b16 %v2151
          %v2826 = vunpack.c.l.b16 %v2152
          %v2827 = vunpack.c.h.b16 %v2152
          %v2828 = vunpack.c.l.b16 %v2153
          %v2829 = vunpack.c.h.b16 %v2153
          %v2830 = vunpack.c.l.b16 %v2154
          %v2831 = vunpack.c.h.b16 %v2154
          %v2832 = vunpack.c.l.b16 %v2155
          %v2833 = vunpack.c.h.b16 %v2155
          %v2834 = vunpack.c.l.b16 %v2156
          %v2835 = vunpack.c.h.b16 %v2156
          %v2836 = vunpack.c.l.b16 %v2157
          %v2837 = vunpack.c.h.b16 %v2157
          %v2838 = vunpack.c.l.b16 %v2158
          %v2839 = vunpack.c.h.b16 %v2158
          %v2840 = vunpack.c.l.b16 %v2159
          %v2841 = vunpack.c.h.b16 %v2159
          %v2842 = vunpack.c.l.b16 %v2160
          %v2843 = vunpack.c.h.b16 %v2160
          %v2844 = vunpack.c.l.b16 %v2161
          %v2845 = vunpack.c.h.b16 %v2161
          %v2846 = vunpack.c.l.b16 %v2162
          %v2847 = vunpack.c.h.b16 %v2162
          %v2848 = vunpack.c.l.b16 %v2163
          %v2849 = vunpack.c.h.b16 %v2163
          %v2850 = vunpack.c.l.b16 %v2164
          %v2851 = vunpack.c.h.b16 %v2164
          %v2852 = vunpack.c.l.b16 %v2165
          %v2853 = vunpack.c.h.b16 %v2165
          %v2854 = vunpack.c.l.b16 %v2166
          %v2855 = vunpack.c.h.b16 %v2166
          %v2856 = vunpack.c.l.b16 %v2167
          %v2857 = vunpack.c.h.b16 %v2167
          %v2858 = vunpack.c.l.b16 %v2168
          %v2859 = vunpack.c.h.b16 %v2168
          %v2860 = vunpack.c.l.b16 %v2169
          %v2861 = vunpack.c.h.b16 %v2169
          %v2862 = vunpack.c.l.b16 %v2170
          %v2863 = vunpack.c.h.b16 %v2170
          %v2864 = vunpack.c.l.b16 %v2171
          %v2865 = vunpack.c.h.b16 %v2171
          %v2866 = vunpack.c.l.b16 %v2172
          %v2867 = vunpack.c.h.b16 %v2172
          %v2868 = vunpack.c.l.b16 %v2173
          %v2869 = vunpack.c.h.b16 %v2173
          %v2870 = vunpack.c.l.b16 %v2174
          %v2871 = vunpack.c.h.b16 %v2174
          %v2872 = vunpack.c.l.b16 %v2175
          %v2873 = vunpack.c.h.b16 %v2175
          %v2874 = vunpack.c.l.b16 %v2176
          %v2875 = vunpack.c.h.b16 %v2176
          %v2876 = vunpack.c.l.b16 %v2177
          %v2877 = vunpack.c.h.b16 %v2177
          %v2878 = vunpack.c.l.b16 %v2178
          %v2879 = vunpack.c.h.b16 %v2178
          %v2880 = vunpack.c.l.b16 %v2179
          %v2881 = vunpack.c.h.b16 %v2179
          %v2882 = vunpack.c.l.b16 %v2180
          %v2883 = vunpack.c.h.b16 %v2180
          %v2884 = vunpack.c.l.b16 %v2181
          %v2885 = vunpack.c.h.b16 %v2181
          %v2886 = vunpack.c.l.b16 %v2182
          %v2887 = vunpack.c.h.b16 %v2182
          %v2888 = vunpack.c.l.b16 %v2183
          %v2889 = vunpack.c.h.b16 %v2183
          %v2890 = vunpack.c.l.b16 %v2184
          %v2891 = vunpack.c.h.b16 %v2184
          %v2892 = vunpack.c.l.b16 %v2185
          %v2893 = vunpack.c.h.b16 %v2185
          %v2894 = vunpack.c.l.b16 %v2186
          %v2895 = vunpack.c.h.b16 %v2186
          %v2896 = vunpack.c.l.b16 %v2187
          %v2897 = vunpack.c.h.b16 %v2187
          %v2898 = vunpack.c.l.b16 %v2188
          %v2899 = vunpack.c.h.b16 %v2188
          %v2900 = vunpack.c.l.b16 %v2189
          %v2901 = vunpack.c.h.b16 %v2189
          %v2902 = vunpack.c.l.b16 %v2190
          %v2903 = vunpack.c.h.b16 %v2190
          %v2904 = vunpack.c.l.b16 %v2191
          %v2905 = vunpack.c.h.b16 %v2191
          %v2906 = vunpack.c.l.b16 %v2192
          %v2907 = vunpack.c.h.b16 %v2192
          %v2908 = vunpack.c.l.b16 %v2193
          %v2909 = vunpack.c.h.b16 %v2193
          %v2910 = vunpack.c.l.b16 %v2194
          %v2911 = vunpack.c.h.b16 %v2194
          %v2912 = vunpack.c.l.b16 %v2195
          %v2913 = vunpack.c.h.b16 %v2195
          %v2914 = vunpack.c.l.b16 %v2196
          %v2915 = vunpack.c.h.b16 %v2196
          %v2916 = vunpack.c.l.b16 %v2197
          %v2917 = vunpack.c.h.b16 %v2197
          %v2918 = vunpack.c.l.b16 %v2198
          %v2919 = vunpack.c.h.b16 %v2198
          %v2920 = vunpack.c.l.b16 %v2199
          %v2921 = vunpack.c.h.b16 %v2199
          %v2922 = vunpack.c.l.b16 %v2200
          %v2923 = vunpack.c.h.b16 %v2200
          %v2924 = vunpack.c.l.b16 %v2201
          %v2925 = vunpack.c.h.b16 %v2201
          %v2926 = vunpack.c.l.b16 %v2202
          %v2927 = vunpack.c.h.b16 %v2202
          %v2928 = vunpack.c.l.b16 %v2203
          %v2929 = vunpack.c.h.b16 %v2203
          %v2930 = vunpack.c.l.b16 %v2204
          %v2931 = vunpack.c.h.b16 %v2204
          %v2932 = vunpack.c.l.b16 %v2205
          %v2933 = vunpack.c.h.b16 %v2205
          %v2934 = vunpack.c.l.b16 %v2206
          %v2935 = vunpack.c.h.b16 %v2206
          %v2936 = vunpack.c.l.b16 %v2207
          %v2937 = vunpack.c.h.b16 %v2207
          %v2938 = vunpack.c.l.b16 %v2208
          %v2939 = vunpack.c.h.b16 %v2208
          %v2940 = vunpack.c.l.b16 %v2209
          %v2941 = vunpack.c.h.b16 %v2209
          %v2942 = vunpack.c.l.b16 %v2210
          %v2943 = vunpack.c.h.b16 %v2210
          %v2944 = vunpack.c.l.b16 %v2211
          %v2945 = vunpack.c.h.b16 %v2211
          %v2946 = vunpack.c.l.b16 %v2212
          %v2947 = vunpack.c.h.b16 %v2212
          %v2948 = vunpack.c.l.b16 %v2213
          %v2949 = vunpack.c.h.b16 %v2213
          %v2950 = vunpack.c.l.b16 %v2214
          %v2951 = vunpack.c.h.b16 %v2214
          %v2952 = vunpack.c.l.b16 %v2215
          %v2953 = vunpack.c.h.b16 %v2215
          %v2954 = vunpack.c.l.b16 %v2216
          %v2955 = vunpack.c.h.b16 %v2216
          %v2956 = vunpack.c.l.b16 %v2217
          %v2957 = vunpack.c.h.b16 %v2217
          %v2958 = vunpack.c.l.b16 %v2218
          %v2959 = vunpack.c.h.b16 %v2218
          %v2960 = vunpack.c.l.b16 %v2219
          %v2961 = vunpack.c.h.b16 %v2219
          %v2962 = vunpack.c.l.b16 %v2220
          %v2963 = vunpack.c.h.b16 %v2220
          %v2964 = vunpack.c.l.b16 %v2221
          %v2965 = vunpack.c.h.b16 %v2221
          %v2966 = vunpack.c.l.b16 %v2222
          %v2967 = vunpack.c.h.b16 %v2222
          %v2968 = vunpack.c.l.b16 %v2223
          %v2969 = vunpack.c.h.b16 %v2223
          %v2970 = vunpack.c.l.b16 %v2224
          %v2971 = vunpack.c.h.b16 %v2224
          %v2972 = vunpack.c.l.b16 %v2225
          %v2973 = vunpack.c.h.b16 %v2225
          %v2974 = vunpack.c.l.b16 %v2226
          %v2975 = vunpack.c.h.b16 %v2226
          %v2976 = vunpack.c.l.b16 %v2227
          %v2977 = vunpack.c.h.b16 %v2227
          %v2978 = vunpack.c.l.b16 %v2228
          %v2979 = vunpack.c.h.b16 %v2228
          %v2980 = vunpack.c.l.b16 %v2229
          %v2981 = vunpack.c.h.b16 %v2229
          %v2982 = vunpack.c.l.b16 %v2230
          %v2983 = vunpack.c.h.b16 %v2230
          %v2984 = vunpack.c.l.b16 %v2231
          %v2985 = vunpack.c.h.b16 %v2231
          %v2986 = vunpack.c.l.b16 %v2232
          %v2987 = vunpack.c.h.b16 %v2232
          %v2988 = vunpack.c.l.b16 %v2233
          %v2989 = vunpack.c.h.b16 %v2233
          %v2990 = vunpack.c.l.b16 %v2234
          %v2991 = vunpack.c.h.b16 %v2234
          %v2992 = vunpack.c.l.b16 %v2235
          %v2993 = vunpack.c.h.b16 %v2235
          %v2994 = vunpack.c.l.b16 %v2236
          %v2995 = vunpack.c.h.b16 %v2236
          %v2996 = vunpack.c.l.b16 %v2237
          %v2997 = vunpack.c.h.b16 %v2237
          %v2998 = vunpack.c.l.b16 %v2238
          %v2999 = vunpack.c.h.b16 %v2238
          %v3000 = vunpack.c.l.b16 %v2239
          %v3001 = vunpack.c.h.b16 %v2239
          %v3002 = vunpack.c.l.b16 %v2240
          %v3003 = vunpack.c.h.b16 %v2240
          %v3004 = vunpack.c.l.b16 %v2241
          %v3005 = vunpack.c.h.b16 %v2241
          %v3006 = vunpack.c.l.b16 %v2242
          %v3007 = vunpack.c.h.b16 %v2242
          %v3008 = vunpack.c.l.b16 %v2243
          %v3009 = vunpack.c.h.b16 %v2243
          %v3010 = vunpack.c.l.b16 %v2244
          %v3011 = vunpack.c.h.b16 %v2244
          %v3012 = vunpack.c.l.b16 %v2245
          %v3013 = vunpack.c.h.b16 %v2245
          %v3014 = vunpack.c.l.b16 %v2246
          %v3015 = vunpack.c.h.b16 %v2246
          %v3016 = vunpack.c.l.b16 %v2247
          %v3017 = vunpack.c.h.b16 %v2247
          %v3018 = vunpack.c.l.b16 %v2248
          %v3019 = vunpack.c.h.b16 %v2248
          %v3020 = vunpack.c.l.b16 %v2249
          %v3021 = vunpack.c.h.b16 %v2249
          %v3022 = vunpack.c.l.b16 %v2250
          %v3023 = vunpack.c.h.b16 %v2250
          %v3024 = vunpack.c.l.b16 %v2251
          %v3025 = vunpack.c.h.b16 %v2251
          %v3026 = vunpack.c.l.b16 %v2252
          %v3027 = vunpack.c.h.b16 %v2252
          %v3028 = vunpack.c.l.b16 %v2253
          %v3029 = vunpack.c.h.b16 %v2253
          %v3030 = vunpack.c.l.b16 %v2254
          %v3031 = vunpack.c.h.b16 %v2254
          %v3032 = vunpack.c.l.b16 %v2255
          %v3033 = vunpack.c.h.b16 %v2255
          %v3034 = vunpack.c.l.b16 %v2256
          %v3035 = vunpack.c.h.b16 %v2256
          %v3036 = vunpack.c.l.b16 %v2257
          %v3037 = vunpack.c.h.b16 %v2257
          %v3038 = vunpack.c.l.b16 %v2258
          %v3039 = vunpack.c.h.b16 %v2258
          %v3040 = vunpack.c.l.b16 %v2259
          %v3041 = vunpack.c.h.b16 %v2259
          %v3042 = vunpack.c.l.b16 %v2260
          %v3043 = vunpack.c.h.b16 %v2260
          %v3044 = vunpack.c.l.b16 %v2261
          %v3045 = vunpack.c.h.b16 %v2261
          %v3046 = vunpack.c.l.b16 %v2262
          %v3047 = vunpack.c.h.b16 %v2262
          %v3048 = vunpack.c.l.b16 %v2263
          %v3049 = vunpack.c.h.b16 %v2263
          %v3050 = vunpack.c.l.b16 %v2264
          %v3051 = vunpack.c.h.b16 %v2264
          %v3052 = vunpack.c.l.b16 %v2265
          %v3053 = vunpack.c.h.b16 %v2265
          %v3054 = vunpack.c.l.b16 %v2266
          %v3055 = vunpack.c.h.b16 %v2266
          %v3056 = vunpack.c.l.b16 %v2267
          %v3057 = vunpack.c.h.b16 %v2267
          %v3058 = vunpack.c.l.b16 %v2268
          %v3059 = vunpack.c.h.b16 %v2268
          %v3060 = vunpack.c.l.b16 %v2269
          %v3061 = vunpack.c.h.b16 %v2269
          %v3062 = vunpack.c.l.b16 %v2270
          %v3063 = vunpack.c.h.b16 %v2270
          %v3064 = vunpack.c.l.b16 %v2271
          %v3065 = vunpack.c.h.b16 %v2271
          %v3066 = vunpack.c.l.b16 %v2272
          %v3067 = vunpack.c.h.b16 %v2272
          %v3068 = vunpack.c.l.b16 %v2273
          %v3069 = vunpack.c.h.b16 %v2273
          %v3070 = vunpack.c.l.b16 %v2274
          %v3071 = vunpack.c.h.b16 %v2274
          %v3072 = vunpack.c.l.b16 %v2275
          %v3073 = vunpack.c.h.b16 %v2275
          %v3074 = vunpack.c.l.b16 %v2276
          %v3075 = vunpack.c.h.b16 %v2276
          %v3076 = vunpack.c.l.b16 %v2277
          %v3077 = vunpack.c.h.b16 %v2277
          %v3078 = vunpack.c.l.b16 %v2278
          %v3079 = vunpack.c.h.b16 %v2278
          %v3080 = vunpack.c.l.b16 %v2279
          %v3081 = vunpack.c.h.b16 %v2279
          %v3082 = vunpack.c.l.b16 %v2280
          %v3083 = vunpack.c.h.b16 %v2280
          %v3084 = vunpack.c.l.b16 %v2281
          %v3085 = vunpack.c.h.b16 %v2281
          %v3086 = vunpack.c.l.b16 %v2282
          %v3087 = vunpack.c.h.b16 %v2282
          %v3088 = vunpack.c.l.b16 %v2283
          %v3089 = vunpack.c.h.b16 %v2283
          %v3090 = vunpack.c.l.b16 %v2284
          %v3091 = vunpack.c.h.b16 %v2284
          %v3092 = vunpack.c.l.b16 %v2285
          %v3093 = vunpack.c.h.b16 %v2285
          %v3094 = vunpack.c.l.b16 %v2286
          %v3095 = vunpack.c.h.b16 %v2286
          %v3096 = vunpack.c.l.b16 %v2287
          %v3097 = vunpack.c.h.b16 %v2287
          %v3098 = vpack.c.b16 %v2594, %v2586
          %v3099 = vpack.c.b16 %v2595, %v2587
          %v3100 = vpack.c.b16 %v2596, %v2588
          %v3101 = vpack.c.b16 %v2597, %v2589
          %v3102 = vpack.c.b16 %v2598, %v2590
          %v3103 = vpack.c.b16 %v2599, %v2591
          %v3104 = vpack.c.b16 %v2600, %v2592
          %v3105 = vpack.c.b16 %v2601, %v2593
          %v3106 = vpack.c.b16 %v2610, %v2602
          %v3107 = vpack.c.b16 %v2611, %v2603
          %v3108 = vpack.c.b16 %v2612, %v2604
          %v3109 = vpack.c.b16 %v2613, %v2605
          %v3110 = vpack.c.b16 %v2614, %v2606
          %v3111 = vpack.c.b16 %v2615, %v2607
          %v3112 = vpack.c.b16 %v2616, %v2608
          %v3113 = vpack.c.b16 %v2617, %v2609
          %v3114 = vpack.c.b16 %v2626, %v2618
          %v3115 = vpack.c.b16 %v2627, %v2619
          %v3116 = vpack.c.b16 %v2628, %v2620
          %v3117 = vpack.c.b16 %v2629, %v2621
          %v3118 = vpack.c.b16 %v2630, %v2622
          %v3119 = vpack.c.b16 %v2631, %v2623
          %v3120 = vpack.c.b16 %v2632, %v2624
          %v3121 = vpack.c.b16 %v2633, %v2625
          %v3122 = vpack.c.b16 %v2642, %v2634
          %v3123 = vpack.c.b16 %v2643, %v2635
          %v3124 = vpack.c.b16 %v2644, %v2636
          %v3125 = vpack.c.b16 %v2645, %v2637
          %v3126 = vpack.c.b16 %v2646, %v2638
          %v3127 = vpack.c.b16 %v2647, %v2639
          %v3128 = vpack.c.b16 %v2648, %v2640
          %v3129 = vpack.c.b16 %v2649, %v2641
          %v3130 = vpack.c.b16 %v2658, %v2650
          %v3131 = vpack.c.b16 %v2659, %v2651
          %v3132 = vpack.c.b16 %v2660, %v2652
          %v3133 = vpack.c.b16 %v2661, %v2653
          %v3134 = vpack.c.b16 %v2662, %v2654
          %v3135 = vpack.c.b16 %v2663, %v2655
          %v3136 = vpack.c.b16 %v2664, %v2656
          %v3137 = vpack.c.b16 %v2665, %v2657
          %v3138 = vpack.c.b16 %v2674, %v2666
          %v3139 = vpack.c.b16 %v2675, %v2667
          %v3140 = vpack.c.b16 %v2676, %v2668
          %v3141 = vpack.c.b16 %v2677, %v2669
          %v3142 = vpack.c.b16 %v2678, %v2670
          %v3143 = vpack.c.b16 %v2679, %v2671
          %v3144 = vpack.c.b16 %v2680, %v2672
          %v3145 = vpack.c.b16 %v2681, %v2673
          %v3146 = vpack.c.b16 %v2690, %v2682
          %v3147 = vpack.c.b16 %v2691, %v2683
          %v3148 = vpack.c.b16 %v2692, %v2684
          %v3149 = vpack.c.b16 %v2693, %v2685
          %v3150 = vpack.c.b16 %v2694, %v2686
          %v3151 = vpack.c.b16 %v2695, %v2687
          %v3152 = vpack.c.b16 %v2696, %v2688
          %v3153 = vpack.c.b16 %v2697, %v2689
          %v3154 = vpack.c.b16 %v2706, %v2698
          %v3155 = vpack.c.b16 %v2707, %v2699
          %v3156 = vpack.c.b16 %v2708, %v2700
          %v3157 = vpack.c.b16 %v2709, %v2701
          %v3158 = vpack.c.b16 %v2710, %v2702
          %v3159 = vpack.c.b16 %v2711, %v2703
          %v3160 = vpack.c.b16 %v2712, %v2704
          %v3161 = vpack.c.b16 %v2713, %v2705
          %v3162 = vpack.c.b16 %v2722, %v2714
          %v3163 = vpack.c.b16 %v2723, %v2715
          %v3164 = vpack.c.b16 %v2724, %v2716
          %v3165 = vpack.c.b16 %v2725, %v2717
          %v3166 = vpack.c.b16 %v2726, %v2718
          %v3167 = vpack.c.b16 %v2727, %v2719
          %v3168 = vpack.c.b16 %v2728, %v2720
          %v3169 = vpack.c.b16 %v2729, %v2721
          %v3170 = vpack.c.b16 %v2738, %v2730
          %v3171 = vpack.c.b16 %v2739, %v2731
          %v3172 = vpack.c.b16 %v2740, %v2732
          %v3173 = vpack.c.b16 %v2741, %v2733
          %v3174 = vpack.c.b16 %v2742, %v2734
          %v3175 = vpack.c.b16 %v2743, %v2735
          %v3176 = vpack.c.b16 %v2744, %v2736
          %v3177 = vpack.c.b16 %v2745, %v2737
          %v3178 = vpack.c.b16 %v2754, %v2746
          %v3179 = vpack.c.b16 %v2755, %v2747
          %v3180 = vpack.c.b16 %v2756, %v2748
          %v3181 = vpack.c.b16 %v2757, %v2749
          %v3182 = vpack.c.b16 %v2758, %v2750
          %v3183 = vpack.c.b16 %v2759, %v2751
          %v3184 = vpack.c.b16 %v2760, %v2752
          %v3185 = vpack.c.b16 %v2761, %v2753
          %v3186 = vpack.c.b16 %v2770, %v2762
          %v3187 = vpack.c.b16 %v2771, %v2763
          %v3188 = vpack.c.b16 %v2772, %v2764
          %v3189 = vpack.c.b16 %v2773, %v2765
          %v3190 = vpack.c.b16 %v2774, %v2766
          %v3191 = vpack.c.b16 %v2775, %v2767
          %v3192 = vpack.c.b16 %v2776, %v2768
          %v3193 = vpack.c.b16 %v2777, %v2769
          %v3194 = vpack.c.b16 %v2786, %v2778
          %v3195 = vpack.c.b16 %v2787, %v2779
          %v3196 = vpack.c.b16 %v2788, %v2780
          %v3197 = vpack.c.b16 %v2789, %v2781
          %v3198 = vpack.c.b16 %v2790, %v2782
          %v3199 = vpack.c.b16 %v2791, %v2783
          %v3200 = vpack.c.b16 %v2792, %v2784
          %v3201 = vpack.c.b16 %v2793, %v2785
          %v3202 = vpack.c.b16 %v2802, %v2794
          %v3203 = vpack.c.b16 %v2803, %v2795
          %v3204 = vpack.c.b16 %v2804, %v2796
          %v3205 = vpack.c.b16 %v2805, %v2797
          %v3206 = vpack.c.b16 %v2806, %v2798
          %v3207 = vpack.c.b16 %v2807, %v2799
          %v3208 = vpack.c.b16 %v2808, %v2800
          %v3209 = vpack.c.b16 %v2809, %v2801
          %v3210 = vpack.c.b16 %v2818, %v2810
          %v3211 = vpack.c.b16 %v2819, %v2811
          %v3212 = vpack.c.b16 %v2820, %v2812
          %v3213 = vpack.c.b16 %v2821, %v2813
          %v3214 = vpack.c.b16 %v2822, %v2814
          %v3215 = vpack.c.b16 %v2823, %v2815
          %v3216 = vpack.c.b16 %v2824, %v2816
          %v3217 = vpack.c.b16 %v2825, %v2817
          %v3218 = vpack.c.b16 %v2834, %v2826
          %v3219 = vpack.c.b16 %v2835, %v2827
          %v3220 = vpack.c.b16 %v2836, %v2828
          %v3221 = vpack.c.b16 %v2837, %v2829
          %v3222 = vpack.c.b16 %v2838, %v2830
          %v3223 = vpack.c.b16 %v2839, %v2831
          %v3224 = vpack.c.b16 %v2840, %v2832
          %v3225 = vpack.c.b16 %v2841, %v2833
          %v3226 = vpack.c.b16 %v2850, %v2842
          %v3227 = vpack.c.b16 %v2851, %v2843
          %v3228 = vpack.c.b16 %v2852, %v2844
          %v3229 = vpack.c.b16 %v2853, %v2845
          %v3230 = vpack.c.b16 %v2854, %v2846
          %v3231 = vpack.c.b16 %v2855, %v2847
          %v3232 = vpack.c.b16 %v2856, %v2848
          %v3233 = vpack.c.b16 %v2857, %v2849
          %v3234 = vpack.c.b16 %v2866, %v2858
          %v3235 = vpack.c.b16 %v2867, %v2859
          %v3236 = vpack.c.b16 %v2868, %v2860
          %v3237 = vpack.c.b16 %v2869, %v2861
          %v3238 = vpack.c.b16 %v2870, %v2862
          %v3239 = vpack.c.b16 %v2871, %v2863
          %v3240 = vpack.c.b16 %v2872, %v2864
          %v3241 = vpack.c.b16 %v2873, %v2865
          %v3242 = vpack.c.b16 %v2882, %v2874
          %v3243 = vpack.c.b16 %v2883, %v2875
          %v3244 = vpack.c.b16 %v2884, %v2876
          %v3245 = vpack.c.b16 %v2885, %v2877
          %v3246 = vpack.c.b16 %v2886, %v2878
          %v3247 = vpack.c.b16 %v2887, %v2879
          %v3248 = vpack.c.b16 %v2888, %v2880
          %v3249 = vpack.c.b16 %v2889, %v2881
          %v3250 = vpack.c.b16 %v2898, %v2890
          %v3251 = vpack.c.b16 %v2899, %v2891
          %v3252 = vpack.c.b16 %v2900, %v2892
          %v3253 = vpack.c.b16 %v2901, %v2893
          %v3254 = vpack.c.b16 %v2902, %v2894
          %v3255 = vpack.c.b16 %v2903, %v2895
          %v3256 = vpack.c.b16 %v2904, %v2896
          %v3257 = vpack.c.b16 %v2905, %v2897
          %v3258 = vpack.c.b16 %v2914, %v2906
          %v3259 = vpack.c.b16 %v2915, %v2907
          %v3260 = vpack.c.b16 %v2916, %v2908
          %v3261 = vpack.c.b16 %v2917, %v2909
          %v3262 = vpack.c.b16 %v2918, %v2910
          %v3263 = vpack.c.b16 %v2919, %v2911
          %v3264 = vpack.c.b16 %v2920, %v2912
          %v3265 = vpack.c.b16 %v2921, %v2913
          %v3266 = vpack.c.b16 %v2930, %v2922
          %v3267 = vpack.c.b16 %v2931, %v2923
          %v3268 = vpack.c.b16 %v2932, %v2924
          %v3269 = vpack.c.b16 %v2933, %v2925
          %v3270 = vpack.c.b16 %v2934, %v2926
          %v3271 = vpack.c.b16 %v2935, %v2927
          %v3272 = vpack.c.b16 %v2936, %v2928
          %v3273 = vpack.c.b16 %v2937, %v2929
          %v3274 = vpack.c.b16 %v2946, %v2938
          %v3275 = vpack.c.b16 %v2947, %v2939
          %v3276 = vpack.c.b16 %v2948, %v2940
          %v3277 = vpack.c.b16 %v2949, %v2941
          %v3278 = vpack.c.b16 %v2950, %v2942
          %v3279 = vpack.c.b16 %v2951, %v2943
          %v3280 = vpack.c.b16 %v2952, %v2944
          %v3281 = vpack.c.b16 %v2953, %v2945
          %v3282 = vpack.c.b16 %v2962, %v2954
          %v3283 = vpack.c.b16 %v2963, %v2955
          %v3284 = vpack.c.b16 %v2964, %v2956
          %v3285 = vpack.c.b16 %v2965, %v2957
          %v3286 = vpack.c.b16 %v2966, %v2958
          %v3287 = vpack.c.b16 %v2967, %v2959
          %v3288 = vpack.c.b16 %v2968, %v2960
          %v3289 = vpack.c.b16 %v2969, %v2961
          %v3290 = vpack.c.b16 %v2978, %v2970
          %v3291 = vpack.c.b16 %v2979, %v2971
          %v3292 = vpack.c.b16 %v2980, %v2972
          %v3293 = vpack.c.b16 %v2981, %v2973
          %v3294 = vpack.c.b16 %v2982, %v2974
          %v3295 = vpack.c.b16 %v2983, %v2975
          %v3296 = vpack.c.b16 %v2984, %v2976
          %v3297 = vpack.c.b16 %v2985, %v2977
          %v3298 = vpack.c.b16 %v2994, %v2986
          %v3299 = vpack.c.b16 %v2995, %v2987
          %v3300 = vpack.c.b16 %v2996, %v2988
          %v3301 = vpack.c.b16 %v2997, %v2989
          %v3302 = vpack.c.b16 %v2998, %v2990
          %v3303 = vpack.c.b16 %v2999, %v2991
          %v3304 = vpack.c.b16 %v3000, %v2992
          %v3305 = vpack.c.b16 %v3001, %v2993
          %v3306 = vpack.c.b16 %v3010, %v3002
          %v3307 = vpack.c.b16 %v3011, %v3003
          %v3308 = vpack.c.b16 %v3012, %v3004
          %v3309 = vpack.c.b16 %v3013, %v3005
          %v3310 = vpack.c.b16 %v3014, %v3006
          %v3311 = vpack.c.b16 %v3015, %v3007
          %v3312 = vpack.c.b16 %v3016, %v3008
          %v3313 = vpack.c.b16 %v3017, %v3009
          %v3314 = vpack.c.b16 %v3026, %v3018
          %v3315 = vpack.c.b16 %v3027, %v3019
          %v3316 = vpack.c.b16 %v3028, %v3020
          %v3317 = vpack.c.b16 %v3029, %v3021
          %v3318 = vpack.c.b16 %v3030, %v3022
          %v3319 = vpack.c.b16 %v3031, %v3023
          %v3320 = vpack.c.b16 %v3032, %v3024
          %v3321 = vpack.c.b16 %v3033, %v3025
          %v3322 = vpack.c.b16 %v3042, %v3034
          %v3323 = vpack.c.b16 %v3043, %v3035
          %v3324 = vpack.c.b16 %v3044, %v3036
          %v3325 = vpack.c.b16 %v3045, %v3037
          %v3326 = vpack.c.b16 %v3046, %v3038
          %v3327 = vpack.c.b16 %v3047, %v3039
          %v3328 = vpack.c.b16 %v3048, %v3040
          %v3329 = vpack.c.b16 %v3049, %v3041
          %v3330 = vpack.c.b16 %v3058, %v3050
          %v3331 = vpack.c.b16 %v3059, %v3051
          %v3332 = vpack.c.b16 %v3060, %v3052
          %v3333 = vpack.c.b16 %v3061, %v3053
          %v3334 = vpack.c.b16 %v3062, %v3054
          %v3335 = vpack.c.b16 %v3063, %v3055
          %v3336 = vpack.c.b16 %v3064, %v3056
          %v3337 = vpack.c.b16 %v3065, %v3057
          %v3338 = vpack.c.b16 %v3074, %v3066
          %v3339 = vpack.c.b16 %v3075, %v3067
          %v3340 = vpack.c.b16 %v3076, %v3068
          %v3341 = vpack.c.b16 %v3077, %v3069
          %v3342 = vpack.c.b16 %v3078, %v3070
          %v3343 = vpack.c.b16 %v3079, %v3071
          %v3344 = vpack.c.b16 %v3080, %v3072
          %v3345 = vpack.c.b16 %v3081, %v3073
          %v3346 = vpack.c.b16 %v3090, %v3082
          %v3347 = vpack.c.b16 %v3091, %v3083
          %v3348 = vpack.c.b16 %v3092, %v3084
          %v3349 = vpack.c.b16 %v3093, %v3085
          %v3350 = vpack.c.b16 %v3094, %v3086
          %v3351 = vpack.c.b16 %v3095, %v3087
          %v3352 = vpack.c.b16 %v3096, %v3088
          %v3353 = vpack.c.b16 %v3097, %v3089
          %3610 = vmatprep.subr.bf16.mxu0 %v3155
          %3611 = vmatpush1.bf16.msra.mxu0 %v3154
          %3612 = vmatprep.subr.bf16.mxu0 %v3147
          %3613 = vmatpush1.bf16.msra.mxu0 %v3146
          %3614 = vmatprep.subr.bf16.mxu0 %v3139
          %3615 = vmatpush1.bf16.msra.mxu0 %v3138
          %3616 = vmatprep.subr.bf16.mxu0 %v3131
          %3617 = vmatpush1.bf16.msra.mxu0 %v3130
          %3618 = vmatprep.subr.bf16.mxu0 %v3123
          %3619 = vmatpush1.bf16.msra.mxu0 %v3122
          %3620 = vmatprep.subr.bf16.mxu0 %v3115
          %3621 = vmatpush1.bf16.msra.mxu0 %v3114
          %3622 = vmatprep.subr.bf16.mxu0 %v3107
          %3623 = vmatpush1.bf16.msra.mxu0 %v3106
          %3624 = vmatprep.subr.bf16.mxu0 %v3099
          %3625 = vmatpush1.bf16.msra.mxu0 %v3098
          %3626 = vmatprep.subr.bf16.mxu0 %v3219
          %3627 = vmatpush2.bf16.msra.mxu0 %v3218
          %3628 = vmatprep.subr.bf16.mxu0 %v3211
          %3629 = vmatpush2.bf16.msra.mxu0 %v3210
          %3630 = vmatprep.subr.bf16.mxu0 %v3203
          %3631 = vmatpush2.bf16.msra.mxu0 %v3202
          %3632 = vmatprep.subr.bf16.mxu0 %v3195
          %3633 = vmatpush2.bf16.msra.mxu0 %v3194
          %3634 = vmatprep.subr.bf16.mxu0 %v3187
          %3635 = vmatpush2.bf16.msra.mxu0 %v3186
          %3636 = vmatprep.subr.bf16.mxu0 %v3179
          %3637 = vmatpush2.bf16.msra.mxu0 %v3178
          %3638 = vmatprep.subr.bf16.mxu0 %v3171
          %3639 = vmatpush2.bf16.msra.mxu0 %v3170
          %3640 = vmatprep.subr.bf16.mxu0 %v3163
          %3641 = vmatpush2.bf16.msra.mxu0 %v3162
          %3642 = vmatprep.mubr.bf16.mxu0 %v2025
          %3643 = vmatmul.mubr.bf16.gmra.mxu0 %v2024
          %v3644 = vpop.f32.mrf.mxu0
          %v3645 = vadd.f32 %v2293, %v3644
          %v3646 = vpop.f32.mrf.mxu0
          %v3647 = vadd.f32 %v2297, %v3646
          %v3648 = vpop.f32.mrf.mxu0
          %v3649 = vadd.f32 %v2293, %v3648
          %v3650 = vpop.f32.mrf.mxu0
          %v3651 = vadd.f32 %v2297, %v3650
          %3652 = vmatprep.mubr.bf16.mxu0 %v2029
          %3653 = vmatmul.mubr.bf16.gmra.mxu0 %v2028
          %v3654 = vpop.f32.mrf.mxu0
          %v3655 = vadd.f32 %v2293, %v3654
          %v3656 = vpop.f32.mrf.mxu0
          %v3657 = vadd.f32 %v2297, %v3656
          %v3658 = vpop.f32.mrf.mxu0
          %v3659 = vadd.f32 %v2293, %v3658
          %v3660 = vpop.f32.mrf.mxu0
          %v3661 = vadd.f32 %v2297, %v3660
          %3662 = vdwg.mxu0
          %3663 = vmatprep.subr.bf16.mxu0 %v3283
          %3664 = vmatpush1.bf16.msra.mxu0 %v3282
          %3665 = vmatprep.subr.bf16.mxu0 %v3275
          %3666 = vmatpush1.bf16.msra.mxu0 %v3274
          %3667 = vmatprep.subr.bf16.mxu0 %v3267
          %3668 = vmatpush1.bf16.msra.mxu0 %v3266
          %3669 = vmatprep.subr.bf16.mxu0 %v3259
          %3670 = vmatpush1.bf16.msra.mxu0 %v3258
          %3671 = vmatprep.subr.bf16.mxu0 %v3251
          %3672 = vmatpush1.bf16.msra.mxu0 %v3250
          %3673 = vmatprep.subr.bf16.mxu0 %v3243
          %3674 = vmatpush1.bf16.msra.mxu0 %v3242
          %3675 = vmatprep.subr.bf16.mxu0 %v3235
          %3676 = vmatpush1.bf16.msra.mxu0 %v3234
          %3677 = vmatprep.subr.bf16.mxu0 %v3227
          %3678 = vmatpush1.bf16.msra.mxu0 %v3226
          %3679 = vmatprep.subr.bf16.mxu0 %v3347
          %3680 = vmatpush2.bf16.msra.mxu0 %v3346
          %3681 = vmatprep.subr.bf16.mxu0 %v3339
          %3682 = vmatpush2.bf16.msra.mxu0 %v3338
          %3683 = vmatprep.subr.bf16.mxu0 %v3331
          %3684 = vmatpush2.bf16.msra.mxu0 %v3330
          %3685 = vmatprep.subr.bf16.mxu0 %v3323
          %3686 = vmatpush2.bf16.msra.mxu0 %v3322
          %3687 = vmatprep.subr.bf16.mxu0 %v3315
          %3688 = vmatpush2.bf16.msra.mxu0 %v3314
          %3689 = vmatprep.subr.bf16.mxu0 %v3307
          %3690 = vmatpush2.bf16.msra.mxu0 %v3306
          %3691 = vmatprep.subr.bf16.mxu0 %v3299
          %3692 = vmatpush2.bf16.msra.mxu0 %v3298
          %3693 = vmatprep.subr.bf16.mxu0 %v3291
          %3694 = vmatpush2.bf16.msra.mxu0 %v3290
          %3695 = vmatprep.mubr.bf16.mxu0 %v2027
          %3696 = vmatmul.mubr.bf16.gmra.mxu0 %v2026
          %v3697 = vpop.f32.mrf.mxu0
          %v3698 = vadd.f32 %v3645, %v3697
          %v3699 = vpop.f32.mrf.mxu0
          %v3700 = vadd.f32 %v3647, %v3699
          %v3701 = vpop.f32.mrf.mxu0
          %v3702 = vadd.f32 %v3649, %v3701
          %v3703 = vpop.f32.mrf.mxu0
          %v3704 = vadd.f32 %v3651, %v3703
          %3705 = vmatprep.mubr.bf16.mxu0 %v2031
          %3706 = vmatmul.mubr.bf16.gmra.mxu0 %v2030
          %v3707 = vpop.f32.mrf.mxu0
          %v3708 = vadd.f32 %v3655, %v3707
          %v3709 = vpop.f32.mrf.mxu0
          %v3710 = vadd.f32 %v3657, %v3709
          %v3711 = vpop.f32.mrf.mxu0
          %v3712 = vadd.f32 %v3659, %v3711
          %v3713 = vpop.f32.mrf.mxu0
          %v3714 = vadd.f32 %v3661, %v3713
          %3715 = vdwg.mxu0
          %3716 = vmatprep.subr.bf16.mxu0 %v3157
          %3717 = vmatpush1.bf16.msra.mxu0 %v3156
          %3718 = vmatprep.subr.bf16.mxu0 %v3149
          %3719 = vmatpush1.bf16.msra.mxu0 %v3148
          %3720 = vmatprep.subr.bf16.mxu0 %v3141
          %3721 = vmatpush1.bf16.msra.mxu0 %v3140
          %3722 = vmatprep.subr.bf16.mxu0 %v3133
          %3723 = vmatpush1.bf16.msra.mxu0 %v3132
          %3724 = vmatprep.subr.bf16.mxu0 %v3125
          %3725 = vmatpush1.bf16.msra.mxu0 %v3124
          %3726 = vmatprep.subr.bf16.mxu0 %v3117
          %3727 = vmatpush1.bf16.msra.mxu0 %v3116
          %3728 = vmatprep.subr.bf16.mxu0 %v3109
          %3729 = vmatpush1.bf16.msra.mxu0 %v3108
          %3730 = vmatprep.subr.bf16.mxu0 %v3101
          %3731 = vmatpush1.bf16.msra.mxu0 %v3100
          %3732 = vmatprep.subr.bf16.mxu0 %v3221
          %3733 = vmatpush2.bf16.msra.mxu0 %v3220
          %3734 = vmatprep.subr.bf16.mxu0 %v3213
          %3735 = vmatpush2.bf16.msra.mxu0 %v3212
          %3736 = vmatprep.subr.bf16.mxu0 %v3205
          %3737 = vmatpush2.bf16.msra.mxu0 %v3204
          %3738 = vmatprep.subr.bf16.mxu0 %v3197
          %3739 = vmatpush2.bf16.msra.mxu0 %v3196
          %3740 = vmatprep.subr.bf16.mxu0 %v3189
          %3741 = vmatpush2.bf16.msra.mxu0 %v3188
          %3742 = vmatprep.subr.bf16.mxu0 %v3181
          %3743 = vmatpush2.bf16.msra.mxu0 %v3180
          %3744 = vmatprep.subr.bf16.mxu0 %v3173
          %3745 = vmatpush2.bf16.msra.mxu0 %v3172
          %3746 = vmatprep.subr.bf16.mxu0 %v3165
          %3747 = vmatpush2.bf16.msra.mxu0 %v3164
          %3748 = vmatprep.mubr.bf16.mxu0 %v2025
          %3749 = vmatmul.mubr.bf16.gmra.mxu0 %v2024
          %v3750 = vpop.f32.mrf.mxu0
          %v3751 = vadd.f32 %v2301, %v3750
          %v3752 = vpop.f32.mrf.mxu0
          %v3753 = vadd.f32 %v2305, %v3752
          %v3754 = vpop.f32.mrf.mxu0
          %v3755 = vadd.f32 %v2301, %v3754
          %v3756 = vpop.f32.mrf.mxu0
          %v3757 = vadd.f32 %v2305, %v3756
          %3758 = vmatprep.mubr.bf16.mxu0 %v2029
          %3759 = vmatmul.mubr.bf16.gmra.mxu0 %v2028
          %v3760 = vpop.f32.mrf.mxu0
          %v3761 = vadd.f32 %v2301, %v3760
          %v3762 = vpop.f32.mrf.mxu0
          %v3763 = vadd.f32 %v2305, %v3762
          %v3764 = vpop.f32.mrf.mxu0
          %v3765 = vadd.f32 %v2301, %v3764
          %v3766 = vpop.f32.mrf.mxu0
          %v3767 = vadd.f32 %v2305, %v3766
          %3768 = vdwg.mxu0
          %3769 = vmatprep.subr.bf16.mxu0 %v3285
          %3770 = vmatpush1.bf16.msra.mxu0 %v3284
          %3771 = vmatprep.subr.bf16.mxu0 %v3277
          %3772 = vmatpush1.bf16.msra.mxu0 %v3276
          %3773 = vmatprep.subr.bf16.mxu0 %v3269
          %3774 = vmatpush1.bf16.msra.mxu0 %v3268
          %3775 = vmatprep.subr.bf16.mxu0 %v3261
          %3776 = vmatpush1.bf16.msra.mxu0 %v3260
          %3777 = vmatprep.subr.bf16.mxu0 %v3253
          %3778 = vmatpush1.bf16.msra.mxu0 %v3252
          %3779 = vmatprep.subr.bf16.mxu0 %v3245
          %3780 = vmatpush1.bf16.msra.mxu0 %v3244
          %3781 = vmatprep.subr.bf16.mxu0 %v3237
          %3782 = vmatpush1.bf16.msra.mxu0 %v3236
          %3783 = vmatprep.subr.bf16.mxu0 %v3229
          %3784 = vmatpush1.bf16.msra.mxu0 %v3228
          %3785 = vmatprep.subr.bf16.mxu0 %v3349
          %3786 = vmatpush2.bf16.msra.mxu0 %v3348
          %3787 = vmatprep.subr.bf16.mxu0 %v3341
          %3788 = vmatpush2.bf16.msra.mxu0 %v3340
          %3789 = vmatprep.subr.bf16.mxu0 %v3333
          %3790 = vmatpush2.bf16.msra.mxu0 %v3332
          %3791 = vmatprep.subr.bf16.mxu0 %v3325
          %3792 = vmatpush2.bf16.msra.mxu0 %v3324
          %3793 = vmatprep.subr.bf16.mxu0 %v3317
          %3794 = vmatpush2.bf16.msra.mxu0 %v3316
          %3795 = vmatprep.subr.bf16.mxu0 %v3309
          %3796 = vmatpush2.bf16.msra.mxu0 %v3308
          %3797 = vmatprep.subr.bf16.mxu0 %v3301
          %3798 = vmatpush2.bf16.msra.mxu0 %v3300
          %3799 = vmatprep.subr.bf16.mxu0 %v3293
          %3800 = vmatpush2.bf16.msra.mxu0 %v3292
          %3801 = vmatprep.mubr.bf16.mxu0 %v2027
          %3802 = vmatmul.mubr.bf16.gmra.mxu0 %v2026
          %v3803 = vpop.f32.mrf.mxu0
          %v3804 = vadd.f32 %v3751, %v3803
          %v3805 = vpop.f32.mrf.mxu0
          %v3806 = vadd.f32 %v3753, %v3805
          %v3807 = vpop.f32.mrf.mxu0
          %v3808 = vadd.f32 %v3755, %v3807
          %v3809 = vpop.f32.mrf.mxu0
          %v3810 = vadd.f32 %v3757, %v3809
          %3811 = vmatprep.mubr.bf16.mxu0 %v2031
          %3812 = vmatmul.mubr.bf16.gmra.mxu0 %v2030
          %v3813 = vpop.f32.mrf.mxu0
          %v3814 = vadd.f32 %v3761, %v3813
          %v3815 = vpop.f32.mrf.mxu0
          %v3816 = vadd.f32 %v3763, %v3815
          %v3817 = vpop.f32.mrf.mxu0
          %v3818 = vadd.f32 %v3765, %v3817
          %v3819 = vpop.f32.mrf.mxu0
          %v3820 = vadd.f32 %v3767, %v3819
          %3821 = vdwg.mxu0
          %3822 = vmatprep.subr.bf16.mxu0 %v3159
          %3823 = vmatpush1.bf16.msra.mxu0 %v3158
          %3824 = vmatprep.subr.bf16.mxu0 %v3151
          %3825 = vmatpush1.bf16.msra.mxu0 %v3150
          %3826 = vmatprep.subr.bf16.mxu0 %v3143
          %3827 = vmatpush1.bf16.msra.mxu0 %v3142
          %3828 = vmatprep.subr.bf16.mxu0 %v3135
          %3829 = vmatpush1.bf16.msra.mxu0 %v3134
          %3830 = vmatprep.subr.bf16.mxu0 %v3127
          %3831 = vmatpush1.bf16.msra.mxu0 %v3126
          %3832 = vmatprep.subr.bf16.mxu0 %v3119
          %3833 = vmatpush1.bf16.msra.mxu0 %v3118
          %3834 = vmatprep.subr.bf16.mxu0 %v3111
          %3835 = vmatpush1.bf16.msra.mxu0 %v3110
          %3836 = vmatprep.subr.bf16.mxu0 %v3103
          %3837 = vmatpush1.bf16.msra.mxu0 %v3102
          %3838 = vmatprep.subr.bf16.mxu0 %v3223
          %3839 = vmatpush2.bf16.msra.mxu0 %v3222
          %3840 = vmatprep.subr.bf16.mxu0 %v3215
          %3841 = vmatpush2.bf16.msra.mxu0 %v3214
          %3842 = vmatprep.subr.bf16.mxu0 %v3207
          %3843 = vmatpush2.bf16.msra.mxu0 %v3206
          %3844 = vmatprep.subr.bf16.mxu0 %v3199
          %3845 = vmatpush2.bf16.msra.mxu0 %v3198
          %3846 = vmatprep.subr.bf16.mxu0 %v3191
          %3847 = vmatpush2.bf16.msra.mxu0 %v3190
          %3848 = vmatprep.subr.bf16.mxu0 %v3183
          %3849 = vmatpush2.bf16.msra.mxu0 %v3182
          %3850 = vmatprep.subr.bf16.mxu0 %v3175
          %3851 = vmatpush2.bf16.msra.mxu0 %v3174
          %3852 = vmatprep.subr.bf16.mxu0 %v3167
          %3853 = vmatpush2.bf16.msra.mxu0 %v3166
          %3854 = vmatprep.mubr.bf16.mxu0 %v2025
          %3855 = vmatmul.mubr.bf16.gmra.mxu0 %v2024
          %v3856 = vpop.f32.mrf.mxu0
          %v3857 = vadd.f32 %v2309, %v3856
          %v3858 = vpop.f32.mrf.mxu0
          %v3859 = vadd.f32 %v2313, %v3858
          %v3860 = vpop.f32.mrf.mxu0
          %v3861 = vadd.f32 %v2309, %v3860
          %v3862 = vpop.f32.mrf.mxu0
          %v3863 = vadd.f32 %v2313, %v3862
          %3864 = vmatprep.mubr.bf16.mxu0 %v2029
          %3865 = vmatmul.mubr.bf16.gmra.mxu0 %v2028
          %v3866 = vpop.f32.mrf.mxu0
          %v3867 = vadd.f32 %v2309, %v3866
          %v3868 = vpop.f32.mrf.mxu0
          %v3869 = vadd.f32 %v2313, %v3868
          %v3870 = vpop.f32.mrf.mxu0
          %v3871 = vadd.f32 %v2309, %v3870
          %v3872 = vpop.f32.mrf.mxu0
          %v3873 = vadd.f32 %v2313, %v3872
          %3874 = vdwg.mxu0
          %3875 = vmatprep.subr.bf16.mxu0 %v3287
          %3876 = vmatpush1.bf16.msra.mxu0 %v3286
          %3877 = vmatprep.subr.bf16.mxu0 %v3279
          %3878 = vmatpush1.bf16.msra.mxu0 %v3278
          %3879 = vmatprep.subr.bf16.mxu0 %v3271
          %3880 = vmatpush1.bf16.msra.mxu0 %v3270
          %3881 = vmatprep.subr.bf16.mxu0 %v3263
          %3882 = vmatpush1.bf16.msra.mxu0 %v3262
          %3883 = vmatprep.subr.bf16.mxu0 %v3255
          %3884 = vmatpush1.bf16.msra.mxu0 %v3254
          %3885 = vmatprep.subr.bf16.mxu0 %v3247
          %3886 = vmatpush1.bf16.msra.mxu0 %v3246
          %3887 = vmatprep.subr.bf16.mxu0 %v3239
          %3888 = vmatpush1.bf16.msra.mxu0 %v3238
          %3889 = vmatprep.subr.bf16.mxu0 %v3231
          %3890 = vmatpush1.bf16.msra.mxu0 %v3230
          %3891 = vmatprep.subr.bf16.mxu0 %v3351
          %3892 = vmatpush2.bf16.msra.mxu0 %v3350
          %3893 = vmatprep.subr.bf16.mxu0 %v3343
          %3894 = vmatpush2.bf16.msra.mxu0 %v3342
          %3895 = vmatprep.subr.bf16.mxu0 %v3335
          %3896 = vmatpush2.bf16.msra.mxu0 %v3334
          %3897 = vmatprep.subr.bf16.mxu0 %v3327
          %3898 = vmatpush2.bf16.msra.mxu0 %v3326
          %3899 = vmatprep.subr.bf16.mxu0 %v3319
          %3900 = vmatpush2.bf16.msra.mxu0 %v3318
          %3901 = vmatprep.subr.bf16.mxu0 %v3311
          %3902 = vmatpush2.bf16.msra.mxu0 %v3310
          %3903 = vmatprep.subr.bf16.mxu0 %v3303
          %3904 = vmatpush2.bf16.msra.mxu0 %v3302
          %3905 = vmatprep.subr.bf16.mxu0 %v3295
          %3906 = vmatpush2.bf16.msra.mxu0 %v3294
          %3907 = vmatprep.mubr.bf16.mxu0 %v2027
          %3908 = vmatmul.mubr.bf16.gmra.mxu0 %v2026
          %v3909 = vpop.f32.mrf.mxu0
          %v3910 = vadd.f32 %v3857, %v3909
          %v3911 = vpop.f32.mrf.mxu0
          %v3912 = vadd.f32 %v3859, %v3911
          %v3913 = vpop.f32.mrf.mxu0
          %v3914 = vadd.f32 %v3861, %v3913
          %v3915 = vpop.f32.mrf.mxu0
          %v3916 = vadd.f32 %v3863, %v3915
          %3917 = vmatprep.mubr.bf16.mxu0 %v2031
          %3918 = vmatmul.mubr.bf16.gmra.mxu0 %v2030
          %v3919 = vpop.f32.mrf.mxu0
          %v3920 = vadd.f32 %v3867, %v3919
          %v3921 = vpop.f32.mrf.mxu0
          %v3922 = vadd.f32 %v3869, %v3921
          %v3923 = vpop.f32.mrf.mxu0
          %v3924 = vadd.f32 %v3871, %v3923
          %v3925 = vpop.f32.mrf.mxu0
          %v3926 = vadd.f32 %v3873, %v3925
          %3927 = vdwg.mxu0
          %3928 = vmatprep.subr.bf16.mxu0 %v3161
          %3929 = vmatpush1.bf16.msra.mxu0 %v3160
          %3930 = vmatprep.subr.bf16.mxu0 %v3153
          %3931 = vmatpush1.bf16.msra.mxu0 %v3152
          %3932 = vmatprep.subr.bf16.mxu0 %v3145
          %3933 = vmatpush1.bf16.msra.mxu0 %v3144
          %3934 = vmatprep.subr.bf16.mxu0 %v3137
          %3935 = vmatpush1.bf16.msra.mxu0 %v3136
          %3936 = vmatprep.subr.bf16.mxu0 %v3129
          %3937 = vmatpush1.bf16.msra.mxu0 %v3128
          %3938 = vmatprep.subr.bf16.mxu0 %v3121
          %3939 = vmatpush1.bf16.msra.mxu0 %v3120
          %3940 = vmatprep.subr.bf16.mxu0 %v3113
          %3941 = vmatpush1.bf16.msra.mxu0 %v3112
          %3942 = vmatprep.subr.bf16.mxu0 %v3105
          %3943 = vmatpush1.bf16.msra.mxu0 %v3104
          %3944 = vmatprep.subr.bf16.mxu0 %v3225
          %3945 = vmatpush2.bf16.msra.mxu0 %v3224
          %3946 = vmatprep.subr.bf16.mxu0 %v3217
          %3947 = vmatpush2.bf16.msra.mxu0 %v3216
          %3948 = vmatprep.subr.bf16.mxu0 %v3209
          %3949 = vmatpush2.bf16.msra.mxu0 %v3208
          %3950 = vmatprep.subr.bf16.mxu0 %v3201
          %3951 = vmatpush2.bf16.msra.mxu0 %v3200
          %3952 = vmatprep.subr.bf16.mxu0 %v3193
          %3953 = vmatpush2.bf16.msra.mxu0 %v3192
          %3954 = vmatprep.subr.bf16.mxu0 %v3185
          %3955 = vmatpush2.bf16.msra.mxu0 %v3184
          %3956 = vmatprep.subr.bf16.mxu0 %v3177
          %3957 = vmatpush2.bf16.msra.mxu0 %v3176
          %3958 = vmatprep.subr.bf16.mxu0 %v3169
          %3959 = vmatpush2.bf16.msra.mxu0 %v3168
          %3960 = vmatprep.mubr.bf16.mxu0 %v2025
          %3961 = vmatmul.mubr.bf16.gmra.mxu0 %v2024
          %v3962 = vpop.f32.mrf.mxu0
          %v3963 = vadd.f32 %v2317, %v3962
          %v3964 = vpop.f32.mrf.mxu0
          %v3965 = vadd.f32 %v2321, %v3964
          %v3966 = vpop.f32.mrf.mxu0
          %v3967 = vadd.f32 %v2317, %v3966
          %v3968 = vpop.f32.mrf.mxu0
          %v3969 = vadd.f32 %v2321, %v3968
          %3970 = vmatprep.mubr.bf16.mxu0 %v2029
          %3971 = vmatmul.mubr.bf16.gmra.mxu0 %v2028
          %v3972 = vpop.f32.mrf.mxu0
          %v3973 = vadd.f32 %v2317, %v3972
          %v3974 = vpop.f32.mrf.mxu0
          %v3975 = vadd.f32 %v2321, %v3974
          %v3976 = vpop.f32.mrf.mxu0
          %v3977 = vadd.f32 %v2317, %v3976
          %v3978 = vpop.f32.mrf.mxu0
          %v3979 = vadd.f32 %v2321, %v3978
          %3980 = vdwg.mxu0
          %3981 = vmatprep.subr.bf16.mxu0 %v3289
          %3982 = vmatpush1.bf16.msra.mxu0 %v3288
          %3983 = vmatprep.subr.bf16.mxu0 %v3281
          %3984 = vmatpush1.bf16.msra.mxu0 %v3280
          %3985 = vmatprep.subr.bf16.mxu0 %v3273
          %3986 = vmatpush1.bf16.msra.mxu0 %v3272
          %3987 = vmatprep.subr.bf16.mxu0 %v3265
          %3988 = vmatpush1.bf16.msra.mxu0 %v3264
          %3989 = vmatprep.subr.bf16.mxu0 %v3257
          %3990 = vmatpush1.bf16.msra.mxu0 %v3256
          %3991 = vmatprep.subr.bf16.mxu0 %v3249
          %3992 = vmatpush1.bf16.msra.mxu0 %v3248
          %3993 = vmatprep.subr.bf16.mxu0 %v3241
          %3994 = vmatpush1.bf16.msra.mxu0 %v3240
          %3995 = vmatprep.subr.bf16.mxu0 %v3233
          %3996 = vmatpush1.bf16.msra.mxu0 %v3232
          %3997 = vmatprep.subr.bf16.mxu0 %v3353
          %3998 = vmatpush2.bf16.msra.mxu0 %v3352
          %3999 = vmatprep.subr.bf16.mxu0 %v3345
          %4000 = vmatpush2.bf16.msra.mxu0 %v3344
          %4001 = vmatprep.subr.bf16.mxu0 %v3337
          %4002 = vmatpush2.bf16.msra.mxu0 %v3336
          %4003 = vmatprep.subr.bf16.mxu0 %v3329
          %4004 = vmatpush2.bf16.msra.mxu0 %v3328
          %4005 = vmatprep.subr.bf16.mxu0 %v3321
          %4006 = vmatpush2.bf16.msra.mxu0 %v3320
          %4007 = vmatprep.subr.bf16.mxu0 %v3313
          %4008 = vmatpush2.bf16.msra.mxu0 %v3312
          %4009 = vmatprep.subr.bf16.mxu0 %v3305
          %4010 = vmatpush2.bf16.msra.mxu0 %v3304
          %4011 = vmatprep.subr.bf16.mxu0 %v3297
          %4012 = vmatpush2.bf16.msra.mxu0 %v3296
          %4013 = vmatprep.mubr.bf16.mxu0 %v2027
          %4014 = vmatmul.mubr.bf16.gmra.mxu0 %v2026
          %v4015 = vpop.f32.mrf.mxu0
          %v4016 = vadd.f32 %v3963, %v4015
          %v4017 = vpop.f32.mrf.mxu0
          %v4018 = vadd.f32 %v3965, %v4017
          %v4019 = vpop.f32.mrf.mxu0
          %v4020 = vadd.f32 %v3967, %v4019
          %v4021 = vpop.f32.mrf.mxu0
          %v4022 = vadd.f32 %v3969, %v4021
          %4023 = vmatprep.mubr.bf16.mxu0 %v2031
          %4024 = vmatmul.mubr.bf16.gmra.mxu0 %v2030
          %v4025 = vpop.f32.mrf.mxu0
          %v4026 = vadd.f32 %v3973, %v4025
          %v4027 = vpop.f32.mrf.mxu0
          %v4028 = vadd.f32 %v3975, %v4027
          %v4029 = vpop.f32.mrf.mxu0
          %v4030 = vadd.f32 %v3977, %v4029
          %v4031 = vpop.f32.mrf.mxu0
          %v4032 = vadd.f32 %v3979, %v4031
          %4033 = vdwg.mxu0
          %v4034 = vadd.f32 %v3698, %v3702
          %v4035 = vadd.f32 %v4034, %v3708
          %v4036 = vadd.f32 %v4035, %v3712
          %v4037 = vrot.slane %v4036, 4
          %v4038 = vadd.f32 %v4036, %v4037
          %v4039 = vrot.slane %v4038, 2
          %v4040 = vadd.f32 %v4038, %v4039
          %v4041 = vrot.slane %v4040, 1
          %v4042 = vadd.f32 %v4040, %v4041
          %v4043 = vadd.f32 %v3700, %v3704
          %v4044 = vadd.f32 %v4043, %v3710
          %v4045 = vadd.f32 %v4044, %v3714
          %v4046 = vrot.slane %v4045, 4
          %v4047 = vadd.f32 %v4045, %v4046
          %v4048 = vrot.slane %v4047, 2
          %v4049 = vadd.f32 %v4047, %v4048
          %v4050 = vrot.slane %v4049, 1
          %v4051 = vadd.f32 %v4049, %v4050
          %v4052 = vadd.f32 %v3804, %v3808
          %v4053 = vadd.f32 %v4052, %v3814
          %v4054 = vadd.f32 %v4053, %v3818
          %v4055 = vrot.slane %v4054, 4
          %v4056 = vadd.f32 %v4054, %v4055
          %v4057 = vrot.slane %v4056, 2
          %v4058 = vadd.f32 %v4056, %v4057
          %v4059 = vrot.slane %v4058, 1
          %v4060 = vadd.f32 %v4058, %v4059
          %v4061 = vadd.f32 %v3806, %v3810
          %v4062 = vadd.f32 %v4061, %v3816
          %v4063 = vadd.f32 %v4062, %v3820
          %v4064 = vrot.slane %v4063, 4
          %v4065 = vadd.f32 %v4063, %v4064
          %v4066 = vrot.slane %v4065, 2
          %v4067 = vadd.f32 %v4065, %v4066
          %v4068 = vrot.slane %v4067, 1
          %v4069 = vadd.f32 %v4067, %v4068
          %v4070 = vadd.f32 %v3910, %v3914
          %v4071 = vadd.f32 %v4070, %v3920
          %v4072 = vadd.f32 %v4071, %v3924
          %v4073 = vrot.slane %v4072, 4
          %v4074 = vadd.f32 %v4072, %v4073
          %v4075 = vrot.slane %v4074, 2
          %v4076 = vadd.f32 %v4074, %v4075
          %v4077 = vrot.slane %v4076, 1
          %v4078 = vadd.f32 %v4076, %v4077
          %v4079 = vadd.f32 %v3912, %v3916
          %v4080 = vadd.f32 %v4079, %v3922
          %v4081 = vadd.f32 %v4080, %v3926
          %v4082 = vrot.slane %v4081, 4
          %v4083 = vadd.f32 %v4081, %v4082
          %v4084 = vrot.slane %v4083, 2
          %v4085 = vadd.f32 %v4083, %v4084
          %v4086 = vrot.slane %v4085, 1
          %v4087 = vadd.f32 %v4085, %v4086
          %v4088 = vadd.f32 %v4016, %v4020
          %v4089 = vadd.f32 %v4088, %v4026
          %v4090 = vadd.f32 %v4089, %v4030
          %v4091 = vrot.slane %v4090, 4
          %v4092 = vadd.f32 %v4090, %v4091
          %v4093 = vrot.slane %v4092, 2
          %v4094 = vadd.f32 %v4092, %v4093
          %v4095 = vrot.slane %v4094, 1
          %v4096 = vadd.f32 %v4094, %v4095
          %v4097 = vadd.f32 %v4018, %v4022
          %v4098 = vadd.f32 %v4097, %v4028
          %v4099 = vadd.f32 %v4098, %v4032
          %v4100 = vrot.slane %v4099, 4
          %v4101 = vadd.f32 %v4099, %v4100
          %v4102 = vrot.slane %v4101, 2
          %v4103 = vadd.f32 %v4101, %v4102
          %v4104 = vrot.slane %v4103, 1
          %v4105 = vadd.f32 %v4103, %v4104
          %v4106 = vmul.f32 %v4042, 0.03125
          %v4107 = vmul.f32 %v4051, 0.03125
          %v4108 = vmul.f32 %v4060, 0.03125
          %v4109 = vmul.f32 %v4069, 0.03125
          %v4110 = vmul.f32 %v4078, 0.03125
          %v4111 = vmul.f32 %v4087, 0.03125
          %v4112 = vmul.f32 %v4096, 0.03125
          %v4113 = vmul.f32 %v4105, 0.03125
          %v4114 = vmul.f32 %v3698, %v3698
          %v4115 = vmul.f32 %v3700, %v3700
          %v4116 = vmul.f32 %v3804, %v3804
          %v4117 = vmul.f32 %v3806, %v3806
          %v4118 = vmul.f32 %v3910, %v3910
          %v4119 = vmul.f32 %v3912, %v3912
          %v4120 = vmul.f32 %v4016, %v4016
          %v4121 = vmul.f32 %v4018, %v4018
          %v4122 = vmul.f32 %v3702, %v3702
          %v4123 = vmul.f32 %v3704, %v3704
          %v4124 = vmul.f32 %v3808, %v3808
          %v4125 = vmul.f32 %v3810, %v3810
          %v4126 = vmul.f32 %v3914, %v3914
          %v4127 = vmul.f32 %v3916, %v3916
          %v4128 = vmul.f32 %v4020, %v4020
          %v4129 = vmul.f32 %v4022, %v4022
          %v4130 = vmul.f32 %v3708, %v3708
          %v4131 = vmul.f32 %v3710, %v3710
          %v4132 = vmul.f32 %v3814, %v3814
          %v4133 = vmul.f32 %v3816, %v3816
          %v4134 = vmul.f32 %v3920, %v3920
          %v4135 = vmul.f32 %v3922, %v3922
          %v4136 = vmul.f32 %v4026, %v4026
          %v4137 = vmul.f32 %v4028, %v4028
          %v4138 = vmul.f32 %v3712, %v3712
          %v4139 = vmul.f32 %v3714, %v3714
          %v4140 = vmul.f32 %v3818, %v3818
          %v4141 = vmul.f32 %v3820, %v3820
          %v4142 = vmul.f32 %v3924, %v3924
          %v4143 = vmul.f32 %v3926, %v3926
          %v4144 = vmul.f32 %v4030, %v4030
          %v4145 = vmul.f32 %v4032, %v4032
          %v4146 = vadd.f32 %v4114, %v4122
          %v4147 = vadd.f32 %v4146, %v4130
          %v4148 = vadd.f32 %v4147, %v4138
          %v4149 = vrot.slane %v4148, 4
          %v4150 = vadd.f32 %v4148, %v4149
          %v4151 = vrot.slane %v4150, 2
          %v4152 = vadd.f32 %v4150, %v4151
          %v4153 = vrot.slane %v4152, 1
          %v4154 = vadd.f32 %v4152, %v4153
          %v4155 = vadd.f32 %v4115, %v4123
          %v4156 = vadd.f32 %v4155, %v4131
          %v4157 = vadd.f32 %v4156, %v4139
          %v4158 = vrot.slane %v4157, 4
          %v4159 = vadd.f32 %v4157, %v4158
          %v4160 = vrot.slane %v4159, 2
          %v4161 = vadd.f32 %v4159, %v4160
          %v4162 = vrot.slane %v4161, 1
          %v4163 = vadd.f32 %v4161, %v4162
          %v4164 = vadd.f32 %v4116, %v4124
          %v4165 = vadd.f32 %v4164, %v4132
          %v4166 = vadd.f32 %v4165, %v4140
          %v4167 = vrot.slane %v4166, 4
          %v4168 = vadd.f32 %v4166, %v4167
          %v4169 = vrot.slane %v4168, 2
          %v4170 = vadd.f32 %v4168, %v4169
          %v4171 = vrot.slane %v4170, 1
          %v4172 = vadd.f32 %v4170, %v4171
          %v4173 = vadd.f32 %v4117, %v4125
          %v4174 = vadd.f32 %v4173, %v4133
          %v4175 = vadd.f32 %v4174, %v4141
          %v4176 = vrot.slane %v4175, 4
          %v4177 = vadd.f32 %v4175, %v4176
          %v4178 = vrot.slane %v4177, 2
          %v4179 = vadd.f32 %v4177, %v4178
          %v4180 = vrot.slane %v4179, 1
          %v4181 = vadd.f32 %v4179, %v4180
          %v4182 = vadd.f32 %v4118, %v4126
          %v4183 = vadd.f32 %v4182, %v4134
          %v4184 = vadd.f32 %v4183, %v4142
          %v4185 = vrot.slane %v4184, 4
          %v4186 = vadd.f32 %v4184, %v4185
          %v4187 = vrot.slane %v4186, 2
          %v4188 = vadd.f32 %v4186, %v4187
          %v4189 = vrot.slane %v4188, 1
          %v4190 = vadd.f32 %v4188, %v4189
          %v4191 = vadd.f32 %v4119, %v4127
          %v4192 = vadd.f32 %v4191, %v4135
          %v4193 = vadd.f32 %v4192, %v4143
          %v4194 = vrot.slane %v4193, 4
          %v4195 = vadd.f32 %v4193, %v4194
          %v4196 = vrot.slane %v4195, 2
          %v4197 = vadd.f32 %v4195, %v4196
          %v4198 = vrot.slane %v4197, 1
          %v4199 = vadd.f32 %v4197, %v4198
          %v4200 = vadd.f32 %v4120, %v4128
          %v4201 = vadd.f32 %v4200, %v4136
          %v4202 = vadd.f32 %v4201, %v4144
          %v4203 = vrot.slane %v4202, 4
          %v4204 = vadd.f32 %v4202, %v4203
          %v4205 = vrot.slane %v4204, 2
          %v4206 = vadd.f32 %v4204, %v4205
          %v4207 = vrot.slane %v4206, 1
          %v4208 = vadd.f32 %v4206, %v4207
          %v4209 = vadd.f32 %v4121, %v4129
          %v4210 = vadd.f32 %v4209, %v4137
          %v4211 = vadd.f32 %v4210, %v4145
          %v4212 = vrot.slane %v4211, 4
          %v4213 = vadd.f32 %v4211, %v4212
          %v4214 = vrot.slane %v4213, 2
          %v4215 = vadd.f32 %v4213, %v4214
          %v4216 = vrot.slane %v4215, 1
          %v4217 = vadd.f32 %v4215, %v4216
          %v4218 = vmul.f32 %v4154, 0.03125
          %v4219 = vmul.f32 %v4163, 0.03125
          %v4220 = vmul.f32 %v4172, 0.03125
          %v4221 = vmul.f32 %v4181, 0.03125
          %v4222 = vmul.f32 %v4190, 0.03125
          %v4223 = vmul.f32 %v4199, 0.03125
          %v4224 = vmul.f32 %v4208, 0.03125
          %v4225 = vmul.f32 %v4217, 0.03125
          %v4226 = vmul.f32 %v4106, %v4106
          %v4227 = vmul.f32 %v4107, %v4107
          %v4228 = vmul.f32 %v4108, %v4108
          %v4229 = vmul.f32 %v4109, %v4109
          %v4230 = vmul.f32 %v4110, %v4110
          %v4231 = vmul.f32 %v4111, %v4111
          %v4232 = vmul.f32 %v4112, %v4112
          %v4233 = vmul.f32 %v4113, %v4113
          %v4234 = vsub.f32 %v4218, %v4226
          %v4235 = vsub.f32 %v4219, %v4227
          %v4236 = vsub.f32 %v4220, %v4228
          %v4237 = vsub.f32 %v4221, %v4229
          %v4238 = vsub.f32 %v4222, %v4230
          %v4239 = vsub.f32 %v4223, %v4231
          %v4240 = vsub.f32 %v4224, %v4232
          %v4241 = vsub.f32 %v4225, %v4233
          %v4242 = vld [vmem:[#allocation24] sm:$0xff]
          %v4243 = vadd.f32 %v4234, 1e-05
          %v4244 = vadd.f32 %v4235, 1e-05
          %v4245 = vadd.f32 %v4236, 1e-05
          %v4246 = vadd.f32 %v4237, 1e-05
          %v4247 = vadd.f32 %v4238, 1e-05
          %v4248 = vadd.f32 %v4239, 1e-05
          %v4249 = vadd.f32 %v4240, 1e-05
          %v4250 = vadd.f32 %v4241, 1e-05
          %v4251 = vrsqrt.pop %v4243
          %v4252 = vrsqrt.pop %v4244
          %v4253 = vrsqrt.pop %v4245
          %v4254 = vrsqrt.pop %v4246
          %v4255 = vrsqrt.pop %v4247
          %v4256 = vrsqrt.pop %v4248
          %v4257 = vrsqrt.pop %v4249
          %v4258 = vrsqrt.pop %v4250
          %v4267 = vcombine.low %v4251, %v4252
          %v4268 = vcombine.low %v4253, %v4254
          %v4269 = vcombine.low %v4255, %v4256
          %v4270 = vcombine.low %v4257, %v4258
          %v4272 = vunpack.c.l.s4 1966171168
          %v4273 = vunpack.c.0.s8 %v4272
          %v4274 = vlaneseq
          %v4275 = vshrl.u32 %v4274, 7
          %v4276 = vsub.s32 %v4273, %v4275
          %v4277 = vrot.slane %v4267, %v4276
          %v4279 = vunpack.c.l.s4 1966171168
          %v4280 = vunpack.c.0.s8 %v4279
          %v4281 = vlaneseq
          %v4282 = vshrl.u32 %v4281, 7
          %v4283 = vsub.s32 %v4280, %v4282
          %v4284 = vrot.slane %v4268, %v4283
          %v4286 = vunpack.c.l.s4 1966171168
          %v4287 = vunpack.c.0.s8 %v4286
          %v4288 = vlaneseq
          %v4289 = vshrl.u32 %v4288, 7
          %v4290 = vsub.s32 %v4287, %v4289
          %v4291 = vrot.slane %v4269, %v4290
          %v4293 = vunpack.c.l.s4 1966171168
          %v4294 = vunpack.c.0.s8 %v4293
          %v4295 = vlaneseq
          %v4296 = vshrl.u32 %v4295, 7
          %v4297 = vsub.s32 %v4294, %v4296
          %v4298 = vrot.slane %v4270, %v4297
          %v4299 = vcombine.low %v4277, %v4284
          %v4300 = vcombine.low %v4291, %v4298
          %v4302 = vunpack.c.l.s4 1966171168
          %v4303 = vunpack.c.0.s8 %v4302
          %v4304 = vlaneseq
          %v4305 = vshrl.u32 %v4304, 7
          %v4306 = vsub.s32 %v4303, %v4305
          %v4307 = vrot.slane %v4299, %v4306
          %v4309 = vunpack.c.l.s4 1966171168
          %v4310 = vunpack.c.0.s8 %v4309
          %v4311 = vlaneseq
          %v4312 = vshrl.u32 %v4311, 7
          %v4313 = vsub.s32 %v4310, %v4312
          %v4314 = vrot.slane %v4300, %v4313
          %v4315 = vcombine.low %v4307, %v4314
          %v4317 = vmul.f32 %v4242, %v4315
          %v4318 = vld [vmem:[#allocation26] sm:$0xff]
          %v4320 = vlaneseq
          %v4321 = vshrl.u32 %v4320, 7
          %v4322 = vsub.s32 0, %v4321
          %v4323 = vrot.slane %v4317, %v4322
          %v4324 = vlaneseq
          %v4325 = vshrl.u32 %v4324, 7
          %v4326 = vsub.s32 1, %v4325
          %v4327 = vrot.slane %v4317, %v4326
          %v4328 = vlaneseq
          %v4329 = vshrl.u32 %v4328, 7
          %v4330 = vsub.s32 2, %v4329
          %v4331 = vrot.slane %v4317, %v4330
          %v4332 = vlaneseq
          %v4333 = vshrl.u32 %v4332, 7
          %v4334 = vsub.s32 3, %v4333
          %v4335 = vrot.slane %v4317, %v4334
          %v4336 = vlaneseq
          %v4337 = vshrl.u32 %v4336, 7
          %v4338 = vsub.s32 4, %v4337
          %v4339 = vrot.slane %v4317, %v4338
          %v4340 = vlaneseq
          %v4341 = vshrl.u32 %v4340, 7
          %v4342 = vsub.s32 5, %v4341
          %v4343 = vrot.slane %v4317, %v4342
          %v4344 = vlaneseq
          %v4345 = vshrl.u32 %v4344, 7
          %v4346 = vsub.s32 6, %v4345
          %v4347 = vrot.slane %v4317, %v4346
          %v4348 = vlaneseq
          %v4349 = vshrl.u32 %v4348, 7
          %v4350 = vsub.s32 7, %v4349
          %v4351 = vrot.slane %v4317, %v4350
          %v4360 = vmul.f32 %v4106, %v4323
          %v4361 = vmul.f32 %v4107, %v4327
          %v4362 = vmul.f32 %v4108, %v4331
          %v4363 = vmul.f32 %v4109, %v4335
          %v4364 = vmul.f32 %v4110, %v4339
          %v4365 = vmul.f32 %v4111, %v4343
          %v4366 = vmul.f32 %v4112, %v4347
          %v4367 = vmul.f32 %v4113, %v4351
          %v4376 = vcombine.low %v4360, %v4361
          %v4377 = vcombine.low %v4362, %v4363
          %v4378 = vcombine.low %v4364, %v4365
          %v4379 = vcombine.low %v4366, %v4367
          %v4381 = vunpack.c.l.s4 1966171168
          %v4382 = vunpack.c.0.s8 %v4381
          %v4383 = vlaneseq
          %v4384 = vshrl.u32 %v4383, 7
          %v4385 = vsub.s32 %v4382, %v4384
          %v4386 = vrot.slane %v4376, %v4385
          %v4388 = vunpack.c.l.s4 1966171168
          %v4389 = vunpack.c.0.s8 %v4388
          %v4390 = vlaneseq
          %v4391 = vshrl.u32 %v4390, 7
          %v4392 = vsub.s32 %v4389, %v4391
          %v4393 = vrot.slane %v4377, %v4392
          %v4395 = vunpack.c.l.s4 1966171168
          %v4396 = vunpack.c.0.s8 %v4395
          %v4397 = vlaneseq
          %v4398 = vshrl.u32 %v4397, 7
          %v4399 = vsub.s32 %v4396, %v4398
          %v4400 = vrot.slane %v4378, %v4399
          %v4402 = vunpack.c.l.s4 1966171168
          %v4403 = vunpack.c.0.s8 %v4402
          %v4404 = vlaneseq
          %v4405 = vshrl.u32 %v4404, 7
          %v4406 = vsub.s32 %v4403, %v4405
          %v4407 = vrot.slane %v4379, %v4406
          %v4408 = vcombine.low %v4386, %v4393
          %v4409 = vcombine.low %v4400, %v4407
          %v4411 = vunpack.c.l.s4 1966171168
          %v4412 = vunpack.c.0.s8 %v4411
          %v4413 = vlaneseq
          %v4414 = vshrl.u32 %v4413, 7
          %v4415 = vsub.s32 %v4412, %v4414
          %v4416 = vrot.slane %v4408, %v4415
          %v4418 = vunpack.c.l.s4 1966171168
          %v4419 = vunpack.c.0.s8 %v4418
          %v4420 = vlaneseq
          %v4421 = vshrl.u32 %v4420, 7
          %v4422 = vsub.s32 %v4419, %v4421
          %v4423 = vrot.slane %v4409, %v4422
          %v4424 = vcombine.low %v4416, %v4423
          %v4426 = vsub.f32 %v4318, %v4424
          %v4427 = vmul.f32 %v3698, %v4323
          %v4428 = vmul.f32 %v3700, %v4327
          %v4429 = vmul.f32 %v3804, %v4331
          %v4430 = vmul.f32 %v3806, %v4335
          %v4431 = vmul.f32 %v3910, %v4339
          %v4432 = vmul.f32 %v3912, %v4343
          %v4433 = vmul.f32 %v4016, %v4347
          %v4434 = vmul.f32 %v4018, %v4351
          %v4435 = vmul.f32 %v3702, %v4323
          %v4436 = vmul.f32 %v3704, %v4327
          %v4437 = vmul.f32 %v3808, %v4331
          %v4438 = vmul.f32 %v3810, %v4335
          %v4439 = vmul.f32 %v3914, %v4339
          %v4440 = vmul.f32 %v3916, %v4343
          %v4441 = vmul.f32 %v4020, %v4347
          %v4442 = vmul.f32 %v4022, %v4351
          %v4443 = vmul.f32 %v3708, %v4323
          %v4444 = vmul.f32 %v3710, %v4327
          %v4445 = vmul.f32 %v3814, %v4331
          %v4446 = vmul.f32 %v3816, %v4335
          %v4447 = vmul.f32 %v3920, %v4339
          %v4448 = vmul.f32 %v3922, %v4343
          %v4449 = vmul.f32 %v4026, %v4347
          %v4450 = vmul.f32 %v4028, %v4351
          %v4451 = vmul.f32 %v3712, %v4323
          %v4452 = vmul.f32 %v3714, %v4327
          %v4453 = vmul.f32 %v3818, %v4331
          %v4454 = vmul.f32 %v3820, %v4335
          %v4455 = vmul.f32 %v3924, %v4339
          %v4456 = vmul.f32 %v3926, %v4343
          %v4457 = vmul.f32 %v4030, %v4347
          %v4458 = vmul.f32 %v4032, %v4351
          %v4460 = vlaneseq
          %v4461 = vshrl.u32 %v4460, 7
          %v4462 = vsub.s32 0, %v4461
          %v4463 = vrot.slane %v4426, %v4462
          %v4464 = vlaneseq
          %v4465 = vshrl.u32 %v4464, 7
          %v4466 = vsub.s32 1, %v4465
          %v4467 = vrot.slane %v4426, %v4466
          %v4468 = vlaneseq
          %v4469 = vshrl.u32 %v4468, 7
          %v4470 = vsub.s32 2, %v4469
          %v4471 = vrot.slane %v4426, %v4470
          %v4472 = vlaneseq
          %v4473 = vshrl.u32 %v4472, 7
          %v4474 = vsub.s32 3, %v4473
          %v4475 = vrot.slane %v4426, %v4474
          %v4476 = vlaneseq
          %v4477 = vshrl.u32 %v4476, 7
          %v4478 = vsub.s32 4, %v4477
          %v4479 = vrot.slane %v4426, %v4478
          %v4480 = vlaneseq
          %v4481 = vshrl.u32 %v4480, 7
          %v4482 = vsub.s32 5, %v4481
          %v4483 = vrot.slane %v4426, %v4482
          %v4484 = vlaneseq
          %v4485 = vshrl.u32 %v4484, 7
          %v4486 = vsub.s32 6, %v4485
          %v4487 = vrot.slane %v4426, %v4486
          %v4488 = vlaneseq
          %v4489 = vshrl.u32 %v4488, 7
          %v4490 = vsub.s32 7, %v4489
          %v4491 = vrot.slane %v4426, %v4490
          %v4500 = vadd.f32 %v4427, %v4463
          %v4501 = vadd.f32 %v4428, %v4467
          %v4502 = vadd.f32 %v4429, %v4471
          %v4503 = vadd.f32 %v4430, %v4475
          %v4504 = vadd.f32 %v4431, %v4479
          %v4505 = vadd.f32 %v4432, %v4483
          %v4506 = vadd.f32 %v4433, %v4487
          %v4507 = vadd.f32 %v4434, %v4491
          %v4508 = vadd.f32 %v4435, %v4463
          %v4509 = vadd.f32 %v4436, %v4467
          %v4510 = vadd.f32 %v4437, %v4471
          %v4511 = vadd.f32 %v4438, %v4475
          %v4512 = vadd.f32 %v4439, %v4479
          %v4513 = vadd.f32 %v4440, %v4483
          %v4514 = vadd.f32 %v4441, %v4487
          %v4515 = vadd.f32 %v4442, %v4491
          %v4516 = vadd.f32 %v4443, %v4463
          %v4517 = vadd.f32 %v4444, %v4467
          %v4518 = vadd.f32 %v4445, %v4471
          %v4519 = vadd.f32 %v4446, %v4475
          %v4520 = vadd.f32 %v4447, %v4479
          %v4521 = vadd.f32 %v4448, %v4483
          %v4522 = vadd.f32 %v4449, %v4487
          %v4523 = vadd.f32 %v4450, %v4491
          %v4524 = vadd.f32 %v4451, %v4463
          %v4525 = vadd.f32 %v4452, %v4467
          %v4526 = vadd.f32 %v4453, %v4471
          %v4527 = vadd.f32 %v4454, %v4475
          %v4528 = vadd.f32 %v4455, %v4479
          %v4529 = vadd.f32 %v4456, %v4483
          %v4530 = vadd.f32 %v4457, %v4487
          %v4531 = vadd.f32 %v4458, %v4491
          %v4532 = vmul.f32 %v4500, 0.2
          %v4533 = vmul.f32 %v4501, 0.2
          %v4534 = vmul.f32 %v4502, 0.2
          %v4535 = vmul.f32 %v4503, 0.2
          %v4536 = vmul.f32 %v4504, 0.2
          %v4537 = vmul.f32 %v4505, 0.2
          %v4538 = vmul.f32 %v4506, 0.2
          %v4539 = vmul.f32 %v4507, 0.2
          %v4540 = vmul.f32 %v4508, 0.2
          %v4541 = vmul.f32 %v4509, 0.2
          %v4542 = vmul.f32 %v4510, 0.2
          %v4543 = vmul.f32 %v4511, 0.2
          %v4544 = vmul.f32 %v4512, 0.2
          %v4545 = vmul.f32 %v4513, 0.2
          %v4546 = vmul.f32 %v4514, 0.2
          %v4547 = vmul.f32 %v4515, 0.2
          %v4548 = vmul.f32 %v4516, 0.2
          %v4549 = vmul.f32 %v4517, 0.2
          %v4550 = vmul.f32 %v4518, 0.2
          %v4551 = vmul.f32 %v4519, 0.2
          %v4552 = vmul.f32 %v4520, 0.2
          %v4553 = vmul.f32 %v4521, 0.2
          %v4554 = vmul.f32 %v4522, 0.2
          %v4555 = vmul.f32 %v4523, 0.2
          %v4556 = vmul.f32 %v4524, 0.2
          %v4557 = vmul.f32 %v4525, 0.2
          %v4558 = vmul.f32 %v4526, 0.2
          %v4559 = vmul.f32 %v4527, 0.2
          %v4560 = vmul.f32 %v4528, 0.2
          %v4561 = vmul.f32 %v4529, 0.2
          %v4562 = vmul.f32 %v4530, 0.2
          %v4563 = vmul.f32 %v4531, 0.2
          %v4564 = vmax.f32 %v4500, %v4532
          %v4565 = vmax.f32 %v4501, %v4533
          %v4566 = vmax.f32 %v4502, %v4534
          %v4567 = vmax.f32 %v4503, %v4535
          %v4568 = vmax.f32 %v4504, %v4536
          %v4569 = vmax.f32 %v4505, %v4537
          %v4570 = vmax.f32 %v4506, %v4538
          %v4571 = vmax.f32 %v4507, %v4539
          %v4572 = vmax.f32 %v4508, %v4540
          %v4573 = vmax.f32 %v4509, %v4541
          %v4574 = vmax.f32 %v4510, %v4542
          %v4575 = vmax.f32 %v4511, %v4543
          %v4576 = vmax.f32 %v4512, %v4544
          %v4577 = vmax.f32 %v4513, %v4545
          %v4578 = vmax.f32 %v4514, %v4546
          %v4579 = vmax.f32 %v4515, %v4547
          %v4580 = vmax.f32 %v4516, %v4548
          %v4581 = vmax.f32 %v4517, %v4549
          %v4582 = vmax.f32 %v4518, %v4550
          %v4583 = vmax.f32 %v4519, %v4551
          %v4584 = vmax.f32 %v4520, %v4552
          %v4585 = vmax.f32 %v4521, %v4553
          %v4586 = vmax.f32 %v4522, %v4554
          %v4587 = vmax.f32 %v4523, %v4555
          %v4588 = vmax.f32 %v4524, %v4556
          %v4589 = vmax.f32 %v4525, %v4557
          %v4590 = vmax.f32 %v4526, %v4558
          %v4591 = vmax.f32 %v4527, %v4559
          %v4592 = vmax.f32 %v4528, %v4560
          %v4593 = vmax.f32 %v4529, %v4561
          %v4594 = vmax.f32 %v4530, %v4562
          %v4595 = vmax.f32 %v4531, %v4563
          %v4596 = vpack.c.bf16 %v4572, %v4564
          %v4597 = vpack.c.bf16 %v4573, %v4565
          %v4598 = vpack.c.bf16 %v4574, %v4566
          %v4599 = vpack.c.bf16 %v4575, %v4567
          %v4600 = vpack.c.bf16 %v4576, %v4568
          %v4601 = vpack.c.bf16 %v4577, %v4569
          %v4602 = vpack.c.bf16 %v4578, %v4570
          %v4603 = vpack.c.bf16 %v4579, %v4571
          %v4604 = vpack.c.bf16 %v4588, %v4580
          %v4605 = vpack.c.bf16 %v4589, %v4581
          %v4606 = vpack.c.bf16 %v4590, %v4582
          %v4607 = vpack.c.bf16 %v4591, %v4583
          %v4608 = vpack.c.bf16 %v4592, %v4584
          %v4609 = vpack.c.bf16 %v4593, %v4585
          %v4610 = vpack.c.bf16 %v4594, %v4586
          %v4611 = vpack.c.bf16 %v4595, %v4587
          %v4628 = vunpack.c.l.b16 %v4596
          %v4629 = vunpack.c.l.b16 %v4597
          %v4630 = vunpack.c.l.b16 %v4598
          %v4631 = vunpack.c.l.b16 %v4599
          %v4632 = vunpack.c.l.b16 %v4600
          %v4633 = vunpack.c.l.b16 %v4601
          %v4634 = vunpack.c.l.b16 %v4602
          %v4635 = vunpack.c.l.b16 %v4603
          %v4636 = vunpack.c.h.b16 %v4596
          %v4637 = vunpack.c.h.b16 %v4597
          %v4638 = vunpack.c.h.b16 %v4598
          %v4639 = vunpack.c.h.b16 %v4599
          %v4640 = vunpack.c.h.b16 %v4600
          %v4641 = vunpack.c.h.b16 %v4601
          %v4642 = vunpack.c.h.b16 %v4602
          %v4643 = vunpack.c.h.b16 %v4603
          %v4644 = vunpack.c.l.b16 %v4604
          %v4645 = vunpack.c.l.b16 %v4605
          %v4646 = vunpack.c.l.b16 %v4606
          %v4647 = vunpack.c.l.b16 %v4607
          %v4648 = vunpack.c.l.b16 %v4608
          %v4649 = vunpack.c.l.b16 %v4609
          %v4650 = vunpack.c.l.b16 %v4610
          %v4651 = vunpack.c.l.b16 %v4611
          %v4652 = vunpack.c.h.b16 %v4604
          %v4653 = vunpack.c.h.b16 %v4605
          %v4654 = vunpack.c.h.b16 %v4606
          %v4655 = vunpack.c.h.b16 %v4607
          %v4656 = vunpack.c.h.b16 %v4608
          %v4657 = vunpack.c.h.b16 %v4609
          %v4658 = vunpack.c.h.b16 %v4610
          %v4659 = vunpack.c.h.b16 %v4611
          %v4660 = vpack.c.b16 %v4629, %v4628
          %v4661 = vpack.c.b16 %v4631, %v4630
          %v4662 = vpack.c.b16 %v4633, %v4632
          %v4663 = vpack.c.b16 %v4635, %v4634
          %v4664 = vpack.c.b16 %v4637, %v4636
          %v4665 = vpack.c.b16 %v4639, %v4638
          %v4666 = vpack.c.b16 %v4641, %v4640
          %v4667 = vpack.c.b16 %v4643, %v4642
          %v4668 = vpack.c.b16 %v4645, %v4644
          %v4669 = vpack.c.b16 %v4647, %v4646
          %v4670 = vpack.c.b16 %v4649, %v4648
          %v4671 = vpack.c.b16 %v4651, %v4650
          %v4672 = vpack.c.b16 %v4653, %v4652
          %v4673 = vpack.c.b16 %v4655, %v4654
          %v4674 = vpack.c.b16 %v4657, %v4656
          %v4675 = vpack.c.b16 %v4659, %v4658
          %4692 = vst [vmem:[#allocation2] sm:$0xff] %v4660
          %4693 = vst [vmem:[#allocation2 + $0x8] sm:$0xff] %v4661
          %4694 = vst [vmem:[#allocation2 + $0x10] sm:$0xff] %v4662
          %4695 = vst [vmem:[#allocation2 + $0x18] sm:$0xff] %v4663
          %4696 = vst [vmem:[#allocation2 + $0x20] sm:$0xff] %v4664
          %4697 = vst [vmem:[#allocation2 + $0x28] sm:$0xff] %v4665
          %4698 = vst [vmem:[#allocation2 + $0x30] sm:$0xff] %v4666
          %4699 = vst [vmem:[#allocation2 + $0x38] sm:$0xff] %v4667
          %4700 = vst [vmem:[#allocation2 + $0x40] sm:$0xff] %v4668
          %4701 = vst [vmem:[#allocation2 + $0x48] sm:$0xff] %v4669
          %4702 = vst [vmem:[#allocation2 + $0x50] sm:$0xff] %v4670
          %4703 = vst [vmem:[#allocation2 + $0x58] sm:$0xff] %v4671
          %4704 = vst [vmem:[#allocation2 + $0x60] sm:$0xff] %v4672
          %4705 = vst [vmem:[#allocation2 + $0x68] sm:$0xff] %v4673
          %4706 = vst [vmem:[#allocation2 + $0x70] sm:$0xff] %v4674
          %4707 = vst [vmem:[#allocation2 + $0x78] sm:$0xff] %v4675
        $region160: #{tpu_custom_call.1} parent=87 // pred_fallthru
          _
        %v4708 = vld [vmem:[#allocation2] sm:$0xff]
        %v4709 = vld [vmem:[#allocation2 + $0x8] sm:$0xff]
        %v4710 = vld [vmem:[#allocation2 + $0x10] sm:$0xff]
        %v4711 = vld [vmem:[#allocation2 + $0x18] sm:$0xff]
        %v4712 = vld [vmem:[#allocation2 + $0x20] sm:$0xff]
        %v4713 = vld [vmem:[#allocation2 + $0x28] sm:$0xff]
        %v4714 = vld [vmem:[#allocation2 + $0x30] sm:$0xff]
        %v4715 = vld [vmem:[#allocation2 + $0x38] sm:$0xff]
        %v4716 = vld [vmem:[#allocation2 + $0x40] sm:$0xff]
        %v4717 = vld [vmem:[#allocation2 + $0x48] sm:$0xff]
        %v4718 = vld [vmem:[#allocation2 + $0x50] sm:$0xff]
        %v4719 = vld [vmem:[#allocation2 + $0x58] sm:$0xff]
        %v4720 = vld [vmem:[#allocation2 + $0x60] sm:$0xff]
        %v4721 = vld [vmem:[#allocation2 + $0x68] sm:$0xff]
        %v4722 = vld [vmem:[#allocation2 + $0x70] sm:$0xff]
        %v4723 = vld [vmem:[#allocation2 + $0x78] sm:$0xff]
        %v4724 = vld [vmem:[%s735] sm:$0xff]
        %v4725 = vld [vmem:[%s735 + $0x8] sm:$0xff]
        %v4726 = vld [vmem:[%s735 + $0x10] sm:$0xff]
        %v4727 = vld [vmem:[%s735 + $0x18] sm:$0xff]
        %v4728 = vld [vmem:[%s735 + $0x20] sm:$0xff]
        %v4729 = vld [vmem:[%s735 + $0x28] sm:$0xff]
        %v4730 = vld [vmem:[%s735 + $0x30] sm:$0xff]
        %v4731 = vld [vmem:[%s735 + $0x38] sm:$0xff]
        %v4732 = vld [vmem:[%s735 + $0x40] sm:$0xff]
        %v4733 = vld [vmem:[%s735 + $0x48] sm:$0xff]
        %v4734 = vld [vmem:[%s735 + $0x50] sm:$0xff]
        %v4735 = vld [vmem:[%s735 + $0x58] sm:$0xff]
        %v4736 = vld [vmem:[%s735 + $0x60] sm:$0xff]
        %v4737 = vld [vmem:[%s735 + $0x68] sm:$0xff]
        %v4738 = vld [vmem:[%s735 + $0x70] sm:$0xff]
        %v4739 = vld [vmem:[%s735 + $0x78] sm:$0xff]
        %v4740 = vld [vmem:[%s735 + $0x80] sm:$0xff]
        %v4741 = vld [vmem:[%s735 + $0x88] sm:$0xff]
        %v4742 = vld [vmem:[%s735 + $0x90] sm:$0xff]
        %v4743 = vld [vmem:[%s735 + $0x98] sm:$0xff]
        %v4744 = vld [vmem:[%s735 + $0xa0] sm:$0xff]
        %v4745 = vld [vmem:[%s735 + $0xa8] sm:$0xff]
        %v4746 = vld [vmem:[%s735 + $0xb0] sm:$0xff]
        %v4747 = vld [vmem:[%s735 + $0xb8] sm:$0xff]
        %v4748 = vld [vmem:[%s735 + $0xc0] sm:$0xff]
        %v4749 = vld [vmem:[%s735 + $0xc8] sm:$0xff]
        %v4750 = vld [vmem:[%s735 + $0xd0] sm:$0xff]
        %v4751 = vld [vmem:[%s735 + $0xd8] sm:$0xff]
        %v4752 = vld [vmem:[%s735 + $0xe0] sm:$0xff]
        %v4753 = vld [vmem:[%s735 + $0xe8] sm:$0xff]
        %v4754 = vld [vmem:[%s735 + $0xf0] sm:$0xff]
        %v4755 = vld [vmem:[%s735 + $0xf8] sm:$0xff]
        %v4756 = vld [vmem:[%s735 + $0x100] sm:$0xff]
        %v4757 = vld [vmem:[%s735 + $0x108] sm:$0xff]
        %v4758 = vld [vmem:[%s735 + $0x110] sm:$0xff]
        %v4759 = vld [vmem:[%s735 + $0x118] sm:$0xff]
        %v4760 = vld [vmem:[%s735 + $0x120] sm:$0xff]
        %v4761 = vld [vmem:[%s735 + $0x128] sm:$0xff]
        %v4762 = vld [vmem:[%s735 + $0x130] sm:$0xff]
        %v4763 = vld [vmem:[%s735 + $0x138] sm:$0xff]
        %v4764 = vld [vmem:[%s735 + $0x140] sm:$0xff]
        %v4765 = vld [vmem:[%s735 + $0x148] sm:$0xff]
        %v4766 = vld [vmem:[%s735 + $0x150] sm:$0xff]
        %v4767 = vld [vmem:[%s735 + $0x158] sm:$0xff]
        %v4768 = vld [vmem:[%s735 + $0x160] sm:$0xff]
        %v4769 = vld [vmem:[%s735 + $0x168] sm:$0xff]
        %v4770 = vld [vmem:[%s735 + $0x170] sm:$0xff]
        %v4771 = vld [vmem:[%s735 + $0x178] sm:$0xff]
        %v4772 = vld [vmem:[%s735 + $0x180] sm:$0xff]
        %v4773 = vld [vmem:[%s735 + $0x188] sm:$0xff]
        %v4774 = vld [vmem:[%s735 + $0x190] sm:$0xff]
        %v4775 = vld [vmem:[%s735 + $0x198] sm:$0xff]
        %v4776 = vld [vmem:[%s735 + $0x1a0] sm:$0xff]
        %v4777 = vld [vmem:[%s735 + $0x1a8] sm:$0xff]
        %v4778 = vld [vmem:[%s735 + $0x1b0] sm:$0xff]
        %v4779 = vld [vmem:[%s735 + $0x1b8] sm:$0xff]
        %v4780 = vld [vmem:[%s735 + $0x1c0] sm:$0xff]
        %v4781 = vld [vmem:[%s735 + $0x1c8] sm:$0xff]
        %v4782 = vld [vmem:[%s735 + $0x1d0] sm:$0xff]
        %v4783 = vld [vmem:[%s735 + $0x1d8] sm:$0xff]
        %v4784 = vld [vmem:[%s735 + $0x1e0] sm:$0xff]
        %v4785 = vld [vmem:[%s735 + $0x1e8] sm:$0xff]
        %v4786 = vld [vmem:[%s735 + $0x1f0] sm:$0xff]
        %v4787 = vld [vmem:[%s735 + $0x1f8] sm:$0xff]
        %v4788 = vld [vmem:[%s735 + $0x200] sm:$0xff]
        %v4789 = vld [vmem:[%s735 + $0x208] sm:$0xff]
        %v4790 = vld [vmem:[%s735 + $0x210] sm:$0xff]
        %v4791 = vld [vmem:[%s735 + $0x218] sm:$0xff]
        %v4792 = vld [vmem:[%s735 + $0x220] sm:$0xff]
        %v4793 = vld [vmem:[%s735 + $0x228] sm:$0xff]
        %v4794 = vld [vmem:[%s735 + $0x230] sm:$0xff]
        %v4795 = vld [vmem:[%s735 + $0x238] sm:$0xff]
        %v4796 = vld [vmem:[%s735 + $0x240] sm:$0xff]
        %v4797 = vld [vmem:[%s735 + $0x248] sm:$0xff]
        %v4798 = vld [vmem:[%s735 + $0x250] sm:$0xff]
        %v4799 = vld [vmem:[%s735 + $0x258] sm:$0xff]
        %v4800 = vld [vmem:[%s735 + $0x260] sm:$0xff]
        %v4801 = vld [vmem:[%s735 + $0x268] sm:$0xff]
        %v4802 = vld [vmem:[%s735 + $0x270] sm:$0xff]
        %v4803 = vld [vmem:[%s735 + $0x278] sm:$0xff]
        %v4804 = vld [vmem:[%s735 + $0x280] sm:$0xff]
        %v4805 = vld [vmem:[%s735 + $0x288] sm:$0xff]
        %v4806 = vld [vmem:[%s735 + $0x290] sm:$0xff]
        %v4807 = vld [vmem:[%s735 + $0x298] sm:$0xff]
        %v4808 = vld [vmem:[%s735 + $0x2a0] sm:$0xff]
        %v4809 = vld [vmem:[%s735 + $0x2a8] sm:$0xff]
        %v4810 = vld [vmem:[%s735 + $0x2b0] sm:$0xff]
        %v4811 = vld [vmem:[%s735 + $0x2b8] sm:$0xff]
        %v4812 = vld [vmem:[%s735 + $0x2c0] sm:$0xff]
        %v4813 = vld [vmem:[%s735 + $0x2c8] sm:$0xff]
        %v4814 = vld [vmem:[%s735 + $0x2d0] sm:$0xff]
        %v4815 = vld [vmem:[%s735 + $0x2d8] sm:$0xff]
        %v4816 = vld [vmem:[%s735 + $0x2e0] sm:$0xff]
        %v4817 = vld [vmem:[%s735 + $0x2e8] sm:$0xff]
        %v4818 = vld [vmem:[%s735 + $0x2f0] sm:$0xff]
        %v4819 = vld [vmem:[%s735 + $0x2f8] sm:$0xff]
        %v4820 = vld [vmem:[%s735 + $0x300] sm:$0xff]
        %v4821 = vld [vmem:[%s735 + $0x308] sm:$0xff]
        %v4822 = vld [vmem:[%s735 + $0x310] sm:$0xff]
        %v4823 = vld [vmem:[%s735 + $0x318] sm:$0xff]
        %v4824 = vld [vmem:[%s735 + $0x320] sm:$0xff]
        %v4825 = vld [vmem:[%s735 + $0x328] sm:$0xff]
        %v4826 = vld [vmem:[%s735 + $0x330] sm:$0xff]
        %v4827 = vld [vmem:[%s735 + $0x338] sm:$0xff]
        %v4828 = vld [vmem:[%s735 + $0x340] sm:$0xff]
        %v4829 = vld [vmem:[%s735 + $0x348] sm:$0xff]
        %v4830 = vld [vmem:[%s735 + $0x350] sm:$0xff]
        %v4831 = vld [vmem:[%s735 + $0x358] sm:$0xff]
        %v4832 = vld [vmem:[%s735 + $0x360] sm:$0xff]
        %v4833 = vld [vmem:[%s735 + $0x368] sm:$0xff]
        %v4834 = vld [vmem:[%s735 + $0x370] sm:$0xff]
        %v4835 = vld [vmem:[%s735 + $0x378] sm:$0xff]
        %v4836 = vld [vmem:[%s735 + $0x380] sm:$0xff]
        %v4837 = vld [vmem:[%s735 + $0x388] sm:$0xff]
        %v4838 = vld [vmem:[%s735 + $0x390] sm:$0xff]
        %v4839 = vld [vmem:[%s735 + $0x398] sm:$0xff]
        %v4840 = vld [vmem:[%s735 + $0x3a0] sm:$0xff]
        %v4841 = vld [vmem:[%s735 + $0x3a8] sm:$0xff]
        %v4842 = vld [vmem:[%s735 + $0x3b0] sm:$0xff]
        %v4843 = vld [vmem:[%s735 + $0x3b8] sm:$0xff]
        %v4844 = vld [vmem:[%s735 + $0x3c0] sm:$0xff]
        %v4845 = vld [vmem:[%s735 + $0x3c8] sm:$0xff]
        %v4846 = vld [vmem:[%s735 + $0x3d0] sm:$0xff]
        %v4847 = vld [vmem:[%s735 + $0x3d8] sm:$0xff]
        %v4848 = vld [vmem:[%s735 + $0x3e0] sm:$0xff]
        %v4849 = vld [vmem:[%s735 + $0x3e8] sm:$0xff]
        %v4850 = vld [vmem:[%s735 + $0x3f0] sm:$0xff]
        %v4851 = vld [vmem:[%s735 + $0x3f8] sm:$0xff]
        %v4852 = vld [vmem:[%s744] sm:$0x3]
        %v4854 = vlaneseq
        %v4855 = vshrl.u32 %v4854, 7
        %v4856 = vsub.s32 0, %v4855
        %v4857 = vrot.slane %v4852, %v4856
        %v4858 = vlaneseq
        %v4859 = vshrl.u32 %v4858, 7
        %v4860 = vsub.s32 1, %v4859
        %v4861 = vrot.slane %v4852, %v4860
        %v4880 = vunpack.c.l.b16 %v4708
        %v4881 = vunpack.c.h.b16 %v4708
        %v4882 = vunpack.c.l.b16 %v4709
        %v4883 = vunpack.c.h.b16 %v4709
        %v4884 = vunpack.c.l.b16 %v4710
        %v4885 = vunpack.c.h.b16 %v4710
        %v4886 = vunpack.c.l.b16 %v4711
        %v4887 = vunpack.c.h.b16 %v4711
        %v4888 = vunpack.c.l.b16 %v4712
        %v4889 = vunpack.c.h.b16 %v4712
        %v4890 = vunpack.c.l.b16 %v4713
        %v4891 = vunpack.c.h.b16 %v4713
        %v4892 = vunpack.c.l.b16 %v4714
        %v4893 = vunpack.c.h.b16 %v4714
        %v4894 = vunpack.c.l.b16 %v4715
        %v4895 = vunpack.c.h.b16 %v4715
        %v4896 = vunpack.c.l.b16 %v4716
        %v4897 = vunpack.c.h.b16 %v4716
        %v4898 = vunpack.c.l.b16 %v4717
        %v4899 = vunpack.c.h.b16 %v4717
        %v4900 = vunpack.c.l.b16 %v4718
        %v4901 = vunpack.c.h.b16 %v4718
        %v4902 = vunpack.c.l.b16 %v4719
        %v4903 = vunpack.c.h.b16 %v4719
        %v4904 = vunpack.c.l.b16 %v4720
        %v4905 = vunpack.c.h.b16 %v4720
        %v4906 = vunpack.c.l.b16 %v4721
        %v4907 = vunpack.c.h.b16 %v4721
        %v4908 = vunpack.c.l.b16 %v4722
        %v4909 = vunpack.c.h.b16 %v4722
        %v4910 = vunpack.c.l.b16 %v4723
        %v4911 = vunpack.c.h.b16 %v4723
        %v4912 = vpack.c.b16 %v4888, %v4880
        %v4913 = vpack.c.b16 %v4889, %v4881
        %v4914 = vpack.c.b16 %v4890, %v4882
        %v4915 = vpack.c.b16 %v4891, %v4883
        %v4916 = vpack.c.b16 %v4892, %v4884
        %v4917 = vpack.c.b16 %v4893, %v4885
        %v4918 = vpack.c.b16 %v4894, %v4886
        %v4919 = vpack.c.b16 %v4895, %v4887
        %v4920 = vpack.c.b16 %v4904, %v4896
        %v4921 = vpack.c.b16 %v4905, %v4897
        %v4922 = vpack.c.b16 %v4906, %v4898
        %v4923 = vpack.c.b16 %v4907, %v4899
        %v4924 = vpack.c.b16 %v4908, %v4900
        %v4925 = vpack.c.b16 %v4909, %v4901
        %v4926 = vpack.c.b16 %v4910, %v4902
        %v4927 = vpack.c.b16 %v4911, %v4903
        %v5072 = vunpack.c.l.b16 %v4724
        %v5073 = vunpack.c.h.b16 %v4724
        %v5074 = vunpack.c.l.b16 %v4725
        %v5075 = vunpack.c.h.b16 %v4725
        %v5076 = vunpack.c.l.b16 %v4726
        %v5077 = vunpack.c.h.b16 %v4726
        %v5078 = vunpack.c.l.b16 %v4727
        %v5079 = vunpack.c.h.b16 %v4727
        %v5080 = vunpack.c.l.b16 %v4728
        %v5081 = vunpack.c.h.b16 %v4728
        %v5082 = vunpack.c.l.b16 %v4729
        %v5083 = vunpack.c.h.b16 %v4729
        %v5084 = vunpack.c.l.b16 %v4730
        %v5085 = vunpack.c.h.b16 %v4730
        %v5086 = vunpack.c.l.b16 %v4731
        %v5087 = vunpack.c.h.b16 %v4731
        %v5088 = vunpack.c.l.b16 %v4732
        %v5089 = vunpack.c.h.b16 %v4732
        %v5090 = vunpack.c.l.b16 %v4733
        %v5091 = vunpack.c.h.b16 %v4733
        %v5092 = vunpack.c.l.b16 %v4734
        %v5093 = vunpack.c.h.b16 %v4734
        %v5094 = vunpack.c.l.b16 %v4735
        %v5095 = vunpack.c.h.b16 %v4735
        %v5096 = vunpack.c.l.b16 %v4736
        %v5097 = vunpack.c.h.b16 %v4736
        %v5098 = vunpack.c.l.b16 %v4737
        %v5099 = vunpack.c.h.b16 %v4737
        %v5100 = vunpack.c.l.b16 %v4738
        %v5101 = vunpack.c.h.b16 %v4738
        %v5102 = vunpack.c.l.b16 %v4739
        %v5103 = vunpack.c.h.b16 %v4739
        %v5104 = vunpack.c.l.b16 %v4740
        %v5105 = vunpack.c.h.b16 %v4740
        %v5106 = vunpack.c.l.b16 %v4741
        %v5107 = vunpack.c.h.b16 %v4741
        %v5108 = vunpack.c.l.b16 %v4742
        %v5109 = vunpack.c.h.b16 %v4742
        %v5110 = vunpack.c.l.b16 %v4743
        %v5111 = vunpack.c.h.b16 %v4743
        %v5112 = vunpack.c.l.b16 %v4744
        %v5113 = vunpack.c.h.b16 %v4744
        %v5114 = vunpack.c.l.b16 %v4745
        %v5115 = vunpack.c.h.b16 %v4745
        %v5116 = vunpack.c.l.b16 %v4746
        %v5117 = vunpack.c.h.b16 %v4746
        %v5118 = vunpack.c.l.b16 %v4747
        %v5119 = vunpack.c.h.b16 %v4747
        %v5120 = vunpack.c.l.b16 %v4748
        %v5121 = vunpack.c.h.b16 %v4748
        %v5122 = vunpack.c.l.b16 %v4749
        %v5123 = vunpack.c.h.b16 %v4749
        %v5124 = vunpack.c.l.b16 %v4750
        %v5125 = vunpack.c.h.b16 %v4750
        %v5126 = vunpack.c.l.b16 %v4751
        %v5127 = vunpack.c.h.b16 %v4751
        %v5128 = vunpack.c.l.b16 %v4752
        %v5129 = vunpack.c.h.b16 %v4752
        %v5130 = vunpack.c.l.b16 %v4753
        %v5131 = vunpack.c.h.b16 %v4753
        %v5132 = vunpack.c.l.b16 %v4754
        %v5133 = vunpack.c.h.b16 %v4754
        %v5134 = vunpack.c.l.b16 %v4755
        %v5135 = vunpack.c.h.b16 %v4755
        %v5136 = vunpack.c.l.b16 %v4756
        %v5137 = vunpack.c.h.b16 %v4756
        %v5138 = vunpack.c.l.b16 %v4757
        %v5139 = vunpack.c.h.b16 %v4757
        %v5140 = vunpack.c.l.b16 %v4758
        %v5141 = vunpack.c.h.b16 %v4758
        %v5142 = vunpack.c.l.b16 %v4759
        %v5143 = vunpack.c.h.b16 %v4759
        %v5144 = vunpack.c.l.b16 %v4760
        %v5145 = vunpack.c.h.b16 %v4760
        %v5146 = vunpack.c.l.b16 %v4761
        %v5147 = vunpack.c.h.b16 %v4761
        %v5148 = vunpack.c.l.b16 %v4762
        %v5149 = vunpack.c.h.b16 %v4762
        %v5150 = vunpack.c.l.b16 %v4763
        %v5151 = vunpack.c.h.b16 %v4763
        %v5152 = vunpack.c.l.b16 %v4764
        %v5153 = vunpack.c.h.b16 %v4764
        %v5154 = vunpack.c.l.b16 %v4765
        %v5155 = vunpack.c.h.b16 %v4765
        %v5156 = vunpack.c.l.b16 %v4766
        %v5157 = vunpack.c.h.b16 %v4766
        %v5158 = vunpack.c.l.b16 %v4767
        %v5159 = vunpack.c.h.b16 %v4767
        %v5160 = vunpack.c.l.b16 %v4768
        %v5161 = vunpack.c.h.b16 %v4768
        %v5162 = vunpack.c.l.b16 %v4769
        %v5163 = vunpack.c.h.b16 %v4769
        %v5164 = vunpack.c.l.b16 %v4770
        %v5165 = vunpack.c.h.b16 %v4770
        %v5166 = vunpack.c.l.b16 %v4771
        %v5167 = vunpack.c.h.b16 %v4771
        %v5168 = vunpack.c.l.b16 %v4772
        %v5169 = vunpack.c.h.b16 %v4772
        %v5170 = vunpack.c.l.b16 %v4773
        %v5171 = vunpack.c.h.b16 %v4773
        %v5172 = vunpack.c.l.b16 %v4774
        %v5173 = vunpack.c.h.b16 %v4774
        %v5174 = vunpack.c.l.b16 %v4775
        %v5175 = vunpack.c.h.b16 %v4775
        %v5176 = vunpack.c.l.b16 %v4776
        %v5177 = vunpack.c.h.b16 %v4776
        %v5178 = vunpack.c.l.b16 %v4777
        %v5179 = vunpack.c.h.b16 %v4777
        %v5180 = vunpack.c.l.b16 %v4778
        %v5181 = vunpack.c.h.b16 %v4778
        %v5182 = vunpack.c.l.b16 %v4779
        %v5183 = vunpack.c.h.b16 %v4779
        %v5184 = vunpack.c.l.b16 %v4780
        %v5185 = vunpack.c.h.b16 %v4780
        %v5186 = vunpack.c.l.b16 %v4781
        %v5187 = vunpack.c.h.b16 %v4781
        %v5188 = vunpack.c.l.b16 %v4782
        %v5189 = vunpack.c.h.b16 %v4782
        %v5190 = vunpack.c.l.b16 %v4783
        %v5191 = vunpack.c.h.b16 %v4783
        %v5192 = vunpack.c.l.b16 %v4784
        %v5193 = vunpack.c.h.b16 %v4784
        %v5194 = vunpack.c.l.b16 %v4785
        %v5195 = vunpack.c.h.b16 %v4785
        %v5196 = vunpack.c.l.b16 %v4786
        %v5197 = vunpack.c.h.b16 %v4786
        %v5198 = vunpack.c.l.b16 %v4787
        %v5199 = vunpack.c.h.b16 %v4787
        %v5200 = vunpack.c.l.b16 %v4788
        %v5201 = vunpack.c.h.b16 %v4788
        %v5202 = vunpack.c.l.b16 %v4789
        %v5203 = vunpack.c.h.b16 %v4789
        %v5204 = vunpack.c.l.b16 %v4790
        %v5205 = vunpack.c.h.b16 %v4790
        %v5206 = vunpack.c.l.b16 %v4791
        %v5207 = vunpack.c.h.b16 %v4791
        %v5208 = vunpack.c.l.b16 %v4792
        %v5209 = vunpack.c.h.b16 %v4792
        %v5210 = vunpack.c.l.b16 %v4793
        %v5211 = vunpack.c.h.b16 %v4793
        %v5212 = vunpack.c.l.b16 %v4794
        %v5213 = vunpack.c.h.b16 %v4794
        %v5214 = vunpack.c.l.b16 %v4795
        %v5215 = vunpack.c.h.b16 %v4795
        %v5216 = vunpack.c.l.b16 %v4796
        %v5217 = vunpack.c.h.b16 %v4796
        %v5218 = vunpack.c.l.b16 %v4797
        %v5219 = vunpack.c.h.b16 %v4797
        %v5220 = vunpack.c.l.b16 %v4798
        %v5221 = vunpack.c.h.b16 %v4798
        %v5222 = vunpack.c.l.b16 %v4799
        %v5223 = vunpack.c.h.b16 %v4799
        %v5224 = vunpack.c.l.b16 %v4800
        %v5225 = vunpack.c.h.b16 %v4800
        %v5226 = vunpack.c.l.b16 %v4801
        %v5227 = vunpack.c.h.b16 %v4801
        %v5228 = vunpack.c.l.b16 %v4802
        %v5229 = vunpack.c.h.b16 %v4802
        %v5230 = vunpack.c.l.b16 %v4803
        %v5231 = vunpack.c.h.b16 %v4803
        %v5232 = vunpack.c.l.b16 %v4804
        %v5233 = vunpack.c.h.b16 %v4804
        %v5234 = vunpack.c.l.b16 %v4805
        %v5235 = vunpack.c.h.b16 %v4805
        %v5236 = vunpack.c.l.b16 %v4806
        %v5237 = vunpack.c.h.b16 %v4806
        %v5238 = vunpack.c.l.b16 %v4807
        %v5239 = vunpack.c.h.b16 %v4807
        %v5240 = vunpack.c.l.b16 %v4808
        %v5241 = vunpack.c.h.b16 %v4808
        %v5242 = vunpack.c.l.b16 %v4809
        %v5243 = vunpack.c.h.b16 %v4809
        %v5244 = vunpack.c.l.b16 %v4810
        %v5245 = vunpack.c.h.b16 %v4810
        %v5246 = vunpack.c.l.b16 %v4811
        %v5247 = vunpack.c.h.b16 %v4811
        %v5248 = vunpack.c.l.b16 %v4812
        %v5249 = vunpack.c.h.b16 %v4812
        %v5250 = vunpack.c.l.b16 %v4813
        %v5251 = vunpack.c.h.b16 %v4813
        %v5252 = vunpack.c.l.b16 %v4814
        %v5253 = vunpack.c.h.b16 %v4814
        %v5254 = vunpack.c.l.b16 %v4815
        %v5255 = vunpack.c.h.b16 %v4815
        %v5256 = vunpack.c.l.b16 %v4816
        %v5257 = vunpack.c.h.b16 %v4816
        %v5258 = vunpack.c.l.b16 %v4817
        %v5259 = vunpack.c.h.b16 %v4817
        %v5260 = vunpack.c.l.b16 %v4818
        %v5261 = vunpack.c.h.b16 %v4818
        %v5262 = vunpack.c.l.b16 %v4819
        %v5263 = vunpack.c.h.b16 %v4819
        %v5264 = vunpack.c.l.b16 %v4820
        %v5265 = vunpack.c.h.b16 %v4820
        %v5266 = vunpack.c.l.b16 %v4821
        %v5267 = vunpack.c.h.b16 %v4821
        %v5268 = vunpack.c.l.b16 %v4822
        %v5269 = vunpack.c.h.b16 %v4822
        %v5270 = vunpack.c.l.b16 %v4823
        %v5271 = vunpack.c.h.b16 %v4823
        %v5272 = vunpack.c.l.b16 %v4824
        %v5273 = vunpack.c.h.b16 %v4824
        %v5274 = vunpack.c.l.b16 %v4825
        %v5275 = vunpack.c.h.b16 %v4825
        %v5276 = vunpack.c.l.b16 %v4826
        %v5277 = vunpack.c.h.b16 %v4826
        %v5278 = vunpack.c.l.b16 %v4827
        %v5279 = vunpack.c.h.b16 %v4827
        %v5280 = vunpack.c.l.b16 %v4828
        %v5281 = vunpack.c.h.b16 %v4828
        %v5282 = vunpack.c.l.b16 %v4829
        %v5283 = vunpack.c.h.b16 %v4829
        %v5284 = vunpack.c.l.b16 %v4830
        %v5285 = vunpack.c.h.b16 %v4830
        %v5286 = vunpack.c.l.b16 %v4831
        %v5287 = vunpack.c.h.b16 %v4831
        %v5288 = vunpack.c.l.b16 %v4832
        %v5289 = vunpack.c.h.b16 %v4832
        %v5290 = vunpack.c.l.b16 %v4833
        %v5291 = vunpack.c.h.b16 %v4833
        %v5292 = vunpack.c.l.b16 %v4834
        %v5293 = vunpack.c.h.b16 %v4834
        %v5294 = vunpack.c.l.b16 %v4835
        %v5295 = vunpack.c.h.b16 %v4835
        %v5296 = vunpack.c.l.b16 %v4836
        %v5297 = vunpack.c.h.b16 %v4836
        %v5298 = vunpack.c.l.b16 %v4837
        %v5299 = vunpack.c.h.b16 %v4837
        %v5300 = vunpack.c.l.b16 %v4838
        %v5301 = vunpack.c.h.b16 %v4838
        %v5302 = vunpack.c.l.b16 %v4839
        %v5303 = vunpack.c.h.b16 %v4839
        %v5304 = vunpack.c.l.b16 %v4840
        %v5305 = vunpack.c.h.b16 %v4840
        %v5306 = vunpack.c.l.b16 %v4841
        %v5307 = vunpack.c.h.b16 %v4841
        %v5308 = vunpack.c.l.b16 %v4842
        %v5309 = vunpack.c.h.b16 %v4842
        %v5310 = vunpack.c.l.b16 %v4843
        %v5311 = vunpack.c.h.b16 %v4843
        %v5312 = vunpack.c.l.b16 %v4844
        %v5313 = vunpack.c.h.b16 %v4844
        %v5314 = vunpack.c.l.b16 %v4845
        %v5315 = vunpack.c.h.b16 %v4845
        %v5316 = vunpack.c.l.b16 %v4846
        %v5317 = vunpack.c.h.b16 %v4846
        %v5318 = vunpack.c.l.b16 %v4847
        %v5319 = vunpack.c.h.b16 %v4847
        %v5320 = vunpack.c.l.b16 %v4848
        %v5321 = vunpack.c.h.b16 %v4848
        %v5322 = vunpack.c.l.b16 %v4849
        %v5323 = vunpack.c.h.b16 %v4849
        %v5324 = vunpack.c.l.b16 %v4850
        %v5325 = vunpack.c.h.b16 %v4850
        %v5326 = vunpack.c.l.b16 %v4851
        %v5327 = vunpack.c.h.b16 %v4851
        %v5328 = vpack.c.b16 %v5074, %v5072
        %v5329 = vpack.c.b16 %v5075, %v5073
        %v5330 = vpack.c.b16 %v5078, %v5076
        %v5331 = vpack.c.b16 %v5079, %v5077
        %v5332 = vpack.c.b16 %v5082, %v5080
        %v5333 = vpack.c.b16 %v5083, %v5081
        %v5334 = vpack.c.b16 %v5086, %v5084
        %v5335 = vpack.c.b16 %v5087, %v5085
        %v5336 = vpack.c.b16 %v5090, %v5088
        %v5337 = vpack.c.b16 %v5091, %v5089
        %v5338 = vpack.c.b16 %v5094, %v5092
        %v5339 = vpack.c.b16 %v5095, %v5093
        %v5340 = vpack.c.b16 %v5098, %v5096
        %v5341 = vpack.c.b16 %v5099, %v5097
        %v5342 = vpack.c.b16 %v5102, %v5100
        %v5343 = vpack.c.b16 %v5103, %v5101
        %v5344 = vpack.c.b16 %v5106, %v5104
        %v5345 = vpack.c.b16 %v5107, %v5105
        %v5346 = vpack.c.b16 %v5110, %v5108
        %v5347 = vpack.c.b16 %v5111, %v5109
        %v5348 = vpack.c.b16 %v5114, %v5112
        %v5349 = vpack.c.b16 %v5115, %v5113
        %v5350 = vpack.c.b16 %v5118, %v5116
        %v5351 = vpack.c.b16 %v5119, %v5117
        %v5352 = vpack.c.b16 %v5122, %v5120
        %v5353 = vpack.c.b16 %v5123, %v5121
        %v5354 = vpack.c.b16 %v5126, %v5124
        %v5355 = vpack.c.b16 %v5127, %v5125
        %v5356 = vpack.c.b16 %v5130, %v5128
        %v5357 = vpack.c.b16 %v5131, %v5129
        %v5358 = vpack.c.b16 %v5134, %v5132
        %v5359 = vpack.c.b16 %v5135, %v5133
        %v5360 = vpack.c.b16 %v5138, %v5136
        %v5361 = vpack.c.b16 %v5139, %v5137
        %v5362 = vpack.c.b16 %v5142, %v5140
        %v5363 = vpack.c.b16 %v5143, %v5141
        %v5364 = vpack.c.b16 %v5146, %v5144
        %v5365 = vpack.c.b16 %v5147, %v5145
        %v5366 = vpack.c.b16 %v5150, %v5148
        %v5367 = vpack.c.b16 %v5151, %v5149
        %v5368 = vpack.c.b16 %v5154, %v5152
        %v5369 = vpack.c.b16 %v5155, %v5153
        %v5370 = vpack.c.b16 %v5158, %v5156
        %v5371 = vpack.c.b16 %v5159, %v5157
        %v5372 = vpack.c.b16 %v5162, %v5160
        %v5373 = vpack.c.b16 %v5163, %v5161
        %v5374 = vpack.c.b16 %v5166, %v5164
        %v5375 = vpack.c.b16 %v5167, %v5165
        %v5376 = vpack.c.b16 %v5170, %v5168
        %v5377 = vpack.c.b16 %v5171, %v5169
        %v5378 = vpack.c.b16 %v5174, %v5172
        %v5379 = vpack.c.b16 %v5175, %v5173
        %v5380 = vpack.c.b16 %v5178, %v5176
        %v5381 = vpack.c.b16 %v5179, %v5177
        %v5382 = vpack.c.b16 %v5182, %v5180
        %v5383 = vpack.c.b16 %v5183, %v5181
        %v5384 = vpack.c.b16 %v5186, %v5184
        %v5385 = vpack.c.b16 %v5187, %v5185
        %v5386 = vpack.c.b16 %v5190, %v5188
        %v5387 = vpack.c.b16 %v5191, %v5189
        %v5388 = vpack.c.b16 %v5194, %v5192
        %v5389 = vpack.c.b16 %v5195, %v5193
        %v5390 = vpack.c.b16 %v5198, %v5196
        %v5391 = vpack.c.b16 %v5199, %v5197
        %v5392 = vpack.c.b16 %v5202, %v5200
        %v5393 = vpack.c.b16 %v5203, %v5201
        %v5394 = vpack.c.b16 %v5206, %v5204
        %v5395 = vpack.c.b16 %v5207, %v5205
        %v5396 = vpack.c.b16 %v5210, %v5208
        %v5397 = vpack.c.b16 %v5211, %v5209
        %v5398 = vpack.c.b16 %v5214, %v5212
        %v5399 = vpack.c.b16 %v5215, %v5213
        %v5400 = vpack.c.b16 %v5218, %v5216
        %v5401 = vpack.c.b16 %v5219, %v5217
        %v5402 = vpack.c.b16 %v5222, %v5220
        %v5403 = vpack.c.b16 %v5223, %v5221
        %v5404 = vpack.c.b16 %v5226, %v5224
        %v5405 = vpack.c.b16 %v5227, %v5225
        %v5406 = vpack.c.b16 %v5230, %v5228
        %v5407 = vpack.c.b16 %v5231, %v5229
        %v5408 = vpack.c.b16 %v5234, %v5232
        %v5409 = vpack.c.b16 %v5235, %v5233
        %v5410 = vpack.c.b16 %v5238, %v5236
        %v5411 = vpack.c.b16 %v5239, %v5237
        %v5412 = vpack.c.b16 %v5242, %v5240
        %v5413 = vpack.c.b16 %v5243, %v5241
        %v5414 = vpack.c.b16 %v5246, %v5244
        %v5415 = vpack.c.b16 %v5247, %v5245
        %v5416 = vpack.c.b16 %v5250, %v5248
        %v5417 = vpack.c.b16 %v5251, %v5249
        %v5418 = vpack.c.b16 %v5254, %v5252
        %v5419 = vpack.c.b16 %v5255, %v5253
        %v5420 = vpack.c.b16 %v5258, %v5256
        %v5421 = vpack.c.b16 %v5259, %v5257
        %v5422 = vpack.c.b16 %v5262, %v5260
        %v5423 = vpack.c.b16 %v5263, %v5261
        %v5424 = vpack.c.b16 %v5266, %v5264
        %v5425 = vpack.c.b16 %v5267, %v5265
        %v5426 = vpack.c.b16 %v5270, %v5268
        %v5427 = vpack.c.b16 %v5271, %v5269
        %v5428 = vpack.c.b16 %v5274, %v5272
        %v5429 = vpack.c.b16 %v5275, %v5273
        %v5430 = vpack.c.b16 %v5278, %v5276
        %v5431 = vpack.c.b16 %v5279, %v5277
        %v5432 = vpack.c.b16 %v5282, %v5280
        %v5433 = vpack.c.b16 %v5283, %v5281
        %v5434 = vpack.c.b16 %v5286, %v5284
        %v5435 = vpack.c.b16 %v5287, %v5285
        %v5436 = vpack.c.b16 %v5290, %v5288
        %v5437 = vpack.c.b16 %v5291, %v5289
        %v5438 = vpack.c.b16 %v5294, %v5292
        %v5439 = vpack.c.b16 %v5295, %v5293
        %v5440 = vpack.c.b16 %v5298, %v5296
        %v5441 = vpack.c.b16 %v5299, %v5297
        %v5442 = vpack.c.b16 %v5302, %v5300
        %v5443 = vpack.c.b16 %v5303, %v5301
        %v5444 = vpack.c.b16 %v5306, %v5304
        %v5445 = vpack.c.b16 %v5307, %v5305
        %v5446 = vpack.c.b16 %v5310, %v5308
        %v5447 = vpack.c.b16 %v5311, %v5309
        %v5448 = vpack.c.b16 %v5314, %v5312
        %v5449 = vpack.c.b16 %v5315, %v5313
        %v5450 = vpack.c.b16 %v5318, %v5316
        %v5451 = vpack.c.b16 %v5319, %v5317
        %v5452 = vpack.c.b16 %v5322, %v5320
        %v5453 = vpack.c.b16 %v5323, %v5321
        %v5454 = vpack.c.b16 %v5326, %v5324
        %v5455 = vpack.c.b16 %v5327, %v5325
        %5584 = vmatprep.subr.bf16.mxu0 %v5343
        %5585 = vmatpush1.bf16.msra.mxu0 %v5342
        %5586 = vmatprep.subr.bf16.mxu0 %v5341
        %5587 = vmatpush1.bf16.msra.mxu0 %v5340
        %5588 = vmatprep.subr.bf16.mxu0 %v5339
        %5589 = vmatpush1.bf16.msra.mxu0 %v5338
        %5590 = vmatprep.subr.bf16.mxu0 %v5337
        %5591 = vmatpush1.bf16.msra.mxu0 %v5336
        %5592 = vmatprep.subr.bf16.mxu0 %v5335
        %5593 = vmatpush1.bf16.msra.mxu0 %v5334
        %5594 = vmatprep.subr.bf16.mxu0 %v5333
        %5595 = vmatpush1.bf16.msra.mxu0 %v5332
        %5596 = vmatprep.subr.bf16.mxu0 %v5331
        %5597 = vmatpush1.bf16.msra.mxu0 %v5330
        %5598 = vmatprep.subr.bf16.mxu0 %v5329
        %5599 = vmatpush1.bf16.msra.mxu0 %v5328
        %5600 = vmatprep.subr.bf16.mxu0 %v5359
        %5601 = vmatpush2.bf16.msra.mxu0 %v5358
        %5602 = vmatprep.subr.bf16.mxu0 %v5357
        %5603 = vmatpush2.bf16.msra.mxu0 %v5356
        %5604 = vmatprep.subr.bf16.mxu0 %v5355
        %5605 = vmatpush2.bf16.msra.mxu0 %v5354
        %5606 = vmatprep.subr.bf16.mxu0 %v5353
        %5607 = vmatpush2.bf16.msra.mxu0 %v5352
        %5608 = vmatprep.subr.bf16.mxu0 %v5351
        %5609 = vmatpush2.bf16.msra.mxu0 %v5350
        %5610 = vmatprep.subr.bf16.mxu0 %v5349
        %5611 = vmatpush2.bf16.msra.mxu0 %v5348
        %5612 = vmatprep.subr.bf16.mxu0 %v5347
        %5613 = vmatpush2.bf16.msra.mxu0 %v5346
        %5614 = vmatprep.subr.bf16.mxu0 %v5345
        %5615 = vmatpush2.bf16.msra.mxu0 %v5344
        %5616 = vmatprep.mubr.bf16.mxu0 %v4913
        %5617 = vmatmul.mubr.bf16.gmra.mxu0 %v4912
        %v5618 = vpop.f32.mrf.mxu0
        %v5619 = vadd.f32 %v4857, %v5618
        %v5620 = vpop.f32.mrf.mxu0
        %v5621 = vadd.f32 %v4861, %v5620
        %v5622 = vpop.f32.mrf.mxu0
        %v5623 = vadd.f32 %v4857, %v5622
        %v5624 = vpop.f32.mrf.mxu0
        %v5625 = vadd.f32 %v4861, %v5624
        %5626 = vmatprep.mubr.bf16.mxu0 %v4921
        %5627 = vmatmul.mubr.bf16.gmra.mxu0 %v4920
        %v5628 = vpop.f32.mrf.mxu0
        %v5629 = vadd.f32 %v4857, %v5628
        %v5630 = vpop.f32.mrf.mxu0
        %v5631 = vadd.f32 %v4861, %v5630
        %v5632 = vpop.f32.mrf.mxu0
        %v5633 = vadd.f32 %v4857, %v5632
        %v5634 = vpop.f32.mrf.mxu0
        %v5635 = vadd.f32 %v4861, %v5634
        %5636 = vdwg.mxu0
        %5637 = vmatprep.subr.bf16.mxu0 %v5375
        %5638 = vmatpush1.bf16.msra.mxu0 %v5374
        %5639 = vmatprep.subr.bf16.mxu0 %v5373
        %5640 = vmatpush1.bf16.msra.mxu0 %v5372
        %5641 = vmatprep.subr.bf16.mxu0 %v5371
        %5642 = vmatpush1.bf16.msra.mxu0 %v5370
        %5643 = vmatprep.subr.bf16.mxu0 %v5369
        %5644 = vmatpush1.bf16.msra.mxu0 %v5368
        %5645 = vmatprep.subr.bf16.mxu0 %v5367
        %5646 = vmatpush1.bf16.msra.mxu0 %v5366
        %5647 = vmatprep.subr.bf16.mxu0 %v5365
        %5648 = vmatpush1.bf16.msra.mxu0 %v5364
        %5649 = vmatprep.subr.bf16.mxu0 %v5363
        %5650 = vmatpush1.bf16.msra.mxu0 %v5362
        %5651 = vmatprep.subr.bf16.mxu0 %v5361
        %5652 = vmatpush1.bf16.msra.mxu0 %v5360
        %5653 = vmatprep.subr.bf16.mxu0 %v5391
        %5654 = vmatpush2.bf16.msra.mxu0 %v5390
        %5655 = vmatprep.subr.bf16.mxu0 %v5389
        %5656 = vmatpush2.bf16.msra.mxu0 %v5388
        %5657 = vmatprep.subr.bf16.mxu0 %v5387
        %5658 = vmatpush2.bf16.msra.mxu0 %v5386
        %5659 = vmatprep.subr.bf16.mxu0 %v5385
        %5660 = vmatpush2.bf16.msra.mxu0 %v5384
        %5661 = vmatprep.subr.bf16.mxu0 %v5383
        %5662 = vmatpush2.bf16.msra.mxu0 %v5382
        %5663 = vmatprep.subr.bf16.mxu0 %v5381
        %5664 = vmatpush2.bf16.msra.mxu0 %v5380
        %5665 = vmatprep.subr.bf16.mxu0 %v5379
        %5666 = vmatpush2.bf16.msra.mxu0 %v5378
        %5667 = vmatprep.subr.bf16.mxu0 %v5377
        %5668 = vmatpush2.bf16.msra.mxu0 %v5376
        %5669 = vmatprep.mubr.bf16.mxu0 %v4915
        %5670 = vmatmul.mubr.bf16.gmra.mxu0 %v4914
        %v5671 = vpop.f32.mrf.mxu0
        %v5672 = vadd.f32 %v5619, %v5671
        %v5673 = vpop.f32.mrf.mxu0
        %v5674 = vadd.f32 %v5621, %v5673
        %v5675 = vpop.f32.mrf.mxu0
        %v5676 = vadd.f32 %v5623, %v5675
        %v5677 = vpop.f32.mrf.mxu0
        %v5678 = vadd.f32 %v5625, %v5677
        %5679 = vmatprep.mubr.bf16.mxu0 %v4923
        %5680 = vmatmul.mubr.bf16.gmra.mxu0 %v4922
        %v5681 = vpop.f32.mrf.mxu0
        %v5682 = vadd.f32 %v5629, %v5681
        %v5683 = vpop.f32.mrf.mxu0
        %v5684 = vadd.f32 %v5631, %v5683
        %v5685 = vpop.f32.mrf.mxu0
        %v5686 = vadd.f32 %v5633, %v5685
        %v5687 = vpop.f32.mrf.mxu0
        %v5688 = vadd.f32 %v5635, %v5687
        %5689 = vdwg.mxu0
        %5690 = vmatprep.subr.bf16.mxu0 %v5407
        %5691 = vmatpush1.bf16.msra.mxu0 %v5406
        %5692 = vmatprep.subr.bf16.mxu0 %v5405
        %5693 = vmatpush1.bf16.msra.mxu0 %v5404
        %5694 = vmatprep.subr.bf16.mxu0 %v5403
        %5695 = vmatpush1.bf16.msra.mxu0 %v5402
        %5696 = vmatprep.subr.bf16.mxu0 %v5401
        %5697 = vmatpush1.bf16.msra.mxu0 %v5400
        %5698 = vmatprep.subr.bf16.mxu0 %v5399
        %5699 = vmatpush1.bf16.msra.mxu0 %v5398
        %5700 = vmatprep.subr.bf16.mxu0 %v5397
        %5701 = vmatpush1.bf16.msra.mxu0 %v5396
        %5702 = vmatprep.subr.bf16.mxu0 %v5395
        %5703 = vmatpush1.bf16.msra.mxu0 %v5394
        %5704 = vmatprep.subr.bf16.mxu0 %v5393
        %5705 = vmatpush1.bf16.msra.mxu0 %v5392
        %5706 = vmatprep.subr.bf16.mxu0 %v5423
        %5707 = vmatpush2.bf16.msra.mxu0 %v5422
        %5708 = vmatprep.subr.bf16.mxu0 %v5421
        %5709 = vmatpush2.bf16.msra.mxu0 %v5420
        %5710 = vmatprep.subr.bf16.mxu0 %v5419
        %5711 = vmatpush2.bf16.msra.mxu0 %v5418
        %5712 = vmatprep.subr.bf16.mxu0 %v5417
        %5713 = vmatpush2.bf16.msra.mxu0 %v5416
        %5714 = vmatprep.subr.bf16.mxu0 %v5415
        %5715 = vmatpush2.bf16.msra.mxu0 %v5414
        %5716 = vmatprep.subr.bf16.mxu0 %v5413
        %5717 = vmatpush2.bf16.msra.mxu0 %v5412
        %5718 = vmatprep.subr.bf16.mxu0 %v5411
        %5719 = vmatpush2.bf16.msra.mxu0 %v5410
        %5720 = vmatprep.subr.bf16.mxu0 %v5409
        %5721 = vmatpush2.bf16.msra.mxu0 %v5408
        %5722 = vmatprep.mubr.bf16.mxu0 %v4917
        %5723 = vmatmul.mubr.bf16.gmra.mxu0 %v4916
        %v5724 = vpop.f32.mrf.mxu0
        %v5725 = vadd.f32 %v5672, %v5724
        %v5726 = vpop.f32.mrf.mxu0
        %v5727 = vadd.f32 %v5674, %v5726
        %v5728 = vpop.f32.mrf.mxu0
        %v5729 = vadd.f32 %v5676, %v5728
        %v5730 = vpop.f32.mrf.mxu0
        %v5731 = vadd.f32 %v5678, %v5730
        %5732 = vmatprep.mubr.bf16.mxu0 %v4925
        %5733 = vmatmul.mubr.bf16.gmra.mxu0 %v4924
        %v5734 = vpop.f32.mrf.mxu0
        %v5735 = vadd.f32 %v5682, %v5734
        %v5736 = vpop.f32.mrf.mxu0
        %v5737 = vadd.f32 %v5684, %v5736
        %v5738 = vpop.f32.mrf.mxu0
        %v5739 = vadd.f32 %v5686, %v5738
        %v5740 = vpop.f32.mrf.mxu0
        %v5741 = vadd.f32 %v5688, %v5740
        %5742 = vdwg.mxu0
        %5743 = vmatprep.subr.bf16.mxu0 %v5439
        %5744 = vmatpush1.bf16.msra.mxu0 %v5438
        %5745 = vmatprep.subr.bf16.mxu0 %v5437
        %5746 = vmatpush1.bf16.msra.mxu0 %v5436
        %5747 = vmatprep.subr.bf16.mxu0 %v5435
        %5748 = vmatpush1.bf16.msra.mxu0 %v5434
        %5749 = vmatprep.subr.bf16.mxu0 %v5433
        %5750 = vmatpush1.bf16.msra.mxu0 %v5432
        %5751 = vmatprep.subr.bf16.mxu0 %v5431
        %5752 = vmatpush1.bf16.msra.mxu0 %v5430
        %5753 = vmatprep.subr.bf16.mxu0 %v5429
        %5754 = vmatpush1.bf16.msra.mxu0 %v5428
        %5755 = vmatprep.subr.bf16.mxu0 %v5427
        %5756 = vmatpush1.bf16.msra.mxu0 %v5426
        %5757 = vmatprep.subr.bf16.mxu0 %v5425
        %5758 = vmatpush1.bf16.msra.mxu0 %v5424
        %5759 = vmatprep.subr.bf16.mxu0 %v5455
        %5760 = vmatpush2.bf16.msra.mxu0 %v5454
        %5761 = vmatprep.subr.bf16.mxu0 %v5453
        %5762 = vmatpush2.bf16.msra.mxu0 %v5452
        %5763 = vmatprep.subr.bf16.mxu0 %v5451
        %5764 = vmatpush2.bf16.msra.mxu0 %v5450
        %5765 = vmatprep.subr.bf16.mxu0 %v5449
        %5766 = vmatpush2.bf16.msra.mxu0 %v5448
        %5767 = vmatprep.subr.bf16.mxu0 %v5447
        %5768 = vmatpush2.bf16.msra.mxu0 %v5446
        %5769 = vmatprep.subr.bf16.mxu0 %v5445
        %5770 = vmatpush2.bf16.msra.mxu0 %v5444
        %5771 = vmatprep.subr.bf16.mxu0 %v5443
        %5772 = vmatpush2.bf16.msra.mxu0 %v5442
        %5773 = vmatprep.subr.bf16.mxu0 %v5441
        %5774 = vmatpush2.bf16.msra.mxu0 %v5440
        %5775 = vmatprep.mubr.bf16.mxu0 %v4919
        %5776 = vmatmul.mubr.bf16.gmra.mxu0 %v4918
        %v5777 = vpop.f32.mrf.mxu0
        %v5778 = vadd.f32 %v5725, %v5777
        %v5779 = vpop.f32.mrf.mxu0
        %v5780 = vadd.f32 %v5727, %v5779
        %v5781 = vpop.f32.mrf.mxu0
        %v5782 = vadd.f32 %v5729, %v5781
        %v5783 = vpop.f32.mrf.mxu0
        %v5784 = vadd.f32 %v5731, %v5783
        %5785 = vmatprep.mubr.bf16.mxu0 %v4927
        %5786 = vmatmul.mubr.bf16.gmra.mxu0 %v4926
        %v5787 = vpop.f32.mrf.mxu0
        %v5788 = vadd.f32 %v5735, %v5787
        %v5789 = vpop.f32.mrf.mxu0
        %v5790 = vadd.f32 %v5737, %v5789
        %v5791 = vpop.f32.mrf.mxu0
        %v5792 = vadd.f32 %v5739, %v5791
        %v5793 = vpop.f32.mrf.mxu0
        %v5794 = vadd.f32 %v5741, %v5793
        %5795 = vdwg.mxu0
        %v5796 = vtanh.pop %v5778
        %v5797 = vtanh.pop %v5780
        %v5798 = vtanh.pop %v5782
        %v5799 = vtanh.pop %v5784
        %v5800 = vtanh.pop %v5788
        %v5801 = vtanh.pop %v5790
        %v5802 = vtanh.pop %v5792
        %v5803 = vtanh.pop %v5794
        %5804 = vst [vmem:[%s799] sm:$0xff] %v5796
        %5805 = vst [vmem:[%s799 + $0x8] sm:$0xff] %v5797
        %5806 = vst [vmem:[%s799 + $0x10] sm:$0xff] %v5798
        %5807 = vst [vmem:[%s799 + $0x18] sm:$0xff] %v5799
        %5808 = vst [vmem:[%s799 + $0x20] sm:$0xff] %v5800
        %5809 = vst [vmem:[%s799 + $0x28] sm:$0xff] %v5801
        %5810 = vst [vmem:[%s799 + $0x30] sm:$0xff] %v5802
        %5811 = vst [vmem:[%s799 + $0x38] sm:$0xff] %v5803
        %s5812 = sand.u32 %s417, 1
        %s5813 = scalar_lea.sflag [#allocation5], %s5812
        %s5814 = sand.u32 %s417, 1
        %s5815 = smul.addr %s5814, 64
        %s5816 = scalar_lea.vmem [#allocation30], %s5815
        // Predicated region
        $region161: #{tpu_custom_call.1} parent=87 // pred_check
          %p5817 = pneg %p427
        $region162: #{tpu_custom_call.1} parent=87 // pred_check_branch
          %5819 = sbr.rel (%p5817) target = $region164
        $region163: #{tpu_custom_call.1} parent=87 // pred_region
          %s5820 = smul.u32 2, %s42
          %s5822 = ssub.s32 1024, 1024
          %5823 = vsyncadd %s5813, %s5822
          %s5824 = smul.addr %s5820, 128
          %s5825 = scalar_lea.hbm %s17, %s5824
          %s5826 = sshll.u32 %s5816, 4
          %s5827 = int_to_ptr.vmem [resolvable:$true] %s5826
          %5832 = dma.vmem_to_hbm [thread:$0]  %s5827, 1024, %s5825, %s5813, 256, 1024, 16
        $region164: #{tpu_custom_call.1} parent=87 // pred_fallthru
          _
      $region88: #{tpu_custom_call.1} parent=5 // pred_fallthru
        _
      %p5833 = scmp.le.s32.totalorder 2, %s37
      // Predicated region
      $region165: #{tpu_custom_call.1} parent=5 // pred_check
        %p5834 = pneg %p5833
      $region166: #{tpu_custom_call.1} parent=5 // pred_check_branch
        %5836 = sbr.rel (%p5834) target = $region168
      $region167: #{tpu_custom_call.1} parent=5 // pred_region
        %s5837 = ssub.s32 %s37, 2
        // Predicated region
        $region169: #{tpu_custom_call.1} parent=167 // pred_check
          %p5838 = pneg %p433
        $region170: #{tpu_custom_call.1} parent=167 // pred_check_branch
          %5840 = sbr.rel (%p5838) target = $region172
        $region171: #{tpu_custom_call.1} parent=167 // pred_region
          %s5841 = sand.u32 %s418, 1
          %s5842 = scalar_lea.sflag [#allocation5], %s5841
          %s5843 = sand.u32 %s418, 1
          %s5844 = smul.addr %s5843, 64
          %s5845 = scalar_lea.vmem [#allocation30], %s5844
          %5846 = dma.done %s5842, 1024
        $region172: #{tpu_custom_call.1} parent=167 // pred_fallthru
          _
      $region168: #{tpu_custom_call.1} parent=5 // pred_fallthru
        _
    $region6: #{tpu_custom_call.1} parent=1 // loop_footer
      %s41 = sadd.s32 1, %s37
    $region7: #{tpu_custom_call.1} parent=1 // loop_footer_branch
      %36 = sbr.rel target = $region3
    $region8: #{tpu_custom_call.1} parent=1 // loop_exit
      _
    %5847 = vsyncpa [#allocation4], 1
    %s5848 = scalar_lea.sflag [#allocation4], 1
    %5849 = vsyncpa %s5848, 1
    %5850 = vsyncpa [#allocation7], 1
    %5851 = vsyncpa [#allocation10], 1
    %5852 = vsyncpa [#allocation13], 1
    %5853 = vsyncpa [#allocation16], 1
    %5854 = vsyncpa [#allocation19], 1
    %5855 = vsyncpa [#allocation22], 1
    %5856 = vsyncpa [#allocation25], 1
    %5857 = vsyncpa [#allocation28], 1
    %s5858 = scalar_lea.sflag [#allocation28], 1
    %5859 = vsyncpa %s5858, 1
    %5860 = vsyncpa [#allocation5], 1
    %s5861 = scalar_lea.sflag [#allocation5], 1
    %5862 = vsyncpa %s5861, 1

</llo_original>
